<compile_context>
chip_gen: v5e
topology: v5e:2x2
jax: 0.10.0
libtpu: 0.0.40
codegen_flags: <defaults>
</compile_context>

<pallas_src>
import functools

import jax
import jax.numpy as jnp
from jax import lax
from jax.experimental import pallas as pl
from jax.experimental.pallas import tpu as pltpu

EPS = 1e-5


# ----------------------------------------------------------------------------
# Small helpers
# ----------------------------------------------------------------------------
def round_up(x, m):
    return (x + m - 1) // m * m


def pad_to(a, shape):
    pads = [(0, int(t) - int(s)) for s, t in zip(a.shape, shape)]
    if all(p == (0, 0) for p in pads):
        return a
    return jnp.pad(a, pads)


def bn_fold(gamma, beta, mean, var):
    scale = gamma / jnp.sqrt(var + EPS)
    shift = beta - mean * scale
    return scale.reshape(1, -1), shift.reshape(1, -1)


def _pick_row_tile(m, pref=512):
    if m <= pref:
        return max(8, round_up(m, 8))
    for t in (pref, 384, 256, 128):
        if m % t == 0:
            return t
    return pref  # rows get padded up to a multiple of pref


def _vmem_limit(block_bytes):
    # Double-buffered pipeline blocks + headroom, capped at 48 MiB so the
    # request leaves headroom for internal scratch on v7x (64 MiB / TC).
    return int(min(max(2 * block_bytes + (8 << 20), 32 << 20), 48 << 20))


# ----------------------------------------------------------------------------
# Fused GEMMs:  relu((X @ W) + shift [+ residual])
# (BN scale pre-folded into W; bf16 operands, f32 accumulation)
# ----------------------------------------------------------------------------
def _gemm_kernel(x_ref, w_ref, b_ref, o_ref, *, relu):
    acc = jnp.dot(x_ref[...], w_ref[...], preferred_element_type=jnp.float32)
    acc = acc + b_ref[...]
    if relu:
        acc = jnp.maximum(acc, 0.0)
    o_ref[...] = acc.astype(o_ref.dtype)


def _gemm_residual_kernel(x_ref, w_ref, b_ref, r_ref, o_ref):
    acc = jnp.dot(x_ref[...], w_ref[...], preferred_element_type=jnp.float32)
    acc = acc + b_ref[...] + r_ref[...].astype(jnp.float32)
    o_ref[...] = jnp.maximum(acc, 0.0).astype(o_ref.dtype)


def fused_matmul(x, w, shift, *, relu=True, residual=None,
                 out_dtype=jnp.bfloat16, tm=512):
    """x:(M,K) bf16, w:(K,N) bf16 (BN scale folded), shift:(1,N) f32.

    The weight and shift use constant-index BlockSpecs (fetched into VMEM once,
    resident across the whole grid); N rides whole so every store is
    lane-dense.  The optional residual is bf16 and aliases the output buffer.
    """
    M, K = x.shape
    N = w.shape[1]
    assert M % tm == 0, (M, tm)

    x_spec = pl.BlockSpec((tm, K), lambda i: (i, 0))
    w_spec = pl.BlockSpec((K, N), lambda i: (0, 0))   # resident, DMA'd once
    b_spec = pl.BlockSpec((1, N), lambda i: (0, 0))   # resident
    o_spec = pl.BlockSpec((tm, N), lambda i: (i, 0))

    block_bytes = (2 * tm * K * 2 + K * N * 2 + N * 4
                   + 2 * tm * N * jnp.dtype(out_dtype).itemsize)
    if residual is not None:
        block_bytes += 2 * tm * N * residual.dtype.itemsize
    params = pltpu.CompilerParams(
        dimension_semantics=("parallel",),
        vmem_limit_bytes=_vmem_limit(block_bytes))

    if residual is None:
        return pl.pallas_call(
            functools.partial(_gemm_kernel, relu=relu),
            out_shape=jax.ShapeDtypeStruct((M, N), out_dtype),
            grid=(M // tm,),
            in_specs=[x_spec, w_spec, b_spec],
            out_specs=o_spec,
            compiler_params=params,
        )(x, w, shift)

    assert residual.shape == (M, N) and residual.dtype == jnp.dtype(out_dtype)
    return pl.pallas_call(
        _gemm_residual_kernel,
        out_shape=jax.ShapeDtypeStruct((M, N), out_dtype),
        grid=(M // tm,),
        in_specs=[x_spec, w_spec, b_spec, o_spec],
        out_specs=o_spec,
        input_output_aliases={3: 0},   # residual buffer is dead after the add
        compiler_params=params,
    )(x, w, shift, residual)


# ----------------------------------------------------------------------------
# conv2: 3x3x3, pad 1, stride 1 -- kd grid reduction, kh folded into K,
# kw handled with XLU rolls.  Halos are staged in-kernel (no XLA-side pad).
# ----------------------------------------------------------------------------
def _conv2_kernel(x_ref, w_ref, b_ref, o_ref, pad_ref, acc_ref, *,
                  H, W, Wp, weights_resident):
    d = pl.program_id(1)
    kd = pl.program_id(2)
    n_d = pl.num_programs(1)
    rows = H * Wp
    p = acc_ref.shape[-1]

    @pl.when(kd == 0)
    def _():
        acc_ref[...] = jnp.zeros_like(acc_ref)

    dz = d + kd - 1                         # input depth plane for this tap
    valid = jnp.logical_and(dz >= 0, dz <= n_d - 1)

    @pl.when(valid)
    def _():
        # Stage the depth plane into a zero-haloed VMEM plane: rows 0 / H+1
        # and columns [W, Wp) are zero; the interior store is sublane-aligned
        # (valid data starts at column 0, halos handled via roll wrap-around
        # hitting the zeroed columns).
        zrow = jnp.zeros((1, Wp, p), pad_ref.dtype)
        pad_ref[0:1, :, :] = zrow
        pad_ref[H + 1:H + 2, :, :] = zrow
        pad_ref[:, W:, :] = jnp.zeros((H + 2, Wp - W, p), pad_ref.dtype)
        pad_ref[1:H + 1, 0:W, :] = x_ref[0, 0]

        # Fold kh into the contraction dim: three sublane-aligned row-shifted
        # views concatenated along channels -> K = 3P matmuls (no strided
        # window copies, MXU contraction depth >= 384).
        a0 = pad_ref[0:H].reshape(rows, p)
        a1 = pad_ref[1:H + 1].reshape(rows, p)
        a2 = pad_ref[2:H + 2].reshape(rows, p)
        xcat = jnp.concatenate([a0, a1, a2], axis=1)          # (rows, 3P) bf16

        wbase = kd * 3 if weights_resident else 0
        # out[., w] needs G_kw[., w + kw - 1]: apply the kw shift to the f32
        # partial with an XLU roll; wrap-around only touches the zeroed pad
        # columns or rows that are trimmed at finalize.
        contrib = None
        for kw, shift in ((0, 1), (1, 0), (2, rows - 1)):
            g = jnp.dot(xcat, w_ref[wbase + kw],
                        preferred_element_type=jnp.float32)   # (rows, P) f32
            if shift:
                g = pltpu.roll(g, shift=shift, axis=0)
            contrib = g if contrib is None else contrib + g
        acc_ref[...] += contrib

    @pl.when(kd == pl.num_programs(2) - 1)
    def _():
        out = jnp.maximum(acc_ref[...] + b_ref[...], 0.0)
        o_ref[0, 0] = out.reshape(H, Wp, p)[:, :W, :].astype(o_ref.dtype)


def conv2_3x3x3(y1_5d, w_taps, shift, *, out_dtype=jnp.bfloat16):
    """y1_5d: (N, D, H, W, P) bf16 (unpadded; halos handled in-kernel).
    w_taps: (9, 3P, P) bf16, indexed [kd*3+kw, kh*P+cin, cout], BN folded.
    shift:  (1, P) f32."""
    n, d, h, w, p = y1_5d.shape
    wp = round_up(w + 1, 8)                 # sublane-friendly staged width
    rows = h * wp

    slab_bytes = int(w_taps.size) * w_taps.dtype.itemsize
    weights_resident = slab_bytes <= (20 << 20)   # DMA'd once when it fits
    if weights_resident:
        w_spec = pl.BlockSpec((9, 3 * p, p), lambda ni, di, kd: (0, 0, 0))
    else:
        w_spec = pl.BlockSpec((3, 3 * p, p), lambda ni, di, kd: (kd, 0, 0))

    dmax = d - 1
    in_spec = pl.BlockSpec(
        (1, 1, h, w, p),
        lambda ni, di, kd: (ni, jnp.clip(di + kd - 1, 0, dmax), 0, 0, 0))

    block_bytes = (2 * h * w * p * 2          # input plane (double buffered)
                   + slab_bytes               # weight slab
                   + 2 * h * w * p * jnp.dtype(out_dtype).itemsize
                   + (h + 2) * wp * p * 2     # staged padded plane scratch
                   + rows * p * 4)            # f32 accumulator
    return pl.pallas_call(
        functools.partial(_conv2_kernel, H=h, W=w, Wp=wp,
                          weights_resident=weights_resident),
        out_shape=jax.ShapeDtypeStruct((n, d, h, w, p), out_dtype),
        grid=(n, d, 3),
        in_specs=[in_spec, w_spec,
                  pl.BlockSpec((1, p), lambda ni, di, kd: (0, 0))],
        out_specs=pl.BlockSpec((1, 1, h, w, p),
                               lambda ni, di, kd: (ni, di, 0, 0, 0)),
        scratch_shapes=[pltpu.VMEM((h + 2, wp, p), jnp.bfloat16),
                        pltpu.VMEM((rows, p), jnp.float32)],
        compiler_params=pltpu.CompilerParams(
            dimension_semantics=("parallel", "parallel", "arbitrary"),
            vmem_limit_bytes=_vmem_limit(block_bytes)),
    )(y1_5d, w_taps, shift)


# ----------------------------------------------------------------------------
# Bottleneck forward (glue: layout/padding; all heavy compute in Pallas)
# ----------------------------------------------------------------------------
def bottleneck_forward(x_ncdhw, params):
    n, cin, d, h, w = x_ncdhw.shape
    p = params["w1"].shape[0]          # planes
    cout = params["w3"].shape[0]       # planes * expansion
    assert cout == cin, "identity residual requires inplanes == planes * 4"

    cp = round_up(cin, 128)            # lane-dense channel padding
    pp = round_up(p, 128)
    m = n * d * h * w
    tm = _pick_row_tile(m)
    mp = round_up(m, tm)

    # NCDHW -> NDHWC -> (M, C); rows/channels zero-padded for tiling.
    x_flat = jnp.transpose(x_ncdhw, (0, 2, 3, 4, 1)).reshape(m, cin)
    x_bf16 = pad_to(x_flat, (mp, cp)).astype(jnp.bfloat16)   # conv1 in + residual

    # --- conv1 (1x1x1) + bn1 + relu ------------------------------------------
    s1, b1 = bn_fold(*params["bn1"])
    w1 = params["w1"].reshape(p, cin).T * s1                  # (Cin, P)
    y1 = fused_matmul(x_bf16, pad_to(w1, (cp, pp)).astype(jnp.bfloat16),
                      pad_to(b1, (1, pp)), relu=True, tm=tm)

    # --- conv2 (3x3x3, pad 1) + bn2 + relu (halos handled in-kernel) ----------
    s2, b2 = bn_fold(*params["bn2"])
    w2 = jnp.transpose(params["w2"], (2, 4, 3, 1, 0)) * s2.reshape(-1)  # (kd,kw,kh,Ci,Co)
    w2 = pad_to(w2, (3, 3, 3, pp, pp)).reshape(9, 3 * pp, pp).astype(jnp.bfloat16)
    y1_5d = y1[:m].reshape(n, d, h, w, pp)       # free when mp == m
    y2 = conv2_3x3x3(y1_5d, w2, pad_to(b2, (1, pp)))

    # --- conv3 (1x1x1) + bn3 + residual + relu (bf16 out, aliased buffer) -----
    s3, b3 = bn_fold(*params["bn3"])
    w3 = params["w3"].reshape(cout, p).T * s3                 # (P, Cout)
    y3 = fused_matmul(pad_to(y2.reshape(m, pp), (mp, pp)),
                      pad_to(w3, (pp, cp)).astype(jnp.bfloat16),
                      pad_to(b3, (1, cp)),
                      relu=True, residual=x_bf16, tm=tm)

    out = y3[:m, :cout].reshape(n, d, h, w, cout)
    return jnp.transpose(out, (0, 4, 1, 2, 3)).astype(x_ncdhw.dtype)


# ----------------------------------------------------------------------------
# Pure-JAX reference (correctness checking only, f32 / HIGHEST precision)
# ----------------------------------------------------------------------------
def reference_forward(x_ncdhw, params):
    dn = ("NDHWC", "DHWIO", "NDHWC")
    prec = lax.Precision.HIGHEST
    x = jnp.transpose(x_ncdhw, (0, 2, 3, 4, 1))

    def bn(y, g, b, m, v):
        return (y - m) / jnp.sqrt(v + EPS) * g + b

    w1 = jnp.transpose(params["w1"], (2, 3, 4, 1, 0))
    w2 = jnp.transpose(params["w2"], (2, 3, 4, 1, 0))
    w3 = jnp.transpose(params["w3"], (2, 3, 4, 1, 0))

    y = lax.conv_general_dilated(x, w1, (1, 1, 1), "VALID",
                                 dimension_numbers=dn, precision=prec)
    y = jax.nn.relu(bn(y, *params["bn1"]))
    y = lax.conv_general_dilated(y, w2, (1, 1, 1), ((1, 1),) * 3,
                                 dimension_numbers=dn, precision=prec)
    y = jax.nn.relu(bn(y, *params["bn2"]))
    y = lax.conv_general_dilated(y, w3, (1, 1, 1), "VALID",
                                 dimension_numbers=dn, precision=prec)
    y = jax.nn.relu(bn(y, *params["bn3"]) + x)
    return jnp.transpose(y, (0, 4, 1, 2, 3))


# ----------------------------------------------------------------------------
def make_params(key, inplanes, planes):
    ks = jax.random.split(key, 16)
    expansion = 4

    def bn_params(kg, kb, km, kv, c):
        gamma = 1.0 + 0.1 * jax.random.normal(kg, (c,), jnp.float32)
        beta = 0.1 * jax.random.normal(kb, (c,), jnp.float32)
        mean = 0.1 * jax.random.normal(km, (c,), jnp.float32)
        var = jnp.abs(jax.random.normal(kv, (c,), jnp.float32)) + 0.5
        return (gamma, beta, mean, var)

    return {
        "w1": 0.1 * jax.random.normal(ks[0], (planes, inplanes, 1, 1, 1), jnp.float32),
        "bn1": bn_params(ks[1], ks[2], ks[3], ks[4], planes),
        "w2": 0.1 * jax.random.normal(ks[5], (planes, planes, 3, 3, 3), jnp.float32),
        "bn2": bn_params(ks[6], ks[7], ks[8], ks[9], planes),
        "w3": 0.1 * jax.random.normal(ks[10], (planes * expansion, planes, 1, 1, 1), jnp.float32),
        "bn3": bn_params(ks[11], ks[12], ks[13], ks[14], planes * expansion),
    }


if __name__ == "__main__":
    # Small shapes: batch=2, planes=8 -> inplanes = planes*4 = 32, spatial 8^3.
    N, planes = 2, 8
    inplanes = planes * 4
    D = H = W = 8

    key = jax.random.PRNGKey(0)
    kx, kp = jax.random.split(key)
    x = jax.random.normal(kx, (N, inplanes, D, H, W), jnp.float32)  # NCDHW
    params = make_params(kp, inplanes, planes)

    # TODO(synk): dropout (config.drop_rate > 0), training-mode batch-norm
    # statistics, strided/downsample blocks and the full ResNet stem/pool/fc
    # are not modelled; this is the inference-mode identity Bottleneck block.
    fwd = jax.jit(bottleneck_forward)
    out = jax.block_until_ready(fwd(x, params))

    ref = jax.block_until_ready(jax.jit(reference_forward)(x, params))
    assert out.shape == (N, inplanes, D, H, W)
    err = float(jnp.max(jnp.abs(out - ref)))
    # bf16 MXU operands, bf16 intermediates/residual/output vs. f32 reference.
    assert jnp.allclose(out, ref, rtol=2e-2, atol=3e-2), err

    print("KERNEL_OK")
</pallas_src>

<mosaic_0001>
module attributes {stable_mosaic.version = 11 : i64} {
  func.func @_gemm_kernel(%arg0: i32, %arg1: memref<512x128xbf16, #tpu.memory_space<vmem>>, %arg2: memref<128x128xbf16, #tpu.memory_space<vmem>>, %arg3: memref<1x128xf32, #tpu.memory_space<vmem>>, %arg4: memref<512x128xbf16, #tpu.memory_space<vmem>>) attributes {dimension_semantics = [#tpu.dimension_semantics<parallel>], iteration_bounds = array<i64: 2>, scalar_prefetch = 0 : i64, scratch_operands = 0 : i64, tpu.core_type = #tpu.core_type<tc>, window_params = [{transform_indices = @transform_0, window_bounds = array<i64: 512, 128>}, {pipeline_mode = #tpu.pipeline_mode<synchronous>, transform_indices = @transform_1, window_bounds = array<i64: 128, 128>}, {pipeline_mode = #tpu.pipeline_mode<synchronous>, transform_indices = @transform_2, window_bounds = array<i64: 1, 128>}, {transform_indices = @transform_3, window_bounds = array<i64: 512, 128>}]} {
    %c0 = arith.constant 0 : index
    %c0_0 = arith.constant 0 : index
    %0 = vector.load %arg1[%c0, %c0_0] : memref<512x128xbf16, #tpu.memory_space<vmem>>, vector<512x128xbf16>
    %c0_1 = arith.constant 0 : index
    %c0_2 = arith.constant 0 : index
    %1 = vector.load %arg2[%c0_1, %c0_2] : memref<128x128xbf16, #tpu.memory_space<vmem>>, vector<128x128xbf16>
    %cst = arith.constant dense<0.000000e+00> : vector<512x128xf32>
    %2 = tpu.matmul %0, %1, %cst {dimension_numbers = #tpu.dot_dimension_numbers<[1], [0], [0], [1], [0, 0, 1, 1], [], []>} : vector<512x128xbf16>, vector<128x128xbf16>, vector<512x128xf32> -> vector<512x128xf32>
    %c0_3 = arith.constant 0 : index
    %c0_4 = arith.constant 0 : index
    %3 = vector.load %arg3[%c0_3, %c0_4] : memref<1x128xf32, #tpu.memory_space<vmem>>, vector<1x128xf32>
    %4 = vector.broadcast %3 : vector<1x128xf32> to vector<512x128xf32>
    %5 = arith.addf %2, %4 : vector<512x128xf32>
    %cst_5 = arith.constant 0.000000e+00 : f32
    %6 = vector.broadcast %cst_5 : f32 to vector<512x128xf32>
    %7 = arith.maximumf %5, %6 : vector<512x128xf32>
    %8 = arith.truncf %7 : vector<512x128xf32> to vector<512x128xbf16>
    %c0_6 = arith.constant 0 : index
    %c0_7 = arith.constant 0 : index
    %9 = vector.load %arg4[%c0_6, %c0_7] : memref<512x128xbf16, #tpu.memory_space<vmem>>, vector<512x128xbf16>
    tpu.vector_store %arg4[%c0_6, %c0_7], %8 {strides = array<i32>} : memref<512x128xbf16, #tpu.memory_space<vmem>>, vector<512x128xbf16>,
    return
  }
  func.func @transform_0(%arg0: i32) -> (i32, i32) {
    %c0_i32 = arith.constant 0 : i32
    %c0_i32_0 = arith.constant 0 : i32
    return %arg0, %c0_i32 : i32, i32
  }
  func.func @transform_1(%arg0: i32) -> (i32, i32) {
    %c0_i32 = arith.constant 0 : i32
    %c0_i32_0 = arith.constant 0 : i32
    %c0_i32_1 = arith.constant 0 : i32
    return %c0_i32, %c0_i32_0 : i32, i32
  }
  func.func @transform_2(%arg0: i32) -> (i32, i32) {
    %c0_i32 = arith.constant 0 : i32
    %c0_i32_0 = arith.constant 0 : i32
    %c0_i32_1 = arith.constant 0 : i32
    return %c0_i32, %c0_i32_0 : i32, i32
  }
  func.func @transform_3(%arg0: i32) -> (i32, i32) {
    %c0_i32 = arith.constant 0 : i32
    %c0_i32_0 = arith.constant 0 : i32
    return %arg0, %c0_i32 : i32, i32
  }
}

module attributes {stable_mosaic.version = 11 : i64} {
  func.func @_conv2_kernel(%arg0: i32, %arg1: i32, %arg2: i32, %arg3: memref<1x1x8x8x128xbf16, #tpu.memory_space<vmem>>, %arg4: memref<9x384x128xbf16, #tpu.memory_space<vmem>>, %arg5: memref<1x128xf32, #tpu.memory_space<vmem>>, %arg6: memref<1x1x8x8x128xbf16, #tpu.memory_space<vmem>>, %arg7: memref<10x16x128xbf16, #tpu.memory_space<vmem>>, %arg8: memref<128x128xf32, #tpu.memory_space<vmem>>) attributes {dimension_semantics = [#tpu.dimension_semantics<parallel>, #tpu.dimension_semantics<parallel>, #tpu.dimension_semantics<arbitrary>], iteration_bounds = array<i64: 2, 8, 3>, scalar_prefetch = 0 : i64, scratch_operands = 2 : i64, tpu.core_type = #tpu.core_type<tc>, window_params = [{transform_indices = @transform_0, window_bounds = array<i64: 1, 1, 8, 8, 128>}, {pipeline_mode = #tpu.pipeline_mode<synchronous>, transform_indices = @transform_1, window_bounds = array<i64: 9, 384, 128>}, {pipeline_mode = #tpu.pipeline_mode<synchronous>, transform_indices = @transform_2, window_bounds = array<i64: 1, 128>}, {transform_indices = @transform_3, window_bounds = array<i64: 1, 1, 8, 8, 128>}]} {
    %c0_i32 = arith.constant 0 : i32
    %0 = arith.cmpi eq, %arg2, %c0_i32 : i32
    %1 = arith.extui %0 : i1 to i32
    %c0_i32_0 = arith.constant 0 : i32
    %2 = arith.cmpi ne, %1, %c0_i32_0 : i32
    scf.if %2 {
      %cst = arith.constant 0.000000e+00 : f32
      %13 = vector.broadcast %cst : f32 to vector<128x128xf32>
      %c0 = arith.constant 0 : index
      %c0_4 = arith.constant 0 : index
      %14 = vector.load %arg8[%c0, %c0_4] : memref<128x128xf32, #tpu.memory_space<vmem>>, vector<128x128xf32>
      tpu.vector_store %arg8[%c0, %c0_4], %13 {strides = array<i32>} : memref<128x128xf32, #tpu.memory_space<vmem>>, vector<128x128xf32>,
    } else {
    }
    %3 = arith.addi %arg1, %arg2 : i32
    %c1_i32 = arith.constant 1 : i32
    %4 = arith.subi %3, %c1_i32 : i32
    %c0_i32_1 = arith.constant 0 : i32
    %5 = arith.cmpi sge, %4, %c0_i32_1 : i32
    %c7_i32 = arith.constant 7 : i32
    %6 = arith.cmpi sle, %4, %c7_i32 : i32
    %7 = arith.andi %5, %6 : i1
    %8 = arith.extui %7 : i1 to i32
    %c0_i32_2 = arith.constant 0 : i32
    %9 = arith.cmpi ne, %8, %c0_i32_2 : i32
    scf.if %9 {
      %cst = arith.constant 0.000000e+00 : bf16
      %13 = vector.broadcast %cst : bf16 to vector<1x16x128xbf16>
      %c0 = arith.constant 0 : index
      %c0_4 = arith.constant 0 : index
      %c0_5 = arith.constant 0 : index
      %14 = vector.load %arg7[%c0, %c0_4, %c0_5] : memref<10x16x128xbf16, #tpu.memory_space<vmem>>, vector<1x16x128xbf16>
      tpu.vector_store %arg7[%c0, %c0_4, %c0_5], %13 {strides = array<i32>} : memref<10x16x128xbf16, #tpu.memory_space<vmem>>, vector<1x16x128xbf16>,
      %c9 = arith.constant 9 : index
      %c0_6 = arith.constant 0 : index
      %c0_7 = arith.constant 0 : index
      %15 = vector.load %arg7[%c9, %c0_6, %c0_7] : memref<10x16x128xbf16, #tpu.memory_space<vmem>>, vector<1x16x128xbf16>
      tpu.vector_store %arg7[%c9, %c0_6, %c0_7], %13 {strides = array<i32>} : memref<10x16x128xbf16, #tpu.memory_space<vmem>>, vector<1x16x128xbf16>,
      %cst_8 = arith.constant 0.000000e+00 : bf16
      %16 = vector.broadcast %cst_8 : bf16 to vector<10x8x128xbf16>
      %c0_9 = arith.constant 0 : index
      %c8 = arith.constant 8 : index
      %c0_10 = arith.constant 0 : index
      %17 = vector.load %arg7[%c0_9, %c8, %c0_10] : memref<10x16x128xbf16, #tpu.memory_space<vmem>>, vector<10x8x128xbf16>
      tpu.vector_store %arg7[%c0_9, %c8, %c0_10], %16 {strides = array<i32>} : memref<10x16x128xbf16, #tpu.memory_space<vmem>>, vector<10x8x128xbf16>,
      %c0_11 = arith.constant 0 : index
      %c0_12 = arith.constant 0 : index
      %c0_13 = arith.constant 0 : index
      %c0_14 = arith.constant 0 : index
      %c0_15 = arith.constant 0 : index
      %18 = vector.load %arg3[%c0_11, %c0_12, %c0_13, %c0_14, %c0_15] : memref<1x1x8x8x128xbf16, #tpu.memory_space<vmem>>, vector<1x1x8x8x128xbf16>
      %19 = vector.shape_cast %18 : vector<1x1x8x8x128xbf16> to vector<8x8x128xbf16>
      %c1 = arith.constant 1 : index
      %c0_16 = arith.constant 0 : index
      %c0_17 = arith.constant 0 : index
      %20 = vector.load %arg7[%c1, %c0_16, %c0_17] : memref<10x16x128xbf16, #tpu.memory_space<vmem>>, vector<8x8x128xbf16>
      tpu.vector_store %arg7[%c1, %c0_16, %c0_17], %19 {strides = array<i32>} : memref<10x16x128xbf16, #tpu.memory_space<vmem>>, vector<8x8x128xbf16>,
      %c0_18 = arith.constant 0 : index
      %c0_19 = arith.constant 0 : index
      %c0_20 = arith.constant 0 : index
      %21 = vector.load %arg7[%c0_18, %c0_19, %c0_20] : memref<10x16x128xbf16, #tpu.memory_space<vmem>>, vector<8x16x128xbf16>
      %22 = vector.shape_cast %21 : vector<8x16x128xbf16> to vector<128x128xbf16>
      %c1_21 = arith.constant 1 : index
      %c0_22 = arith.constant 0 : index
      %c0_23 = arith.constant 0 : index
      %23 = vector.load %arg7[%c1_21, %c0_22, %c0_23] : memref<10x16x128xbf16, #tpu.memory_space<vmem>>, vector<8x16x128xbf16>
      %24 = vector.shape_cast %23 : vector<8x16x128xbf16> to vector<128x128xbf16>
      %c2 = arith.constant 2 : index
      %c0_24 = arith.constant 0 : index
      %c0_25 = arith.constant 0 : index
      %25 = vector.load %arg7[%c2, %c0_24, %c0_25] : memref<10x16x128xbf16, #tpu.memory_space<vmem>>, vector<8x16x128xbf16>
      %26 = vector.shape_cast %25 : vector<8x16x128xbf16> to vector<128x128xbf16>
      %27 = tpu.concatenate %22, %24, %26 in 1 : vector<128x128xbf16>, vector<128x128xbf16>, vector<128x128xbf16> -> vector<128x384xbf16>
      %c3_i32 = arith.constant 3 : i32
      %28 = arith.muli %arg2, %c3_i32 : i32
      %c0_i32_26 = arith.constant 0 : i32
      %29 = arith.addi %28, %c0_i32_26 : i32
      %30 = arith.index_cast %29 : i32 to index
      %c0_27 = arith.constant 0 : index
      %c0_28 = arith.constant 0 : index
      %31 = vector.load %arg4[%30, %c0_27, %c0_28] : memref<9x384x128xbf16, #tpu.memory_space<vmem>>, vector<1x384x128xbf16>
      %32 = vector.shape_cast %31 : vector<1x384x128xbf16> to vector<384x128xbf16>
      %cst_29 = arith.constant dense<0.000000e+00> : vector<128x128xf32>
      %33 = tpu.matmul %27, %32, %cst_29 {dimension_numbers = #tpu.dot_dimension_numbers<[1], [0], [0], [1], [0, 0, 1, 1], [], []>} : vector<128x384xbf16>, vector<384x128xbf16>, vector<128x128xf32> -> vector<128x128xf32>
      %c1_i32_30 = arith.constant 1 : i32
      %34 = tpu.dynamic_rotate %33 by %c1_i32_30 dim 0 : vector<128x128xf32>, i32 -> vector<128x128xf32>
      %c1_i32_31 = arith.constant 1 : i32
      %35 = arith.addi %28, %c1_i32_31 : i32
      %36 = arith.index_cast %35 : i32 to index
      %c0_32 = arith.constant 0 : index
      %c0_33 = arith.constant 0 : index
      %37 = vector.load %arg4[%36, %c0_32, %c0_33] : memref<9x384x128xbf16, #tpu.memory_space<vmem>>, vector<1x384x128xbf16>
      %38 = vector.shape_cast %37 : vector<1x384x128xbf16> to vector<384x128xbf16>
      %cst_34 = arith.constant dense<0.000000e+00> : vector<128x128xf32>
      %39 = tpu.matmul %27, %38, %cst_34 {dimension_numbers = #tpu.dot_dimension_numbers<[1], [0], [0], [1], [0, 0, 1, 1], [], []>} : vector<128x384xbf16>, vector<384x128xbf16>, vector<128x128xf32> -> vector<128x128xf32>
      %40 = arith.addf %34, %39 : vector<128x128xf32>
      %c2_i32_35 = arith.constant 2 : i32
      %41 = arith.addi %28, %c2_i32_35 : i32
      %42 = arith.index_cast %41 : i32 to index
      %c0_36 = arith.constant 0 : index
      %c0_37 = arith.constant 0 : index
      %43 = vector.load %arg4[%42, %c0_36, %c0_37] : memref<9x384x128xbf16, #tpu.memory_space<vmem>>, vector<1x384x128xbf16>
      %44 = vector.shape_cast %43 : vector<1x384x128xbf16> to vector<384x128xbf16>
      %cst_38 = arith.constant dense<0.000000e+00> : vector<128x128xf32>
      %45 = tpu.matmul %27, %44, %cst_38 {dimension_numbers = #tpu.dot_dimension_numbers<[1], [0], [0], [1], [0, 0, 1, 1], [], []>} : vector<128x384xbf16>, vector<384x128xbf16>, vector<128x128xf32> -> vector<128x128xf32>
      %c127_i32 = arith.constant 127 : i32
      %46 = tpu.dynamic_rotate %45 by %c127_i32 dim 0 : vector<128x128xf32>, i32 -> vector<128x128xf32>
      %47 = arith.addf %40, %46 : vector<128x128xf32>
      %c0_39 = arith.constant 0 : index
      %c0_40 = arith.constant 0 : index
      %48 = vector.load %arg8[%c0_39, %c0_40] : memref<128x128xf32, #tpu.memory_space<vmem>>, vector<128x128xf32>
      %49 = arith.addf %48, %47 : vector<128x128xf32>
      %c0_41 = arith.constant 0 : index
      %c0_42 = arith.constant 0 : index
      %50 = vector.load %arg8[%c0_41, %c0_42] : memref<128x128xf32, #tpu.memory_space<vmem>>, vector<128x128xf32>
      tpu.vector_store %arg8[%c0_41, %c0_42], %49 {strides = array<i32>} : memref<128x128xf32, #tpu.memory_space<vmem>>, vector<128x128xf32>,
    } else {
    }
    %c2_i32 = arith.constant 2 : i32
    %10 = arith.cmpi eq, %arg2, %c2_i32 : i32
    %11 = arith.extui %10 : i1 to i32
    %c0_i32_3 = arith.constant 0 : i32
    %12 = arith.cmpi ne, %11, %c0_i32_3 : i32
    scf.if %12 {
      %c0 = arith.constant 0 : index
      %c0_4 = arith.constant 0 : index
      %13 = vector.load %arg8[%c0, %c0_4] : memref<128x128xf32, #tpu.memory_space<vmem>>, vector<128x128xf32>
      %c0_5 = arith.constant 0 : index
      %c0_6 = arith.constant 0 : index
      %14 = vector.load %arg5[%c0_5, %c0_6] : memref<1x128xf32, #tpu.memory_space<vmem>>, vector<1x128xf32>
      %15 = vector.broadcast %14 : vector<1x128xf32> to vector<128x128xf32>
      %16 = arith.addf %13, %15 : vector<128x128xf32>
      %cst = arith.constant 0.000000e+00 : f32
      %17 = vector.broadcast %cst : f32 to vector<128x128xf32>
      %18 = arith.maximumf %16, %17 : vector<128x128xf32>
      %19 = vector.shape_cast %18 : vector<128x128xf32> to vector<8x16x128xf32>
      %20 = vector.extract_strided_slice %19 {offsets = [0, 0, 0], sizes = [8, 8, 128], strides = [1, 1, 1]} : vector<8x16x128xf32> to vector<8x8x128xf32>
      %21 = arith.truncf %20 : vector<8x8x128xf32> to vector<8x8x128xbf16>
      %c0_7 = arith.constant 0 : index
      %c0_8 = arith.constant 0 : index
      %c0_9 = arith.constant 0 : index
      %c0_10 = arith.constant 0 : index
      %c0_11 = arith.constant 0 : index
      %22 = vector.load %arg6[%c0_7, %c0_8, %c0_9, %c0_10, %c0_11] : memref<1x1x8x8x128xbf16, #tpu.memory_space<vmem>>, vector<1x1x8x8x128xbf16>
      %23 = vector.shape_cast %22 : vector<1x1x8x8x128xbf16> to vector<8x8x128xbf16>
      %24 = vector.shape_cast %21 : vector<8x8x128xbf16> to vector<1x1x8x8x128xbf16>
      tpu.vector_store %arg6[%c0_7, %c0_8, %c0_9, %c0_10, %c0_11], %24 {strides = array<i32>} : memref<1x1x8x8x128xbf16, #tpu.memory_space<vmem>>, vector<1x1x8x8x128xbf16>,
    } else {
    }
    return
  }
  func.func @transform_0(%arg0: i32, %arg1: i32, %arg2: i32) -> (i32, i32, i32, i32, i32) {
    %0 = arith.addi %arg1, %arg2 : i32
    %c1_i32 = arith.constant 1 : i32
    %1 = arith.subi %0, %c1_i32 : i32
    %c0_i32 = arith.constant 0 : i32
    %c7_i32 = arith.constant 7 : i32
    %2 = arith.maxsi %c0_i32, %1 : i32
    %3 = arith.minsi %c7_i32, %2 : i32
    %c0_i32_0 = arith.constant 0 : i32
    %c0_i32_1 = arith.constant 0 : i32
    %c0_i32_2 = arith.constant 0 : i32
    %c0_i32_3 = arith.constant 0 : i32
    return %arg0, %3, %c0_i32_0, %c0_i32_1, %c0_i32_2 : i32, i32, i32, i32, i32
  }
  func.func @transform_1(%arg0: i32, %arg1: i32, %arg2: i32) -> (i32, i32, i32) {
    %c0_i32 = arith.constant 0 : i32
    %c0_i32_0 = arith.constant 0 : i32
    %c0_i32_1 = arith.constant 0 : i32
    %c0_i32_2 = arith.constant 0 : i32
    return %c0_i32, %c0_i32_0, %c0_i32_1 : i32, i32, i32
  }
  func.func @transform_2(%arg0: i32, %arg1: i32, %arg2: i32) -> (i32, i32) {
    %c0_i32 = arith.constant 0 : i32
    %c0_i32_0 = arith.constant 0 : i32
    %c0_i32_1 = arith.constant 0 : i32
    return %c0_i32, %c0_i32_0 : i32, i32
  }
  func.func @transform_3(%arg0: i32, %arg1: i32, %arg2: i32) -> (i32, i32, i32, i32, i32) {
    %c0_i32 = arith.constant 0 : i32
    %c0_i32_0 = arith.constant 0 : i32
    %c0_i32_1 = arith.constant 0 : i32
    %c0_i32_2 = arith.constant 0 : i32
    return %arg0, %arg1, %c0_i32, %c0_i32_0, %c0_i32_1 : i32, i32, i32, i32, i32
  }
}

module attributes {stable_mosaic.version = 11 : i64} {
  func.func @_gemm_residual_kernel(%arg0: i32, %arg1: memref<512x128xbf16, #tpu.memory_space<vmem>>, %arg2: memref<128x128xbf16, #tpu.memory_space<vmem>>, %arg3: memref<1x128xf32, #tpu.memory_space<vmem>>, %arg4: memref<512x128xbf16, #tpu.memory_space<vmem>>, %arg5: memref<512x128xbf16, #tpu.memory_space<vmem>>) attributes {dimension_semantics = [#tpu.dimension_semantics<parallel>], iteration_bounds = array<i64: 2>, scalar_prefetch = 0 : i64, scratch_operands = 0 : i64, tpu.core_type = #tpu.core_type<tc>, window_params = [{transform_indices = @transform_0, window_bounds = array<i64: 512, 128>}, {pipeline_mode = #tpu.pipeline_mode<synchronous>, transform_indices = @transform_1, window_bounds = array<i64: 128, 128>}, {pipeline_mode = #tpu.pipeline_mode<synchronous>, transform_indices = @transform_2, window_bounds = array<i64: 1, 128>}, {transform_indices = @transform_3, window_bounds = array<i64: 512, 128>}, {transform_indices = @transform_4, window_bounds = array<i64: 512, 128>}]} {
    %c0 = arith.constant 0 : index
    %c0_0 = arith.constant 0 : index
    %0 = vector.load %arg1[%c0, %c0_0] : memref<512x128xbf16, #tpu.memory_space<vmem>>, vector<512x128xbf16>
    %c0_1 = arith.constant 0 : index
    %c0_2 = arith.constant 0 : index
    %1 = vector.load %arg2[%c0_1, %c0_2] : memref<128x128xbf16, #tpu.memory_space<vmem>>, vector<128x128xbf16>
    %cst = arith.constant dense<0.000000e+00> : vector<512x128xf32>
    %2 = tpu.matmul %0, %1, %cst {dimension_numbers = #tpu.dot_dimension_numbers<[1], [0], [0], [1], [0, 0, 1, 1], [], []>} : vector<512x128xbf16>, vector<128x128xbf16>, vector<512x128xf32> -> vector<512x128xf32>
    %c0_3 = arith.constant 0 : index
    %c0_4 = arith.constant 0 : index
    %3 = vector.load %arg3[%c0_3, %c0_4] : memref<1x128xf32, #tpu.memory_space<vmem>>, vector<1x128xf32>
    %4 = vector.broadcast %3 : vector<1x128xf32> to vector<512x128xf32>
    %5 = arith.addf %2, %4 : vector<512x128xf32>
    %c0_5 = arith.constant 0 : index
    %c0_6 = arith.constant 0 : index
    %6 = vector.load %arg4[%c0_5, %c0_6] : memref<512x128xbf16, #tpu.memory_space<vmem>>, vector<512x128xbf16>
    %7 = arith.extf %6 : vector<512x128xbf16> to vector<512x128xf32>
    %8 = arith.addf %5, %7 : vector<512x128xf32>
    %cst_7 = arith.constant 0.000000e+00 : f32
    %9 = vector.broadcast %cst_7 : f32 to vector<512x128xf32>
    %10 = arith.maximumf %8, %9 : vector<512x128xf32>
    %11 = arith.truncf %10 : vector<512x128xf32> to vector<512x128xbf16>
    %c0_8 = arith.constant 0 : index
    %c0_9 = arith.constant 0 : index
    %12 = vector.load %arg5[%c0_8, %c0_9] : memref<512x128xbf16, #tpu.memory_space<vmem>>, vector<512x128xbf16>
    tpu.vector_store %arg5[%c0_8, %c0_9], %11 {strides = array<i32>} : memref<512x128xbf16, #tpu.memory_space<vmem>>, vector<512x128xbf16>,
    return
  }
  func.func @transform_0(%arg0: i32) -> (i32, i32) {
    %c0_i32 = arith.constant 0 : i32
    %c0_i32_0 = arith.constant 0 : i32
    return %arg0, %c0_i32 : i32, i32
  }
  func.func @transform_1(%arg0: i32) -> (i32, i32) {
    %c0_i32 = arith.constant 0 : i32
    %c0_i32_0 = arith.constant 0 : i32
    %c0_i32_1 = arith.constant 0 : i32
    return %c0_i32, %c0_i32_0 : i32, i32
  }
  func.func @transform_2(%arg0: i32) -> (i32, i32) {
    %c0_i32 = arith.constant 0 : i32
    %c0_i32_0 = arith.constant 0 : i32
    %c0_i32_1 = arith.constant 0 : i32
    return %c0_i32, %c0_i32_0 : i32, i32
  }
  func.func @transform_3(%arg0: i32) -> (i32, i32) {
    %c0_i32 = arith.constant 0 : i32
    %c0_i32_0 = arith.constant 0 : i32
    return %arg0, %c0_i32 : i32, i32
  }
  func.func @transform_4(%arg0: i32) -> (i32, i32) {
    %c0_i32 = arith.constant 0 : i32
    %c0_i32_0 = arith.constant 0 : i32
    return %arg0, %c0_i32 : i32, i32
  }
}

</mosaic_0001>

<llo_original>
// kernel: bottleneck_forward.3
$region0: #{bottleneck_forward.3}
  #allocation0 [shape = 'u32[]', space=smem, size = 0x4, offset = 0x4, fixed_abs, tag = 'smem constant byte address 0x4 - core index']
  #allocation1 [shape = 'u32[72,128]{1,0:T(1,128)}', space=vmem, size = 0x9000, scoped, tag = 'internal scratch']
  %s0 = inlined_call_operand.vmem [shape: bf16[1024,128], index: 0, kind: input, shape index: {}]
  %s1 = inlined_call_operand.vmem [shape: bf16[128,128], index: 1, kind: input, shape index: {}]
  %s2 = inlined_call_operand.vmem [shape: f32[1,128], index: 2, kind: input, shape index: {}]
  %s3 = inlined_call_operand.vmem [shape: bf16[1024,128], index: 3, kind: output, shape index: {}]
  %s4 = sld [smem:[#allocation0]]
  $region45: #{bottleneck_forward.3} parent=0
    _
  %s6 = ssub.s32 1, %s4
  %s7 = scalar_select 0, %s6, %s4
  loop: start=0, step=1, limit=4
  $region2: #{bottleneck_forward.3} parent=0 // loop_pre_header
    _
  $region3: #{bottleneck_forward.3} parent=0 // loop_header
    %s9 = sphi 0, %s13
    %p10 = scmp.ge.s32.totalorder %s9, 4
    %s19 = sphi 0, %s21
    %s22 = sphi 0, %s19
    %s23 = sphi 0, %s22
    %s39 = sphi 0, %s23
    %s43 = sphi 0, %s43
    %s45 = sphi 0, %s43
    %s46 = sphi 0, %s45
    %s60 = sphi 0, %s46
    %s64 = sphi 0, %s64
    %s66 = sphi 0, %s64
    %s67 = sphi 0, %s66
    %s81 = sphi 0, %s67
    %s87 = sphi 0, %s89
    %s90 = sphi 0, %s87
    %s91 = sphi 0, %s90
    %s107 = sphi 0, %s91
  $region4: #{bottleneck_forward.3} parent=0 // loop_header_branch
    %12 = sbr.rel (%p10) target = $region8
  $region5: #{bottleneck_forward.3} parent=0 // loop_body
    %s14 = ssub.s32 %s9, 1
    %s15 = ssub.s32 %s9, 2
    %s16 = sadd.s32 %s9, 1
    %s17 = ssub.s32 %s9, %s16
    %p18 = scmp.eq.s32.totalorder %s17, 0
    %s20 = sadd.s32 %s19, 1
    %s21 = scalar_select %p18, %s19, %s20
    %p24 = pneg %p18
    %p25 = scmp.eq.s32.totalorder %s9, 1
    %p26 = por %p24, %p25
    %p27 = scmp.ne.s32.totalorder %s19, %s22
    %p28 = scmp.eq.s32.totalorder %s9, 0
    %p29 = por %p27, %p28
    %p30 = scmp.ne.s32.totalorder %s19, %s22
    %p31 = scmp.eq.s32.totalorder %s14, 1
    %p32 = por %p30, %p31
    %p33 = scmp.ne.s32.totalorder %s22, %s23
    %p34 = scmp.eq.s32.totalorder %s14, 0
    %p35 = por %p33, %p34
    %p36 = scmp.ne.s32.totalorder %s22, %s23
    %p37 = scmp.eq.s32.totalorder %s15, 1
    %p38 = por %p36, %p37
    %p40 = scmp.ne.s32.totalorder %s23, %s39
    %p41 = scmp.eq.s32.totalorder %s15, 0
    %p42 = por %p40, %p41
    %s44 = sadd.s32 %s43, 1
    %p47 = scmp.eq.s32.totalorder %s9, 1
    %p48 = scmp.ne.s32.totalorder %s43, %s45
    %p49 = scmp.eq.s32.totalorder %s9, 0
    %p50 = por %p48, %p49
    %p51 = scmp.ne.s32.totalorder %s43, %s45
    %p52 = scmp.eq.s32.totalorder %s14, 1
    %p53 = por %p51, %p52
    %p54 = scmp.ne.s32.totalorder %s45, %s46
    %p55 = scmp.eq.s32.totalorder %s14, 0
    %p56 = por %p54, %p55
    %p57 = scmp.ne.s32.totalorder %s45, %s46
    %p58 = scmp.eq.s32.totalorder %s15, 1
    %p59 = por %p57, %p58
    %p61 = scmp.ne.s32.totalorder %s46, %s60
    %p62 = scmp.eq.s32.totalorder %s15, 0
    %p63 = por %p61, %p62
    %s65 = sadd.s32 %s64, 1
    %p68 = scmp.eq.s32.totalorder %s9, 1
    %p69 = scmp.ne.s32.totalorder %s64, %s66
    %p70 = scmp.eq.s32.totalorder %s9, 0
    %p71 = por %p69, %p70
    %p72 = scmp.ne.s32.totalorder %s64, %s66
    %p73 = scmp.eq.s32.totalorder %s14, 1
    %p74 = por %p72, %p73
    %p75 = scmp.ne.s32.totalorder %s66, %s67
    %p76 = scmp.eq.s32.totalorder %s14, 0
    %p77 = por %p75, %p76
    %p78 = scmp.ne.s32.totalorder %s66, %s67
    %p79 = scmp.eq.s32.totalorder %s15, 1
    %p80 = por %p78, %p79
    %p82 = scmp.ne.s32.totalorder %s67, %s81
    %p83 = scmp.eq.s32.totalorder %s15, 0
    %p84 = por %p82, %p83
    %s85 = ssub.s32 %s9, %s16
    %p86 = scmp.eq.s32.totalorder %s85, 0
    %s88 = sadd.s32 %s87, 1
    %s89 = scalar_select %p86, %s87, %s88
    %p92 = pneg %p86
    %p93 = scmp.eq.s32.totalorder %s9, 1
    %p94 = por %p92, %p93
    %p95 = scmp.ne.s32.totalorder %s87, %s90
    %p96 = scmp.eq.s32.totalorder %s9, 0
    %p97 = por %p95, %p96
    %p98 = scmp.ne.s32.totalorder %s87, %s90
    %p99 = scmp.eq.s32.totalorder %s14, 1
    %p100 = por %p98, %p99
    %p101 = scmp.ne.s32.totalorder %s90, %s91
    %p102 = scmp.eq.s32.totalorder %s14, 0
    %p103 = por %p101, %p102
    %p104 = scmp.ne.s32.totalorder %s90, %s91
    %p105 = scmp.eq.s32.totalorder %s15, 1
    %p106 = por %p104, %p105
    %p108 = scmp.ne.s32.totalorder %s91, %s107
    %p109 = scmp.eq.s32.totalorder %s15, 0
    %p110 = por %p108, %p109
    %p111 = scmp.le.s32.totalorder 1, %s9
    %p112 = scmp.lt.s32.totalorder %s9, 3
    %p113 = pnand %p111, %p112
    %p114 = pneg %p113
    // Predicated region
    $region9: #{bottleneck_forward.3} parent=5 // pred_check
      _
    $region10: #{bottleneck_forward.3} parent=5 // pred_check_branch
      %116 = sbr.rel (%p113) target = $region12
    $region11: #{bottleneck_forward.3} parent=5 // pred_region
      %s117 = ssub.s32 %s9, 1
      // Predicated region
      $region13: #{bottleneck_forward.3} parent=11 // pred_check
        %p118 = pneg %p56
      $region14: #{bottleneck_forward.3} parent=11 // pred_check_branch
        %120 = sbr.rel (%p118) target = $region16
      $region15: #{bottleneck_forward.3} parent=11 // pred_region
        _
      $region16: #{bottleneck_forward.3} parent=11 // pred_fallthru
        _
      // Predicated region
      $region17: #{bottleneck_forward.3} parent=11 // pred_check
        %p121 = pneg %p77
      $region18: #{bottleneck_forward.3} parent=11 // pred_check_branch
        %123 = sbr.rel (%p121) target = $region20
      $region19: #{bottleneck_forward.3} parent=11 // pred_region
        _
      $region20: #{bottleneck_forward.3} parent=11 // pred_fallthru
        _
    $region12: #{bottleneck_forward.3} parent=5 // pred_fallthru
      _
    %p124 = scmp.lt.s32.totalorder %s9, 2
    // Predicated region
    $region21: #{bottleneck_forward.3} parent=5 // pred_check
      %p125 = pneg %p124
    $region22: #{bottleneck_forward.3} parent=5 // pred_check_branch
      %127 = sbr.rel (%p125) target = $region24
    $region23: #{bottleneck_forward.3} parent=5 // pred_region
      // Predicated region
      $region25: #{bottleneck_forward.3} parent=23 // pred_check
        %p128 = pneg %p29
      $region26: #{bottleneck_forward.3} parent=23 // pred_check_branch
        %130 = sbr.rel (%p128) target = $region28
      $region27: #{bottleneck_forward.3} parent=23 // pred_region
        %s131 = smul.u32 64, %s9
        %p132 = scmp.lt.s32.totalorder %s131, 127
        %s133 = scalar_select %p132, %s131, 127
        %s134 = smul.addr %s133, 4
        %s135 = scalar_lea.vmem %s0, %s134
        %s136 = smul.u32 64, %s9
      $region28: #{bottleneck_forward.3} parent=23 // pred_fallthru
        _
    $region24: #{bottleneck_forward.3} parent=5 // pred_fallthru
      _
    %p137 = scmp.le.s32.totalorder 1, %s9
    %p138 = scmp.lt.s32.totalorder %s9, 3
    %p139 = pnand %p137, %p138
    %p140 = pneg %p139
    // Predicated region
    $region29: #{bottleneck_forward.3} parent=5 // pred_check
      _
    $region30: #{bottleneck_forward.3} parent=5 // pred_check_branch
      %142 = sbr.rel (%p139) target = $region32
    $region31: #{bottleneck_forward.3} parent=5 // pred_region
      %s143 = ssub.s32 %s9, 1
      %s144 = smul.u32 64, %s14
      %p145 = scmp.lt.s32.totalorder %s144, 127
      %s146 = scalar_select %p145, %s144, 127
      %s147 = smul.addr %s146, 4
      %s148 = scalar_lea.vmem %s0, %s147
      %p149 = pneg %p35
      %p150 = pneg %p32
      %p151 = pneg %p56
      %p152 = pneg %p53
      %p153 = pneg %p77
      %p154 = pneg %p74
      %p155 = pneg %p103
      %p156 = pneg %p100
      %s157 = smul.u32 64, %s14
      %p158 = scmp.lt.s32.totalorder %s157, 127
      %s159 = scalar_select %p158, %s157, 127
      %s160 = smul.addr %s159, 4
      %s161 = scalar_lea.vmem %s3, %s160
      %s162 = smul.u32 64, %s14
      %p163 = scmp.lt.s32.totalorder %s162, 127
      %s164 = scalar_select %p163, %s162, 127
      %s165 = smul.addr %s164, 4
      %s166 = scalar_lea.vmem %s0, %s165
      %s167 = smul.u32 64, %s14
      %s168 = smul.u32 64, %s14
      %p169 = scmp.lt.s32.totalorder %s168, 127
      %s170 = scalar_select %p169, %s168, 127
      %s171 = smul.addr %s170, 4
      %s172 = scalar_lea.vmem %s3, %s171
      %s173 = smul.u32 64, %s14
      %v174 = vld [vmem:[%s166] sm:$0xf]
      %v175 = vld [vmem:[%s166 + $0x4] sm:$0xf]
      %v176 = vld [vmem:[%s166 + $0x8] sm:$0xf]
      %v177 = vld [vmem:[%s166 + $0xc] sm:$0xf]
      %v178 = vld [vmem:[%s166 + $0x10] sm:$0xf]
      %v179 = vld [vmem:[%s166 + $0x14] sm:$0xf]
      %v180 = vld [vmem:[%s166 + $0x18] sm:$0xf]
      %v181 = vld [vmem:[%s166 + $0x1c] sm:$0xf]
      %v182 = vld [vmem:[%s166 + $0x20] sm:$0xf]
      %v183 = vld [vmem:[%s166 + $0x24] sm:$0xf]
      %v184 = vld [vmem:[%s166 + $0x28] sm:$0xf]
      %v185 = vld [vmem:[%s166 + $0x2c] sm:$0xf]
      %v186 = vld [vmem:[%s166 + $0x30] sm:$0xf]
      %v187 = vld [vmem:[%s166 + $0x34] sm:$0xf]
      %v188 = vld [vmem:[%s166 + $0x38] sm:$0xf]
      %v189 = vld [vmem:[%s166 + $0x3c] sm:$0xf]
      %v190 = vld [vmem:[%s166 + $0x40] sm:$0xf]
      %v191 = vld [vmem:[%s166 + $0x44] sm:$0xf]
      %v192 = vld [vmem:[%s166 + $0x48] sm:$0xf]
      %v193 = vld [vmem:[%s166 + $0x4c] sm:$0xf]
      %v194 = vld [vmem:[%s166 + $0x50] sm:$0xf]
      %v195 = vld [vmem:[%s166 + $0x54] sm:$0xf]
      %v196 = vld [vmem:[%s166 + $0x58] sm:$0xf]
      %v197 = vld [vmem:[%s166 + $0x5c] sm:$0xf]
      %v198 = vld [vmem:[%s166 + $0x60] sm:$0xf]
      %v199 = vld [vmem:[%s166 + $0x64] sm:$0xf]
      %v200 = vld [vmem:[%s166 + $0x68] sm:$0xf]
      %v201 = vld [vmem:[%s166 + $0x6c] sm:$0xf]
      %v202 = vld [vmem:[%s166 + $0x70] sm:$0xf]
      %v203 = vld [vmem:[%s166 + $0x74] sm:$0xf]
      %v204 = vld [vmem:[%s166 + $0x78] sm:$0xf]
      %v205 = vld [vmem:[%s166 + $0x7c] sm:$0xf]
      %v206 = vld [vmem:[%s166 + $0x80] sm:$0xf]
      %v207 = vld [vmem:[%s166 + $0x84] sm:$0xf]
      %v208 = vld [vmem:[%s166 + $0x88] sm:$0xf]
      %v209 = vld [vmem:[%s166 + $0x8c] sm:$0xf]
      %v210 = vld [vmem:[%s166 + $0x90] sm:$0xf]
      %v211 = vld [vmem:[%s166 + $0x94] sm:$0xf]
      %v212 = vld [vmem:[%s166 + $0x98] sm:$0xf]
      %v213 = vld [vmem:[%s166 + $0x9c] sm:$0xf]
      %v214 = vld [vmem:[%s166 + $0xa0] sm:$0xf]
      %v215 = vld [vmem:[%s166 + $0xa4] sm:$0xf]
      %v216 = vld [vmem:[%s166 + $0xa8] sm:$0xf]
      %v217 = vld [vmem:[%s166 + $0xac] sm:$0xf]
      %v218 = vld [vmem:[%s166 + $0xb0] sm:$0xf]
      %v219 = vld [vmem:[%s166 + $0xb4] sm:$0xf]
      %v220 = vld [vmem:[%s166 + $0xb8] sm:$0xf]
      %v221 = vld [vmem:[%s166 + $0xbc] sm:$0xf]
      %v222 = vld [vmem:[%s166 + $0xc0] sm:$0xf]
      %v223 = vld [vmem:[%s166 + $0xc4] sm:$0xf]
      %v224 = vld [vmem:[%s166 + $0xc8] sm:$0xf]
      %v225 = vld [vmem:[%s166 + $0xcc] sm:$0xf]
      %v226 = vld [vmem:[%s166 + $0xd0] sm:$0xf]
      %v227 = vld [vmem:[%s166 + $0xd4] sm:$0xf]
      %v228 = vld [vmem:[%s166 + $0xd8] sm:$0xf]
      %v229 = vld [vmem:[%s166 + $0xdc] sm:$0xf]
      %v230 = vld [vmem:[%s166 + $0xe0] sm:$0xf]
      %v231 = vld [vmem:[%s166 + $0xe4] sm:$0xf]
      %v232 = vld [vmem:[%s166 + $0xe8] sm:$0xf]
      %v233 = vld [vmem:[%s166 + $0xec] sm:$0xf]
      %v234 = vld [vmem:[%s166 + $0xf0] sm:$0xf]
      %v235 = vld [vmem:[%s166 + $0xf4] sm:$0xf]
      %v236 = vld [vmem:[%s166 + $0xf8] sm:$0xf]
      %v237 = vld [vmem:[%s166 + $0xfc] sm:$0xf]
      %v238 = vld [vmem:[%s1] sm:$0xf]
      %v239 = vld [vmem:[%s1 + $0x4] sm:$0xf]
      %v240 = vld [vmem:[%s1 + $0x8] sm:$0xf]
      %v241 = vld [vmem:[%s1 + $0xc] sm:$0xf]
      %v242 = vld [vmem:[%s1 + $0x10] sm:$0xf]
      %v243 = vld [vmem:[%s1 + $0x14] sm:$0xf]
      %v244 = vld [vmem:[%s1 + $0x18] sm:$0xf]
      %v245 = vld [vmem:[%s1 + $0x1c] sm:$0xf]
      %v246 = vld [vmem:[%s1 + $0x20] sm:$0xf]
      %v247 = vld [vmem:[%s1 + $0x24] sm:$0xf]
      %v248 = vld [vmem:[%s1 + $0x28] sm:$0xf]
      %v249 = vld [vmem:[%s1 + $0x2c] sm:$0xf]
      %v250 = vld [vmem:[%s1 + $0x30] sm:$0xf]
      %v251 = vld [vmem:[%s1 + $0x34] sm:$0xf]
      %v252 = vld [vmem:[%s1 + $0x38] sm:$0xf]
      %v253 = vld [vmem:[%s1 + $0x3c] sm:$0xf]
      %v254 = vld [vmem:[%s2] sm:$0x1]
      %v256 = vperm.slane %v254, 0
      %v322 = vunpack.c.l.b16 %v174
      %v323 = vunpack.c.l.b16 %v175
      %v324 = vunpack.c.l.b16 %v176
      %v325 = vunpack.c.l.b16 %v177
      %v326 = vunpack.c.l.b16 %v178
      %v327 = vunpack.c.l.b16 %v179
      %v328 = vunpack.c.l.b16 %v180
      %v329 = vunpack.c.l.b16 %v181
      %v330 = vunpack.c.l.b16 %v182
      %v331 = vunpack.c.l.b16 %v183
      %v332 = vunpack.c.l.b16 %v184
      %v333 = vunpack.c.l.b16 %v185
      %v334 = vunpack.c.l.b16 %v186
      %v335 = vunpack.c.l.b16 %v187
      %v336 = vunpack.c.l.b16 %v188
      %v337 = vunpack.c.l.b16 %v189
      %v338 = vunpack.c.l.b16 %v190
      %v339 = vunpack.c.l.b16 %v191
      %v340 = vunpack.c.l.b16 %v192
      %v341 = vunpack.c.l.b16 %v193
      %v342 = vunpack.c.l.b16 %v194
      %v343 = vunpack.c.l.b16 %v195
      %v344 = vunpack.c.l.b16 %v196
      %v345 = vunpack.c.l.b16 %v197
      %v346 = vunpack.c.l.b16 %v198
      %v347 = vunpack.c.l.b16 %v199
      %v348 = vunpack.c.l.b16 %v200
      %v349 = vunpack.c.l.b16 %v201
      %v350 = vunpack.c.l.b16 %v202
      %v351 = vunpack.c.l.b16 %v203
      %v352 = vunpack.c.l.b16 %v204
      %v353 = vunpack.c.l.b16 %v205
      %v354 = vunpack.c.l.b16 %v206
      %v355 = vunpack.c.l.b16 %v207
      %v356 = vunpack.c.l.b16 %v208
      %v357 = vunpack.c.l.b16 %v209
      %v358 = vunpack.c.l.b16 %v210
      %v359 = vunpack.c.l.b16 %v211
      %v360 = vunpack.c.l.b16 %v212
      %v361 = vunpack.c.l.b16 %v213
      %v362 = vunpack.c.l.b16 %v214
      %v363 = vunpack.c.l.b16 %v215
      %v364 = vunpack.c.l.b16 %v216
      %v365 = vunpack.c.l.b16 %v217
      %v366 = vunpack.c.l.b16 %v218
      %v367 = vunpack.c.l.b16 %v219
      %v368 = vunpack.c.l.b16 %v220
      %v369 = vunpack.c.l.b16 %v221
      %v370 = vunpack.c.l.b16 %v222
      %v371 = vunpack.c.l.b16 %v223
      %v372 = vunpack.c.l.b16 %v224
      %v373 = vunpack.c.l.b16 %v225
      %v374 = vunpack.c.l.b16 %v226
      %v375 = vunpack.c.l.b16 %v227
      %v376 = vunpack.c.l.b16 %v228
      %v377 = vunpack.c.l.b16 %v229
      %v378 = vunpack.c.l.b16 %v230
      %v379 = vunpack.c.l.b16 %v231
      %v380 = vunpack.c.l.b16 %v232
      %v381 = vunpack.c.l.b16 %v233
      %v382 = vunpack.c.l.b16 %v234
      %v383 = vunpack.c.l.b16 %v235
      %v384 = vunpack.c.l.b16 %v236
      %v385 = vunpack.c.l.b16 %v237
      %v386 = vpack.c.b16 %v323, %v322
      %v387 = vpack.c.b16 %v325, %v324
      %v388 = vpack.c.b16 %v327, %v326
      %v389 = vpack.c.b16 %v329, %v328
      %v390 = vpack.c.b16 %v331, %v330
      %v391 = vpack.c.b16 %v333, %v332
      %v392 = vpack.c.b16 %v335, %v334
      %v393 = vpack.c.b16 %v337, %v336
      %v394 = vpack.c.b16 %v339, %v338
      %v395 = vpack.c.b16 %v341, %v340
      %v396 = vpack.c.b16 %v343, %v342
      %v397 = vpack.c.b16 %v345, %v344
      %v398 = vpack.c.b16 %v347, %v346
      %v399 = vpack.c.b16 %v349, %v348
      %v400 = vpack.c.b16 %v351, %v350
      %v401 = vpack.c.b16 %v353, %v352
      %v402 = vpack.c.b16 %v355, %v354
      %v403 = vpack.c.b16 %v357, %v356
      %v404 = vpack.c.b16 %v359, %v358
      %v405 = vpack.c.b16 %v361, %v360
      %v406 = vpack.c.b16 %v363, %v362
      %v407 = vpack.c.b16 %v365, %v364
      %v408 = vpack.c.b16 %v367, %v366
      %v409 = vpack.c.b16 %v369, %v368
      %v410 = vpack.c.b16 %v371, %v370
      %v411 = vpack.c.b16 %v373, %v372
      %v412 = vpack.c.b16 %v375, %v374
      %v413 = vpack.c.b16 %v377, %v376
      %v414 = vpack.c.b16 %v379, %v378
      %v415 = vpack.c.b16 %v381, %v380
      %v416 = vpack.c.b16 %v383, %v382
      %v417 = vpack.c.b16 %v385, %v384
      %v466 = vunpack.c.l.b16 %v238
      %v467 = vunpack.c.l.b16 %v239
      %v468 = vunpack.c.l.b16 %v240
      %v469 = vunpack.c.l.b16 %v241
      %v470 = vunpack.c.l.b16 %v242
      %v471 = vunpack.c.l.b16 %v243
      %v472 = vunpack.c.l.b16 %v244
      %v473 = vunpack.c.l.b16 %v245
      %v474 = vunpack.c.l.b16 %v246
      %v475 = vunpack.c.l.b16 %v247
      %v476 = vunpack.c.l.b16 %v248
      %v477 = vunpack.c.l.b16 %v249
      %v478 = vunpack.c.l.b16 %v250
      %v479 = vunpack.c.l.b16 %v251
      %v480 = vunpack.c.l.b16 %v252
      %v481 = vunpack.c.l.b16 %v253
      %v482 = vpack.c.b16 %v467, %v466
      %v483 = vpack.c.b16 %v469, %v468
      %v484 = vpack.c.b16 %v471, %v470
      %v485 = vpack.c.b16 %v473, %v472
      %v486 = vpack.c.b16 %v475, %v474
      %v487 = vpack.c.b16 %v477, %v476
      %v488 = vpack.c.b16 %v479, %v478
      %v489 = vpack.c.b16 %v481, %v480
      %498 = vmatpush.bf16.msra.mxu0 %v489
      %499 = vmatpush.bf16.msra.mxu0 %v488
      %500 = vmatpush.bf16.msra.mxu0 %v487
      %501 = vmatpush.bf16.msra.mxu0 %v486
      %502 = vmatpush.bf16.msra.mxu0 %v485
      %503 = vmatpush.bf16.msra.mxu0 %v484
      %504 = vmatpush.bf16.msra.mxu0 %v483
      %505 = vmatpush.bf16.msra.mxu0 %v482
      %506 = vmatmul.bf16.gmra.mxu0 %v386
      %v507 = vpop.f32.mrf.mxu0
      %v508 = vadd.f32 %v256, %v507
      %v509 = vpop.f32.mrf.mxu0
      %v510 = vadd.f32 %v256, %v509
      %511 = vmatmul.bf16.gmra.mxu0 %v387
      %v512 = vpop.f32.mrf.mxu0
      %v513 = vadd.f32 %v256, %v512
      %v514 = vpop.f32.mrf.mxu0
      %v515 = vadd.f32 %v256, %v514
      %516 = vmatmul.bf16.gmra.mxu0 %v388
      %v517 = vpop.f32.mrf.mxu0
      %v518 = vadd.f32 %v256, %v517
      %v519 = vpop.f32.mrf.mxu0
      %v520 = vadd.f32 %v256, %v519
      %521 = vmatmul.bf16.gmra.mxu0 %v389
      %v522 = vpop.f32.mrf.mxu0
      %v523 = vadd.f32 %v256, %v522
      %v524 = vpop.f32.mrf.mxu0
      %v525 = vadd.f32 %v256, %v524
      %526 = vmatmul.bf16.gmra.mxu0 %v390
      %v527 = vpop.f32.mrf.mxu0
      %v528 = vadd.f32 %v256, %v527
      %v529 = vpop.f32.mrf.mxu0
      %v530 = vadd.f32 %v256, %v529
      %531 = vmatmul.bf16.gmra.mxu0 %v391
      %v532 = vpop.f32.mrf.mxu0
      %v533 = vadd.f32 %v256, %v532
      %v534 = vpop.f32.mrf.mxu0
      %v535 = vadd.f32 %v256, %v534
      %536 = vmatmul.bf16.gmra.mxu0 %v392
      %v537 = vpop.f32.mrf.mxu0
      %v538 = vadd.f32 %v256, %v537
      %v539 = vpop.f32.mrf.mxu0
      %v540 = vadd.f32 %v256, %v539
      %541 = vmatmul.bf16.gmra.mxu0 %v393
      %v542 = vpop.f32.mrf.mxu0
      %v543 = vadd.f32 %v256, %v542
      %v544 = vpop.f32.mrf.mxu0
      %v545 = vadd.f32 %v256, %v544
      %546 = vmatmul.bf16.gmra.mxu0 %v394
      %v547 = vpop.f32.mrf.mxu0
      %v548 = vadd.f32 %v256, %v547
      %v549 = vpop.f32.mrf.mxu0
      %v550 = vadd.f32 %v256, %v549
      %551 = vmatmul.bf16.gmra.mxu0 %v395
      %v552 = vpop.f32.mrf.mxu0
      %v553 = vadd.f32 %v256, %v552
      %v554 = vpop.f32.mrf.mxu0
      %v555 = vadd.f32 %v256, %v554
      %556 = vmatmul.bf16.gmra.mxu0 %v396
      %v557 = vpop.f32.mrf.mxu0
      %v558 = vadd.f32 %v256, %v557
      %v559 = vpop.f32.mrf.mxu0
      %v560 = vadd.f32 %v256, %v559
      %561 = vmatmul.bf16.gmra.mxu0 %v397
      %v562 = vpop.f32.mrf.mxu0
      %v563 = vadd.f32 %v256, %v562
      %v564 = vpop.f32.mrf.mxu0
      %v565 = vadd.f32 %v256, %v564
      %566 = vmatmul.bf16.gmra.mxu0 %v398
      %v567 = vpop.f32.mrf.mxu0
      %v568 = vadd.f32 %v256, %v567
      %v569 = vpop.f32.mrf.mxu0
      %v570 = vadd.f32 %v256, %v569
      %571 = vmatmul.bf16.gmra.mxu0 %v399
      %v572 = vpop.f32.mrf.mxu0
      %v573 = vadd.f32 %v256, %v572
      %v574 = vpop.f32.mrf.mxu0
      %v575 = vadd.f32 %v256, %v574
      %576 = vmatmul.bf16.gmra.mxu0 %v400
      %v577 = vpop.f32.mrf.mxu0
      %v578 = vadd.f32 %v256, %v577
      %v579 = vpop.f32.mrf.mxu0
      %v580 = vadd.f32 %v256, %v579
      %581 = vmatmul.bf16.gmra.mxu0 %v401
      %v582 = vpop.f32.mrf.mxu0
      %v583 = vadd.f32 %v256, %v582
      %v584 = vpop.f32.mrf.mxu0
      %v585 = vadd.f32 %v256, %v584
      %586 = vmatmul.bf16.gmra.mxu0 %v402
      %v587 = vpop.f32.mrf.mxu0
      %v588 = vadd.f32 %v256, %v587
      %v589 = vpop.f32.mrf.mxu0
      %v590 = vadd.f32 %v256, %v589
      %591 = vmatmul.bf16.gmra.mxu0 %v403
      %v592 = vpop.f32.mrf.mxu0
      %v593 = vadd.f32 %v256, %v592
      %v594 = vpop.f32.mrf.mxu0
      %v595 = vadd.f32 %v256, %v594
      %596 = vmatmul.bf16.gmra.mxu0 %v404
      %v597 = vpop.f32.mrf.mxu0
      %v598 = vadd.f32 %v256, %v597
      %v599 = vpop.f32.mrf.mxu0
      %v600 = vadd.f32 %v256, %v599
      %601 = vmatmul.bf16.gmra.mxu0 %v405
      %v602 = vpop.f32.mrf.mxu0
      %v603 = vadd.f32 %v256, %v602
      %v604 = vpop.f32.mrf.mxu0
      %v605 = vadd.f32 %v256, %v604
      %606 = vmatmul.bf16.gmra.mxu0 %v406
      %v607 = vpop.f32.mrf.mxu0
      %v608 = vadd.f32 %v256, %v607
      %v609 = vpop.f32.mrf.mxu0
      %v610 = vadd.f32 %v256, %v609
      %611 = vmatmul.bf16.gmra.mxu0 %v407
      %v612 = vpop.f32.mrf.mxu0
      %v613 = vadd.f32 %v256, %v612
      %v614 = vpop.f32.mrf.mxu0
      %v615 = vadd.f32 %v256, %v614
      %616 = vmatmul.bf16.gmra.mxu0 %v408
      %v617 = vpop.f32.mrf.mxu0
      %v618 = vadd.f32 %v256, %v617
      %v619 = vpop.f32.mrf.mxu0
      %v620 = vadd.f32 %v256, %v619
      %621 = vmatmul.bf16.gmra.mxu0 %v409
      %v622 = vpop.f32.mrf.mxu0
      %v623 = vadd.f32 %v256, %v622
      %v624 = vpop.f32.mrf.mxu0
      %v625 = vadd.f32 %v256, %v624
      %626 = vmatmul.bf16.gmra.mxu0 %v410
      %v627 = vpop.f32.mrf.mxu0
      %v628 = vadd.f32 %v256, %v627
      %v629 = vpop.f32.mrf.mxu0
      %v630 = vadd.f32 %v256, %v629
      %631 = vmatmul.bf16.gmra.mxu0 %v411
      %v632 = vpop.f32.mrf.mxu0
      %v633 = vadd.f32 %v256, %v632
      %v634 = vpop.f32.mrf.mxu0
      %v635 = vadd.f32 %v256, %v634
      %636 = vmatmul.bf16.gmra.mxu0 %v412
      %v637 = vpop.f32.mrf.mxu0
      %v638 = vadd.f32 %v256, %v637
      %v639 = vpop.f32.mrf.mxu0
      %v640 = vadd.f32 %v256, %v639
      %641 = vmatmul.bf16.gmra.mxu0 %v413
      %v642 = vpop.f32.mrf.mxu0
      %v643 = vadd.f32 %v256, %v642
      %v644 = vpop.f32.mrf.mxu0
      %v645 = vadd.f32 %v256, %v644
      %646 = vmatmul.bf16.gmra.mxu0 %v414
      %v647 = vpop.f32.mrf.mxu0
      %v648 = vadd.f32 %v256, %v647
      %v649 = vpop.f32.mrf.mxu0
      %v650 = vadd.f32 %v256, %v649
      %651 = vmatmul.bf16.gmra.mxu0 %v415
      %v652 = vpop.f32.mrf.mxu0
      %v653 = vadd.f32 %v256, %v652
      %v654 = vpop.f32.mrf.mxu0
      %v655 = vadd.f32 %v256, %v654
      %656 = vmatmul.bf16.gmra.mxu0 %v416
      %v657 = vpop.f32.mrf.mxu0
      %v658 = vadd.f32 %v256, %v657
      %v659 = vpop.f32.mrf.mxu0
      %v660 = vadd.f32 %v256, %v659
      %661 = vmatmul.bf16.gmra.mxu0 %v417
      %v662 = vpop.f32.mrf.mxu0
      %v663 = vadd.f32 %v256, %v662
      %v664 = vpop.f32.mrf.mxu0
      %v665 = vadd.f32 %v256, %v664
      %666 = vdwg.mxu0
      %v667 = vmax.f32 %v508, 0.0
      %v668 = vmax.f32 %v510, 0.0
      %v669 = vmax.f32 %v513, 0.0
      %v670 = vmax.f32 %v515, 0.0
      %v671 = vmax.f32 %v518, 0.0
      %v672 = vmax.f32 %v520, 0.0
      %v673 = vmax.f32 %v523, 0.0
      %v674 = vmax.f32 %v525, 0.0
      %v675 = vmax.f32 %v528, 0.0
      %v676 = vmax.f32 %v530, 0.0
      %v677 = vmax.f32 %v533, 0.0
      %v678 = vmax.f32 %v535, 0.0
      %v679 = vmax.f32 %v538, 0.0
      %v680 = vmax.f32 %v540, 0.0
      %v681 = vmax.f32 %v543, 0.0
      %v682 = vmax.f32 %v545, 0.0
      %v683 = vmax.f32 %v548, 0.0
      %v684 = vmax.f32 %v550, 0.0
      %v685 = vmax.f32 %v553, 0.0
      %v686 = vmax.f32 %v555, 0.0
      %v687 = vmax.f32 %v558, 0.0
      %v688 = vmax.f32 %v560, 0.0
      %v689 = vmax.f32 %v563, 0.0
      %v690 = vmax.f32 %v565, 0.0
      %v691 = vmax.f32 %v568, 0.0
      %v692 = vmax.f32 %v570, 0.0
      %v693 = vmax.f32 %v573, 0.0
      %v694 = vmax.f32 %v575, 0.0
      %v695 = vmax.f32 %v578, 0.0
      %v696 = vmax.f32 %v580, 0.0
      %v697 = vmax.f32 %v583, 0.0
      %v698 = vmax.f32 %v585, 0.0
      %v699 = vmax.f32 %v588, 0.0
      %v700 = vmax.f32 %v590, 0.0
      %v701 = vmax.f32 %v593, 0.0
      %v702 = vmax.f32 %v595, 0.0
      %v703 = vmax.f32 %v598, 0.0
      %v704 = vmax.f32 %v600, 0.0
      %v705 = vmax.f32 %v603, 0.0
      %v706 = vmax.f32 %v605, 0.0
      %v707 = vmax.f32 %v608, 0.0
      %v708 = vmax.f32 %v610, 0.0
      %v709 = vmax.f32 %v613, 0.0
      %v710 = vmax.f32 %v615, 0.0
      %v711 = vmax.f32 %v618, 0.0
      %v712 = vmax.f32 %v620, 0.0
      %v713 = vmax.f32 %v623, 0.0
      %v714 = vmax.f32 %v625, 0.0
      %v715 = vmax.f32 %v628, 0.0
      %v716 = vmax.f32 %v630, 0.0
      %v717 = vmax.f32 %v633, 0.0
      %v718 = vmax.f32 %v635, 0.0
      %v719 = vmax.f32 %v638, 0.0
      %v720 = vmax.f32 %v640, 0.0
      %v721 = vmax.f32 %v643, 0.0
      %v722 = vmax.f32 %v645, 0.0
      %v723 = vmax.f32 %v648, 0.0
      %v724 = vmax.f32 %v650, 0.0
      %v725 = vmax.f32 %v653, 0.0
      %v726 = vmax.f32 %v655, 0.0
      %v727 = vmax.f32 %v658, 0.0
      %v728 = vmax.f32 %v660, 0.0
      %v729 = vmax.f32 %v663, 0.0
      %v730 = vmax.f32 %v665, 0.0
      %v731 = vpack.c.bf16 %v667, %v667
      %v732 = vpack.c.bf16 %v668, %v668
      %v733 = vpack.c.bf16 %v669, %v669
      %v734 = vpack.c.bf16 %v670, %v670
      %v735 = vpack.c.bf16 %v671, %v671
      %v736 = vpack.c.bf16 %v672, %v672
      %v737 = vpack.c.bf16 %v673, %v673
      %v738 = vpack.c.bf16 %v674, %v674
      %v739 = vpack.c.bf16 %v675, %v675
      %v740 = vpack.c.bf16 %v676, %v676
      %v741 = vpack.c.bf16 %v677, %v677
      %v742 = vpack.c.bf16 %v678, %v678
      %v743 = vpack.c.bf16 %v679, %v679
      %v744 = vpack.c.bf16 %v680, %v680
      %v745 = vpack.c.bf16 %v681, %v681
      %v746 = vpack.c.bf16 %v682, %v682
      %v747 = vpack.c.bf16 %v683, %v683
      %v748 = vpack.c.bf16 %v684, %v684
      %v749 = vpack.c.bf16 %v685, %v685
      %v750 = vpack.c.bf16 %v686, %v686
      %v751 = vpack.c.bf16 %v687, %v687
      %v752 = vpack.c.bf16 %v688, %v688
      %v753 = vpack.c.bf16 %v689, %v689
      %v754 = vpack.c.bf16 %v690, %v690
      %v755 = vpack.c.bf16 %v691, %v691
      %v756 = vpack.c.bf16 %v692, %v692
      %v757 = vpack.c.bf16 %v693, %v693
      %v758 = vpack.c.bf16 %v694, %v694
      %v759 = vpack.c.bf16 %v695, %v695
      %v760 = vpack.c.bf16 %v696, %v696
      %v761 = vpack.c.bf16 %v697, %v697
      %v762 = vpack.c.bf16 %v698, %v698
      %v763 = vpack.c.bf16 %v699, %v699
      %v764 = vpack.c.bf16 %v700, %v700
      %v765 = vpack.c.bf16 %v701, %v701
      %v766 = vpack.c.bf16 %v702, %v702
      %v767 = vpack.c.bf16 %v703, %v703
      %v768 = vpack.c.bf16 %v704, %v704
      %v769 = vpack.c.bf16 %v705, %v705
      %v770 = vpack.c.bf16 %v706, %v706
      %v771 = vpack.c.bf16 %v707, %v707
      %v772 = vpack.c.bf16 %v708, %v708
      %v773 = vpack.c.bf16 %v709, %v709
      %v774 = vpack.c.bf16 %v710, %v710
      %v775 = vpack.c.bf16 %v711, %v711
      %v776 = vpack.c.bf16 %v712, %v712
      %v777 = vpack.c.bf16 %v713, %v713
      %v778 = vpack.c.bf16 %v714, %v714
      %v779 = vpack.c.bf16 %v715, %v715
      %v780 = vpack.c.bf16 %v716, %v716
      %v781 = vpack.c.bf16 %v717, %v717
      %v782 = vpack.c.bf16 %v718, %v718
      %v783 = vpack.c.bf16 %v719, %v719
      %v784 = vpack.c.bf16 %v720, %v720
      %v785 = vpack.c.bf16 %v721, %v721
      %v786 = vpack.c.bf16 %v722, %v722
      %v787 = vpack.c.bf16 %v723, %v723
      %v788 = vpack.c.bf16 %v724, %v724
      %v789 = vpack.c.bf16 %v725, %v725
      %v790 = vpack.c.bf16 %v726, %v726
      %v791 = vpack.c.bf16 %v727, %v727
      %v792 = vpack.c.bf16 %v728, %v728
      %v793 = vpack.c.bf16 %v729, %v729
      %v794 = vpack.c.bf16 %v730, %v730
      %795 = vst [vmem:[%s172] sm:$0xf] %v731
      %796 = vst [vmem:[%s172 + $0x4] sm:$0xf] %v732
      %797 = vst [vmem:[%s172 + $0x8] sm:$0xf] %v733
      %798 = vst [vmem:[%s172 + $0xc] sm:$0xf] %v734
      %799 = vst [vmem:[%s172 + $0x10] sm:$0xf] %v735
      %800 = vst [vmem:[%s172 + $0x14] sm:$0xf] %v736
      %801 = vst [vmem:[%s172 + $0x18] sm:$0xf] %v737
      %802 = vst [vmem:[%s172 + $0x1c] sm:$0xf] %v738
      %803 = vst [vmem:[%s172 + $0x20] sm:$0xf] %v739
      %804 = vst [vmem:[%s172 + $0x24] sm:$0xf] %v740
      %805 = vst [vmem:[%s172 + $0x28] sm:$0xf] %v741
      %806 = vst [vmem:[%s172 + $0x2c] sm:$0xf] %v742
      %807 = vst [vmem:[%s172 + $0x30] sm:$0xf] %v743
      %808 = vst [vmem:[%s172 + $0x34] sm:$0xf] %v744
      %809 = vst [vmem:[%s172 + $0x38] sm:$0xf] %v745
      %810 = vst [vmem:[%s172 + $0x3c] sm:$0xf] %v746
      %811 = vst [vmem:[%s172 + $0x40] sm:$0xf] %v747
      %812 = vst [vmem:[%s172 + $0x44] sm:$0xf] %v748
      %813 = vst [vmem:[%s172 + $0x48] sm:$0xf] %v749
      %814 = vst [vmem:[%s172 + $0x4c] sm:$0xf] %v750
      %815 = vst [vmem:[%s172 + $0x50] sm:$0xf] %v751
      %816 = vst [vmem:[%s172 + $0x54] sm:$0xf] %v752
      %817 = vst [vmem:[%s172 + $0x58] sm:$0xf] %v753
      %818 = vst [vmem:[%s172 + $0x5c] sm:$0xf] %v754
      %819 = vst [vmem:[%s172 + $0x60] sm:$0xf] %v755
      %820 = vst [vmem:[%s172 + $0x64] sm:$0xf] %v756
      %821 = vst [vmem:[%s172 + $0x68] sm:$0xf] %v757
      %822 = vst [vmem:[%s172 + $0x6c] sm:$0xf] %v758
      %823 = vst [vmem:[%s172 + $0x70] sm:$0xf] %v759
      %824 = vst [vmem:[%s172 + $0x74] sm:$0xf] %v760
      %825 = vst [vmem:[%s172 + $0x78] sm:$0xf] %v761
      %826 = vst [vmem:[%s172 + $0x7c] sm:$0xf] %v762
      %827 = vst [vmem:[%s172 + $0x80] sm:$0xf] %v763
      %828 = vst [vmem:[%s172 + $0x84] sm:$0xf] %v764
      %829 = vst [vmem:[%s172 + $0x88] sm:$0xf] %v765
      %830 = vst [vmem:[%s172 + $0x8c] sm:$0xf] %v766
      %831 = vst [vmem:[%s172 + $0x90] sm:$0xf] %v767
      %832 = vst [vmem:[%s172 + $0x94] sm:$0xf] %v768
      %833 = vst [vmem:[%s172 + $0x98] sm:$0xf] %v769
      %834 = vst [vmem:[%s172 + $0x9c] sm:$0xf] %v770
      %835 = vst [vmem:[%s172 + $0xa0] sm:$0xf] %v771
      %836 = vst [vmem:[%s172 + $0xa4] sm:$0xf] %v772
      %837 = vst [vmem:[%s172 + $0xa8] sm:$0xf] %v773
      %838 = vst [vmem:[%s172 + $0xac] sm:$0xf] %v774
      %839 = vst [vmem:[%s172 + $0xb0] sm:$0xf] %v775
      %840 = vst [vmem:[%s172 + $0xb4] sm:$0xf] %v776
      %841 = vst [vmem:[%s172 + $0xb8] sm:$0xf] %v777
      %842 = vst [vmem:[%s172 + $0xbc] sm:$0xf] %v778
      %843 = vst [vmem:[%s172 + $0xc0] sm:$0xf] %v779
      %844 = vst [vmem:[%s172 + $0xc4] sm:$0xf] %v780
      %845 = vst [vmem:[%s172 + $0xc8] sm:$0xf] %v781
      %846 = vst [vmem:[%s172 + $0xcc] sm:$0xf] %v782
      %847 = vst [vmem:[%s172 + $0xd0] sm:$0xf] %v783
      %848 = vst [vmem:[%s172 + $0xd4] sm:$0xf] %v784
      %849 = vst [vmem:[%s172 + $0xd8] sm:$0xf] %v785
      %850 = vst [vmem:[%s172 + $0xdc] sm:$0xf] %v786
      %851 = vst [vmem:[%s172 + $0xe0] sm:$0xf] %v787
      %852 = vst [vmem:[%s172 + $0xe4] sm:$0xf] %v788
      %853 = vst [vmem:[%s172 + $0xe8] sm:$0xf] %v789
      %854 = vst [vmem:[%s172 + $0xec] sm:$0xf] %v790
      %855 = vst [vmem:[%s172 + $0xf0] sm:$0xf] %v791
      %856 = vst [vmem:[%s172 + $0xf4] sm:$0xf] %v792
      %857 = vst [vmem:[%s172 + $0xf8] sm:$0xf] %v793
      %858 = vst [vmem:[%s172 + $0xfc] sm:$0xf] %v794
      %s859 = smul.u32 64, %s14
      %p860 = scmp.lt.s32.totalorder %s859, 127
      %s861 = scalar_select %p860, %s859, 127
      %s862 = smul.addr %s861, 4
      %s863 = scalar_lea.vmem %s3, %s862
      // Predicated region
      $region33: #{bottleneck_forward.3} parent=31 // pred_check
        %p864 = pneg %p100
      $region34: #{bottleneck_forward.3} parent=31 // pred_check_branch
        %866 = sbr.rel (%p864) target = $region36
      $region35: #{bottleneck_forward.3} parent=31 // pred_region
        %s867 = smul.u32 64, %s14
      $region36: #{bottleneck_forward.3} parent=31 // pred_fallthru
        _
    $region32: #{bottleneck_forward.3} parent=5 // pred_fallthru
      _
    %p868 = scmp.le.s32.totalorder 2, %s9
    // Predicated region
    $region37: #{bottleneck_forward.3} parent=5 // pred_check
      %p869 = pneg %p868
    $region38: #{bottleneck_forward.3} parent=5 // pred_check_branch
      %871 = sbr.rel (%p869) target = $region40
    $region39: #{bottleneck_forward.3} parent=5 // pred_region
      %s872 = ssub.s32 %s9, 2
      // Predicated region
      $region41: #{bottleneck_forward.3} parent=39 // pred_check
        %p873 = pneg %p106
      $region42: #{bottleneck_forward.3} parent=39 // pred_check_branch
        %875 = sbr.rel (%p873) target = $region44
      $region43: #{bottleneck_forward.3} parent=39 // pred_region
        %s876 = smul.u32 64, %s15
        %p877 = scmp.lt.s32.totalorder %s876, 127
        %s878 = scalar_select %p877, %s876, 127
        %s879 = smul.addr %s878, 4
        %s880 = scalar_lea.vmem %s3, %s879
      $region44: #{bottleneck_forward.3} parent=39 // pred_fallthru
        _
    $region40: #{bottleneck_forward.3} parent=5 // pred_fallthru
      _
  $region6: #{bottleneck_forward.3} parent=0 // loop_footer
    %s13 = sadd.s32 1, %s9
  $region7: #{bottleneck_forward.3} parent=0 // loop_footer_branch
    %8 = sbr.rel target = $region3
  $region8: #{bottleneck_forward.3} parent=0 // loop_exit
    _

// kernel: bottleneck_forward.4
$region0: #{bottleneck_forward.4}
  #allocation0 [shape = 'u32[]', space=smem, size = 0x4, offset = 0x4, fixed_abs, tag = 'smem constant byte address 0x4 - core index']
  #allocation1 [shape = 'u32[72,128]{1,0:T(1,128)}', space=vmem, size = 0x9000, scoped, tag = 'internal scratch']
  #allocation2 [shape = 'bf16[10,16,128]{2,1,0:T(8,128)(2,1)}', space=vmem, size = 0xa000, scoped, tag = 'scratch operand']
  #allocation3 [shape = 'f32[128,128]{1,0:T(8,128)}', space=vmem, size = 0x10000, scoped, tag = 'scratch operand']
  %s0 = inlined_call_operand.vmem [shape: bf16[2,8,8,8,128], index: 0, kind: input, shape index: {}]
  %s1 = inlined_call_operand.vmem [shape: bf16[9,384,128], index: 1, kind: input, shape index: {}]
  %s2 = inlined_call_operand.vmem [shape: f32[1,128], index: 2, kind: input, shape index: {}]
  %s3 = inlined_call_operand.vmem [shape: bf16[2,8,8,8,128], index: 3, kind: output, shape index: {}]
  %s4 = sld [smem:[#allocation0]]
  $region57: #{bottleneck_forward.4} parent=0
    _
  %s6 = ssub.s32 1, %s4
  %s7 = scalar_select 0, %s6, %s4
  loop: start=0, step=1, limit=50
  $region2: #{bottleneck_forward.4} parent=0 // loop_pre_header
    _
  $region3: #{bottleneck_forward.4} parent=0 // loop_header
    %s9 = sphi 0, %s13
    %p10 = scmp.ge.s32.totalorder %s9, 50
    %s16 = sphi 0, %s35
    %s17 = sphi 0, %s31
    %s18 = sphi 0, %s27
    %s19 = sphi 0, %s16
    %s20 = sphi 0, %s17
    %s21 = sphi 0, %s18
    %s22 = sphi 0, %s19
    %s23 = sphi 0, %s20
    %s24 = sphi 0, %s21
    %s52 = sphi 0, %s54
    %s55 = sphi 0, %s52
    %s56 = sphi 0, %s55
    %s72 = sphi 0, %s56
    %s76 = sphi 0, %s76
    %s78 = sphi 0, %s76
    %s79 = sphi 0, %s78
    %s93 = sphi 0, %s79
    %s97 = sphi 0, %s97
    %s99 = sphi 0, %s97
    %s100 = sphi 0, %s99
    %s114 = sphi 0, %s100
    %s122 = sphi 0, %s124
    %s125 = sphi 0, %s122
    %s126 = sphi 0, %s125
    %s142 = sphi 0, %s126
  $region4: #{bottleneck_forward.4} parent=0 // loop_header_branch
    %12 = sbr.rel (%p10) target = $region8
  $region5: #{bottleneck_forward.4} parent=0 // loop_body
    %s14 = ssub.s32 %s9, 1
    %s15 = ssub.s32 %s9, 2
    %s25 = sadd.s32 1, %s18
    %p26 = scmp.ge.s32.totalorder %s25, 3
    %s27 = scalar_select %p26, 0, %s25
    %s28 = sadd.s32 1, %s17
    %s29 = scalar_select %p26, %s28, %s17
    %p30 = scmp.ge.s32.totalorder %s29, 8
    %s31 = scalar_select %p30, 0, %s29
    %s32 = sadd.s32 1, %s16
    %s33 = scalar_select %p30, %s32, %s16
    %p34 = scmp.ge.s32.totalorder %s33, 2
    %s35 = scalar_select %p34, 0, %s33
    %s36 = sadd.s32 %s17, %s18
    %s37 = ssub.s32 %s36, 1
    %p38 = scmp.gt.s32.totalorder %s37, 0
    %s39 = scalar_select %p38, %s37, 0
    %p40 = scmp.lt.s32.totalorder %s39, 7
    %s41 = scalar_select %p40, %s39, 7
    %s42 = sadd.s32 %s31, %s27
    %s43 = ssub.s32 %s42, 1
    %p44 = scmp.gt.s32.totalorder %s43, 0
    %s45 = scalar_select %p44, %s43, 0
    %p46 = scmp.lt.s32.totalorder %s45, 7
    %s47 = scalar_select %p46, %s45, 7
    %s48 = ssub.s32 %s16, %s35
    %s49 = ssub.s32 %s41, %s47
    %s50 = sor.u32 %s48, %s49
    %p51 = scmp.eq.s32.totalorder %s50, 0
    %s53 = sadd.s32 %s52, 1
    %s54 = scalar_select %p51, %s52, %s53
    %p57 = pneg %p51
    %p58 = scmp.eq.s32.totalorder %s9, 47
    %p59 = por %p57, %p58
    %p60 = scmp.ne.s32.totalorder %s52, %s55
    %p61 = scmp.eq.s32.totalorder %s9, 0
    %p62 = por %p60, %p61
    %p63 = scmp.ne.s32.totalorder %s52, %s55
    %p64 = scmp.eq.s32.totalorder %s14, 47
    %p65 = por %p63, %p64
    %p66 = scmp.ne.s32.totalorder %s55, %s56
    %p67 = scmp.eq.s32.totalorder %s14, 0
    %p68 = por %p66, %p67
    %p69 = scmp.ne.s32.totalorder %s55, %s56
    %p70 = scmp.eq.s32.totalorder %s15, 47
    %p71 = por %p69, %p70
    %p73 = scmp.ne.s32.totalorder %s56, %s72
    %p74 = scmp.eq.s32.totalorder %s15, 0
    %p75 = por %p73, %p74
    %s77 = sadd.s32 %s76, 1
    %p80 = scmp.eq.s32.totalorder %s9, 47
    %p81 = scmp.ne.s32.totalorder %s76, %s78
    %p82 = scmp.eq.s32.totalorder %s9, 0
    %p83 = por %p81, %p82
    %p84 = scmp.ne.s32.totalorder %s76, %s78
    %p85 = scmp.eq.s32.totalorder %s14, 47
    %p86 = por %p84, %p85
    %p87 = scmp.ne.s32.totalorder %s78, %s79
    %p88 = scmp.eq.s32.totalorder %s14, 0
    %p89 = por %p87, %p88
    %p90 = scmp.ne.s32.totalorder %s78, %s79
    %p91 = scmp.eq.s32.totalorder %s15, 47
    %p92 = por %p90, %p91
    %p94 = scmp.ne.s32.totalorder %s79, %s93
    %p95 = scmp.eq.s32.totalorder %s15, 0
    %p96 = por %p94, %p95
    %s98 = sadd.s32 %s97, 1
    %p101 = scmp.eq.s32.totalorder %s9, 47
    %p102 = scmp.ne.s32.totalorder %s97, %s99
    %p103 = scmp.eq.s32.totalorder %s9, 0
    %p104 = por %p102, %p103
    %p105 = scmp.ne.s32.totalorder %s97, %s99
    %p106 = scmp.eq.s32.totalorder %s14, 47
    %p107 = por %p105, %p106
    %p108 = scmp.ne.s32.totalorder %s99, %s100
    %p109 = scmp.eq.s32.totalorder %s14, 0
    %p110 = por %p108, %p109
    %p111 = scmp.ne.s32.totalorder %s99, %s100
    %p112 = scmp.eq.s32.totalorder %s15, 47
    %p113 = por %p111, %p112
    %p115 = scmp.ne.s32.totalorder %s100, %s114
    %p116 = scmp.eq.s32.totalorder %s15, 0
    %p117 = por %p115, %p116
    %s118 = ssub.s32 %s16, %s35
    %s119 = ssub.s32 %s17, %s31
    %s120 = sor.u32 %s118, %s119
    %p121 = scmp.eq.s32.totalorder %s120, 0
    %s123 = sadd.s32 %s122, 1
    %s124 = scalar_select %p121, %s122, %s123
    %p127 = pneg %p121
    %p128 = scmp.eq.s32.totalorder %s9, 47
    %p129 = por %p127, %p128
    %p130 = scmp.ne.s32.totalorder %s122, %s125
    %p131 = scmp.eq.s32.totalorder %s9, 0
    %p132 = por %p130, %p131
    %p133 = scmp.ne.s32.totalorder %s122, %s125
    %p134 = scmp.eq.s32.totalorder %s14, 47
    %p135 = por %p133, %p134
    %p136 = scmp.ne.s32.totalorder %s125, %s126
    %p137 = scmp.eq.s32.totalorder %s14, 0
    %p138 = por %p136, %p137
    %p139 = scmp.ne.s32.totalorder %s125, %s126
    %p140 = scmp.eq.s32.totalorder %s15, 47
    %p141 = por %p139, %p140
    %p143 = scmp.ne.s32.totalorder %s126, %s142
    %p144 = scmp.eq.s32.totalorder %s15, 0
    %p145 = por %p143, %p144
    %p146 = scmp.le.s32.totalorder 1, %s9
    %p147 = scmp.lt.s32.totalorder %s9, 49
    %p148 = pnand %p146, %p147
    %p149 = pneg %p148
    // Predicated region
    $region9: #{bottleneck_forward.4} parent=5 // pred_check
      _
    $region10: #{bottleneck_forward.4} parent=5 // pred_check_branch
      %151 = sbr.rel (%p148) target = $region12
    $region11: #{bottleneck_forward.4} parent=5 // pred_region
      %s152 = ssub.s32 %s9, 1
      // Predicated region
      $region13: #{bottleneck_forward.4} parent=11 // pred_check
        %p153 = pneg %p89
      $region14: #{bottleneck_forward.4} parent=11 // pred_check_branch
        %155 = sbr.rel (%p153) target = $region16
      $region15: #{bottleneck_forward.4} parent=11 // pred_region
        _
      $region16: #{bottleneck_forward.4} parent=11 // pred_fallthru
        _
      // Predicated region
      $region17: #{bottleneck_forward.4} parent=11 // pred_check
        %p156 = pneg %p110
      $region18: #{bottleneck_forward.4} parent=11 // pred_check_branch
        %158 = sbr.rel (%p156) target = $region20
      $region19: #{bottleneck_forward.4} parent=11 // pred_region
        _
      $region20: #{bottleneck_forward.4} parent=11 // pred_fallthru
        _
    $region12: #{bottleneck_forward.4} parent=5 // pred_fallthru
      _
    %p159 = scmp.lt.s32.totalorder %s9, 48
    // Predicated region
    $region21: #{bottleneck_forward.4} parent=5 // pred_check
      %p160 = pneg %p159
    $region22: #{bottleneck_forward.4} parent=5 // pred_check_branch
      %162 = sbr.rel (%p160) target = $region24
    $region23: #{bottleneck_forward.4} parent=5 // pred_region
      // Predicated region
      $region25: #{bottleneck_forward.4} parent=23 // pred_check
        %p163 = pneg %p62
      $region26: #{bottleneck_forward.4} parent=23 // pred_check_branch
        %165 = sbr.rel (%p163) target = $region28
      $region27: #{bottleneck_forward.4} parent=23 // pred_region
        %s166 = sadd.s32 %s17, %s18
        %s167 = ssub.s32 %s166, 1
        %p168 = scmp.gt.s32.totalorder %s167, 0
        %s169 = scalar_select %p168, %s167, 0
        %p170 = scmp.lt.s32.totalorder %s169, 7
        %s171 = scalar_select %p170, %s169, 7
        %p172 = scmp.lt.s32.totalorder %s16, 1
        %s173 = scalar_select %p172, %s16, 1
        %p174 = scmp.lt.s32.totalorder %s171, 7
        %s175 = scalar_select %p174, %s171, 7
        %s176 = smul.addr %s175, 8
        %s177 = smul.addr %s173, 64
        %s178 = sadd.s32 %s176, %s177
        %s179 = smul.addr %s178, 4
        %s180 = scalar_lea.vmem %s0, %s179
        %s181 = sadd.s32 %s17, %s18
        %s182 = ssub.s32 %s181, 1
        %p183 = scmp.gt.s32.totalorder %s182, 0
        %s184 = scalar_select %p183, %s182, 0
        %p185 = scmp.lt.s32.totalorder %s184, 7
        %s186 = scalar_select %p185, %s184, 7
      $region28: #{bottleneck_forward.4} parent=23 // pred_fallthru
        _
    $region24: #{bottleneck_forward.4} parent=5 // pred_fallthru
      _
    %p187 = scmp.le.s32.totalorder 1, %s9
    %p188 = scmp.lt.s32.totalorder %s9, 49
    %p189 = pnand %p187, %p188
    %p190 = pneg %p189
    // Predicated region
    $region29: #{bottleneck_forward.4} parent=5 // pred_check
      _
    $region30: #{bottleneck_forward.4} parent=5 // pred_check_branch
      %192 = sbr.rel (%p189) target = $region32
    $region31: #{bottleneck_forward.4} parent=5 // pred_region
      %s193 = ssub.s32 %s9, 1
      %s194 = sadd.s32 %s20, %s21
      %s195 = ssub.s32 %s194, 1
      %p196 = scmp.gt.s32.totalorder %s195, 0
      %s197 = scalar_select %p196, %s195, 0
      %p198 = scmp.lt.s32.totalorder %s197, 7
      %s199 = scalar_select %p198, %s197, 7
      %p200 = scmp.lt.s32.totalorder %s19, 1
      %s201 = scalar_select %p200, %s19, 1
      %p202 = scmp.lt.s32.totalorder %s199, 7
      %s203 = scalar_select %p202, %s199, 7
      %s204 = smul.addr %s203, 8
      %s205 = smul.addr %s201, 64
      %s206 = sadd.s32 %s204, %s205
      %s207 = smul.addr %s206, 4
      %s208 = scalar_lea.vmem %s0, %s207
      %p209 = pneg %p68
      %p210 = pneg %p65
      %p211 = pneg %p89
      %p212 = pneg %p86
      %p213 = pneg %p110
      %p214 = pneg %p107
      %p215 = pneg %p138
      %p216 = pneg %p135
      %p217 = scmp.lt.s32.totalorder %s19, 1
      %s218 = scalar_select %p217, %s19, 1
      %p219 = scmp.lt.s32.totalorder %s20, 7
      %s220 = scalar_select %p219, %s20, 7
      %s221 = smul.addr %s220, 8
      %s222 = smul.addr %s218, 64
      %s223 = sadd.s32 %s221, %s222
      %s224 = smul.addr %s223, 4
      %s225 = scalar_lea.vmem %s3, %s224
      %s226 = sadd.s32 %s20, %s21
      %s227 = ssub.s32 %s226, 1
      %p228 = scmp.gt.s32.totalorder %s227, 0
      %s229 = scalar_select %p228, %s227, 0
      %p230 = scmp.lt.s32.totalorder %s229, 7
      %s231 = scalar_select %p230, %s229, 7
      %p232 = scmp.lt.s32.totalorder %s19, 1
      %s233 = scalar_select %p232, %s19, 1
      %p234 = scmp.lt.s32.totalorder %s231, 7
      %s235 = scalar_select %p234, %s231, 7
      %s236 = smul.addr %s235, 8
      %s237 = smul.addr %s233, 64
      %s238 = sadd.s32 %s236, %s237
      %s239 = smul.addr %s238, 4
      %s240 = scalar_lea.vmem %s0, %s239
      %s241 = sadd.s32 %s20, %s21
      %s242 = ssub.s32 %s241, 1
      %p243 = scmp.gt.s32.totalorder %s242, 0
      %s244 = scalar_select %p243, %s242, 0
      %p245 = scmp.lt.s32.totalorder %s244, 7
      %s246 = scalar_select %p245, %s244, 7
      %p247 = scmp.lt.s32.totalorder %s19, 1
      %s248 = scalar_select %p247, %s19, 1
      %p249 = scmp.lt.s32.totalorder %s20, 7
      %s250 = scalar_select %p249, %s20, 7
      %s251 = smul.addr %s250, 8
      %s252 = smul.addr %s248, 64
      %s253 = sadd.s32 %s251, %s252
      %s254 = smul.addr %s253, 4
      %s255 = scalar_lea.vmem %s3, %s254
      %p257 = scmp.eq.s32.totalorder %s21, 0
      // Predicated region
      $region33: #{bottleneck_forward.4} parent=31 // pred_check
        %p258 = pneg %p257
      $region34: #{bottleneck_forward.4} parent=31 // pred_check_branch
        %260 = sbr.rel (%p258) target = $region36
      $region35: #{bottleneck_forward.4} parent=31 // pred_region
        %261 = vst [vmem:[#allocation3] sm:$0xff] 0.0
        %262 = vst [vmem:[#allocation3 + $0x8] sm:$0xff] 0.0
        %263 = vst [vmem:[#allocation3 + $0x10] sm:$0xff] 0.0
        %264 = vst [vmem:[#allocation3 + $0x18] sm:$0xff] 0.0
        %265 = vst [vmem:[#allocation3 + $0x20] sm:$0xff] 0.0
        %266 = vst [vmem:[#allocation3 + $0x28] sm:$0xff] 0.0
        %267 = vst [vmem:[#allocation3 + $0x30] sm:$0xff] 0.0
        %268 = vst [vmem:[#allocation3 + $0x38] sm:$0xff] 0.0
        %269 = vst [vmem:[#allocation3 + $0x40] sm:$0xff] 0.0
        %270 = vst [vmem:[#allocation3 + $0x48] sm:$0xff] 0.0
        %271 = vst [vmem:[#allocation3 + $0x50] sm:$0xff] 0.0
        %272 = vst [vmem:[#allocation3 + $0x58] sm:$0xff] 0.0
        %273 = vst [vmem:[#allocation3 + $0x60] sm:$0xff] 0.0
        %274 = vst [vmem:[#allocation3 + $0x68] sm:$0xff] 0.0
        %275 = vst [vmem:[#allocation3 + $0x70] sm:$0xff] 0.0
        %276 = vst [vmem:[#allocation3 + $0x78] sm:$0xff] 0.0
      $region36: #{bottleneck_forward.4} parent=31 // pred_fallthru
        _
      %s277 = sadd.s32 %s20, %s21
      %s278 = ssub.s32 %s277, 1
      %p279 = scmp.ge.s32.totalorder %s278, 0
      %p280 = scmp.le.s32.totalorder %s278, 7
      %p281 = pnand %p279, %p280
      %p282 = pneg %p281
      // Predicated region
      $region37: #{bottleneck_forward.4} parent=31 // pred_check
        _
      $region38: #{bottleneck_forward.4} parent=31 // pred_check_branch
        %284 = sbr.rel (%p281) target = $region40
      $region39: #{bottleneck_forward.4} parent=31 // pred_region
        %285 = vst [vmem:[#allocation2] sm:$0xf] 0
        %286 = vst [vmem:[#allocation2 + $0x4] sm:$0xf] 0
        %s287 = scalar_lea.vmem [#allocation2], 72
        %288 = vst [vmem:[%s287] sm:$0xf] 0
        %289 = vst [vmem:[%s287 + $0x4] sm:$0xf] 0
        %290 = vst [vmem:[#allocation2 + $0x4] sm:$0xf] 0
        %291 = vst [vmem:[#allocation2 + $0xc] sm:$0xf] 0
        %292 = vst [vmem:[#allocation2 + $0x14] sm:$0xf] 0
        %293 = vst [vmem:[#allocation2 + $0x1c] sm:$0xf] 0
        %294 = vst [vmem:[#allocation2 + $0x24] sm:$0xf] 0
        %295 = vst [vmem:[#allocation2 + $0x2c] sm:$0xf] 0
        %296 = vst [vmem:[#allocation2 + $0x34] sm:$0xf] 0
        %297 = vst [vmem:[#allocation2 + $0x3c] sm:$0xf] 0
        %298 = vst [vmem:[#allocation2 + $0x44] sm:$0xf] 0
        %299 = vst [vmem:[#allocation2 + $0x4c] sm:$0xf] 0
        %v300 = vld [vmem:[%s240] sm:$0xf]
        %v301 = vld [vmem:[%s240 + $0x4] sm:$0xf]
        %v302 = vld [vmem:[%s240 + $0x8] sm:$0xf]
        %v303 = vld [vmem:[%s240 + $0xc] sm:$0xf]
        %v304 = vld [vmem:[%s240 + $0x10] sm:$0xf]
        %v305 = vld [vmem:[%s240 + $0x14] sm:$0xf]
        %v306 = vld [vmem:[%s240 + $0x18] sm:$0xf]
        %v307 = vld [vmem:[%s240 + $0x1c] sm:$0xf]
        %s308 = scalar_lea.vmem [#allocation2], 8
        %309 = vst [vmem:[%s308] sm:$0xf] %v300
        %310 = vst [vmem:[%s308 + $0x8] sm:$0xf] %v301
        %311 = vst [vmem:[%s308 + $0x10] sm:$0xf] %v302
        %312 = vst [vmem:[%s308 + $0x18] sm:$0xf] %v303
        %313 = vst [vmem:[%s308 + $0x20] sm:$0xf] %v304
        %314 = vst [vmem:[%s308 + $0x28] sm:$0xf] %v305
        %315 = vst [vmem:[%s308 + $0x30] sm:$0xf] %v306
        %316 = vst [vmem:[%s308 + $0x38] sm:$0xf] %v307
        %v317 = vld [vmem:[#allocation2] sm:$0xf]
        %v318 = vld [vmem:[#allocation2 + $0x4] sm:$0xf]
        %v319 = vld [vmem:[#allocation2 + $0x8] sm:$0xf]
        %v320 = vld [vmem:[#allocation2 + $0xc] sm:$0xf]
        %v321 = vld [vmem:[#allocation2 + $0x10] sm:$0xf]
        %v322 = vld [vmem:[#allocation2 + $0x14] sm:$0xf]
        %v323 = vld [vmem:[#allocation2 + $0x18] sm:$0xf]
        %v324 = vld [vmem:[#allocation2 + $0x1c] sm:$0xf]
        %v325 = vld [vmem:[#allocation2 + $0x20] sm:$0xf]
        %v326 = vld [vmem:[#allocation2 + $0x24] sm:$0xf]
        %v327 = vld [vmem:[#allocation2 + $0x28] sm:$0xf]
        %v328 = vld [vmem:[#allocation2 + $0x2c] sm:$0xf]
        %v329 = vld [vmem:[#allocation2 + $0x30] sm:$0xf]
        %v330 = vld [vmem:[#allocation2 + $0x34] sm:$0xf]
        %v331 = vld [vmem:[#allocation2 + $0x38] sm:$0xf]
        %v332 = vld [vmem:[#allocation2 + $0x3c] sm:$0xf]
        %v333 = vld [vmem:[%s308] sm:$0xf]
        %v334 = vld [vmem:[%s308 + $0x4] sm:$0xf]
        %v335 = vld [vmem:[%s308 + $0x8] sm:$0xf]
        %v336 = vld [vmem:[%s308 + $0xc] sm:$0xf]
        %v337 = vld [vmem:[%s308 + $0x10] sm:$0xf]
        %v338 = vld [vmem:[%s308 + $0x14] sm:$0xf]
        %v339 = vld [vmem:[%s308 + $0x18] sm:$0xf]
        %v340 = vld [vmem:[%s308 + $0x1c] sm:$0xf]
        %v341 = vld [vmem:[%s308 + $0x20] sm:$0xf]
        %v342 = vld [vmem:[%s308 + $0x24] sm:$0xf]
        %v343 = vld [vmem:[%s308 + $0x28] sm:$0xf]
        %v344 = vld [vmem:[%s308 + $0x2c] sm:$0xf]
        %v345 = vld [vmem:[%s308 + $0x30] sm:$0xf]
        %v346 = vld [vmem:[%s308 + $0x34] sm:$0xf]
        %v347 = vld [vmem:[%s308 + $0x38] sm:$0xf]
        %v348 = vld [vmem:[%s308 + $0x3c] sm:$0xf]
        %s349 = scalar_lea.vmem [#allocation2], 16
        %v350 = vld [vmem:[%s349] sm:$0xf]
        %v351 = vld [vmem:[%s349 + $0x4] sm:$0xf]
        %v352 = vld [vmem:[%s349 + $0x8] sm:$0xf]
        %v353 = vld [vmem:[%s349 + $0xc] sm:$0xf]
        %v354 = vld [vmem:[%s349 + $0x10] sm:$0xf]
        %v355 = vld [vmem:[%s349 + $0x14] sm:$0xf]
        %v356 = vld [vmem:[%s349 + $0x18] sm:$0xf]
        %v357 = vld [vmem:[%s349 + $0x1c] sm:$0xf]
        %v358 = vld [vmem:[%s349 + $0x20] sm:$0xf]
        %v359 = vld [vmem:[%s349 + $0x24] sm:$0xf]
        %v360 = vld [vmem:[%s349 + $0x28] sm:$0xf]
        %v361 = vld [vmem:[%s349 + $0x2c] sm:$0xf]
        %v362 = vld [vmem:[%s349 + $0x30] sm:$0xf]
        %v363 = vld [vmem:[%s349 + $0x34] sm:$0xf]
        %v364 = vld [vmem:[%s349 + $0x38] sm:$0xf]
        %v365 = vld [vmem:[%s349 + $0x3c] sm:$0xf]
        %v382 = vunpack.c.l.b16 %v317
        %v383 = vunpack.c.l.b16 %v318
        %v384 = vunpack.c.l.b16 %v319
        %v385 = vunpack.c.l.b16 %v320
        %v386 = vunpack.c.l.b16 %v321
        %v387 = vunpack.c.l.b16 %v322
        %v388 = vunpack.c.l.b16 %v323
        %v389 = vunpack.c.l.b16 %v324
        %v390 = vunpack.c.l.b16 %v325
        %v391 = vunpack.c.l.b16 %v326
        %v392 = vunpack.c.l.b16 %v327
        %v393 = vunpack.c.l.b16 %v328
        %v394 = vunpack.c.l.b16 %v329
        %v395 = vunpack.c.l.b16 %v330
        %v396 = vunpack.c.l.b16 %v331
        %v397 = vunpack.c.l.b16 %v332
        %v398 = vpack.c.b16 %v383, %v382
        %v399 = vpack.c.b16 %v385, %v384
        %v400 = vpack.c.b16 %v387, %v386
        %v401 = vpack.c.b16 %v389, %v388
        %v402 = vpack.c.b16 %v391, %v390
        %v403 = vpack.c.b16 %v393, %v392
        %v404 = vpack.c.b16 %v395, %v394
        %v405 = vpack.c.b16 %v397, %v396
        %v430 = vunpack.c.l.b16 %v333
        %v431 = vunpack.c.l.b16 %v334
        %v432 = vunpack.c.l.b16 %v335
        %v433 = vunpack.c.l.b16 %v336
        %v434 = vunpack.c.l.b16 %v337
        %v435 = vunpack.c.l.b16 %v338
        %v436 = vunpack.c.l.b16 %v339
        %v437 = vunpack.c.l.b16 %v340
        %v438 = vunpack.c.l.b16 %v341
        %v439 = vunpack.c.l.b16 %v342
        %v440 = vunpack.c.l.b16 %v343
        %v441 = vunpack.c.l.b16 %v344
        %v442 = vunpack.c.l.b16 %v345
        %v443 = vunpack.c.l.b16 %v346
        %v444 = vunpack.c.l.b16 %v347
        %v445 = vunpack.c.l.b16 %v348
        %v446 = vpack.c.b16 %v431, %v430
        %v447 = vpack.c.b16 %v433, %v432
        %v448 = vpack.c.b16 %v435, %v434
        %v449 = vpack.c.b16 %v437, %v436
        %v450 = vpack.c.b16 %v439, %v438
        %v451 = vpack.c.b16 %v441, %v440
        %v452 = vpack.c.b16 %v443, %v442
        %v453 = vpack.c.b16 %v445, %v444
        %v478 = vunpack.c.l.b16 %v350
        %v479 = vunpack.c.l.b16 %v351
        %v480 = vunpack.c.l.b16 %v352
        %v481 = vunpack.c.l.b16 %v353
        %v482 = vunpack.c.l.b16 %v354
        %v483 = vunpack.c.l.b16 %v355
        %v484 = vunpack.c.l.b16 %v356
        %v485 = vunpack.c.l.b16 %v357
        %v486 = vunpack.c.l.b16 %v358
        %v487 = vunpack.c.l.b16 %v359
        %v488 = vunpack.c.l.b16 %v360
        %v489 = vunpack.c.l.b16 %v361
        %v490 = vunpack.c.l.b16 %v362
        %v491 = vunpack.c.l.b16 %v363
        %v492 = vunpack.c.l.b16 %v364
        %v493 = vunpack.c.l.b16 %v365
        %v494 = vpack.c.b16 %v479, %v478
        %v495 = vpack.c.b16 %v481, %v480
        %v496 = vpack.c.b16 %v483, %v482
        %v497 = vpack.c.b16 %v485, %v484
        %v498 = vpack.c.b16 %v487, %v486
        %v499 = vpack.c.b16 %v489, %v488
        %v500 = vpack.c.b16 %v491, %v490
        %v501 = vpack.c.b16 %v493, %v492
        %s510 = smul.u32 %s21, 3
        %s511 = smul.u32 %s510, 48
        %s512 = smul.addr %s511, 4
        %s513 = scalar_lea.vmem %s1, %s512
        %v514 = vld [vmem:[%s513] sm:$0xf]
        %v515 = vld [vmem:[%s513 + $0x4] sm:$0xf]
        %v516 = vld [vmem:[%s513 + $0x8] sm:$0xf]
        %v517 = vld [vmem:[%s513 + $0xc] sm:$0xf]
        %v518 = vld [vmem:[%s513 + $0x10] sm:$0xf]
        %v519 = vld [vmem:[%s513 + $0x14] sm:$0xf]
        %v520 = vld [vmem:[%s513 + $0x18] sm:$0xf]
        %v521 = vld [vmem:[%s513 + $0x1c] sm:$0xf]
        %v522 = vld [vmem:[%s513 + $0x20] sm:$0xf]
        %v523 = vld [vmem:[%s513 + $0x24] sm:$0xf]
        %v524 = vld [vmem:[%s513 + $0x28] sm:$0xf]
        %v525 = vld [vmem:[%s513 + $0x2c] sm:$0xf]
        %v526 = vld [vmem:[%s513 + $0x30] sm:$0xf]
        %v527 = vld [vmem:[%s513 + $0x34] sm:$0xf]
        %v528 = vld [vmem:[%s513 + $0x38] sm:$0xf]
        %v529 = vld [vmem:[%s513 + $0x3c] sm:$0xf]
        %v530 = vld [vmem:[%s513 + $0x40] sm:$0xf]
        %v531 = vld [vmem:[%s513 + $0x44] sm:$0xf]
        %v532 = vld [vmem:[%s513 + $0x48] sm:$0xf]
        %v533 = vld [vmem:[%s513 + $0x4c] sm:$0xf]
        %v534 = vld [vmem:[%s513 + $0x50] sm:$0xf]
        %v535 = vld [vmem:[%s513 + $0x54] sm:$0xf]
        %v536 = vld [vmem:[%s513 + $0x58] sm:$0xf]
        %v537 = vld [vmem:[%s513 + $0x5c] sm:$0xf]
        %v538 = vld [vmem:[%s513 + $0x60] sm:$0xf]
        %v539 = vld [vmem:[%s513 + $0x64] sm:$0xf]
        %v540 = vld [vmem:[%s513 + $0x68] sm:$0xf]
        %v541 = vld [vmem:[%s513 + $0x6c] sm:$0xf]
        %v542 = vld [vmem:[%s513 + $0x70] sm:$0xf]
        %v543 = vld [vmem:[%s513 + $0x74] sm:$0xf]
        %v544 = vld [vmem:[%s513 + $0x78] sm:$0xf]
        %v545 = vld [vmem:[%s513 + $0x7c] sm:$0xf]
        %v546 = vld [vmem:[%s513 + $0x80] sm:$0xf]
        %v547 = vld [vmem:[%s513 + $0x84] sm:$0xf]
        %v548 = vld [vmem:[%s513 + $0x88] sm:$0xf]
        %v549 = vld [vmem:[%s513 + $0x8c] sm:$0xf]
        %v550 = vld [vmem:[%s513 + $0x90] sm:$0xf]
        %v551 = vld [vmem:[%s513 + $0x94] sm:$0xf]
        %v552 = vld [vmem:[%s513 + $0x98] sm:$0xf]
        %v553 = vld [vmem:[%s513 + $0x9c] sm:$0xf]
        %v554 = vld [vmem:[%s513 + $0xa0] sm:$0xf]
        %v555 = vld [vmem:[%s513 + $0xa4] sm:$0xf]
        %v556 = vld [vmem:[%s513 + $0xa8] sm:$0xf]
        %v557 = vld [vmem:[%s513 + $0xac] sm:$0xf]
        %v558 = vld [vmem:[%s513 + $0xb0] sm:$0xf]
        %v559 = vld [vmem:[%s513 + $0xb4] sm:$0xf]
        %v560 = vld [vmem:[%s513 + $0xb8] sm:$0xf]
        %v561 = vld [vmem:[%s513 + $0xbc] sm:$0xf]
        %v610 = vunpack.c.l.b16 %v514
        %v611 = vunpack.c.l.b16 %v515
        %v612 = vunpack.c.l.b16 %v516
        %v613 = vunpack.c.l.b16 %v517
        %v614 = vunpack.c.l.b16 %v518
        %v615 = vunpack.c.l.b16 %v519
        %v616 = vunpack.c.l.b16 %v520
        %v617 = vunpack.c.l.b16 %v521
        %v618 = vunpack.c.l.b16 %v522
        %v619 = vunpack.c.l.b16 %v523
        %v620 = vunpack.c.l.b16 %v524
        %v621 = vunpack.c.l.b16 %v525
        %v622 = vunpack.c.l.b16 %v526
        %v623 = vunpack.c.l.b16 %v527
        %v624 = vunpack.c.l.b16 %v528
        %v625 = vunpack.c.l.b16 %v529
        %v626 = vunpack.c.l.b16 %v530
        %v627 = vunpack.c.l.b16 %v531
        %v628 = vunpack.c.l.b16 %v532
        %v629 = vunpack.c.l.b16 %v533
        %v630 = vunpack.c.l.b16 %v534
        %v631 = vunpack.c.l.b16 %v535
        %v632 = vunpack.c.l.b16 %v536
        %v633 = vunpack.c.l.b16 %v537
        %v634 = vunpack.c.l.b16 %v538
        %v635 = vunpack.c.l.b16 %v539
        %v636 = vunpack.c.l.b16 %v540
        %v637 = vunpack.c.l.b16 %v541
        %v638 = vunpack.c.l.b16 %v542
        %v639 = vunpack.c.l.b16 %v543
        %v640 = vunpack.c.l.b16 %v544
        %v641 = vunpack.c.l.b16 %v545
        %v642 = vunpack.c.l.b16 %v546
        %v643 = vunpack.c.l.b16 %v547
        %v644 = vunpack.c.l.b16 %v548
        %v645 = vunpack.c.l.b16 %v549
        %v646 = vunpack.c.l.b16 %v550
        %v647 = vunpack.c.l.b16 %v551
        %v648 = vunpack.c.l.b16 %v552
        %v649 = vunpack.c.l.b16 %v553
        %v650 = vunpack.c.l.b16 %v554
        %v651 = vunpack.c.l.b16 %v555
        %v652 = vunpack.c.l.b16 %v556
        %v653 = vunpack.c.l.b16 %v557
        %v654 = vunpack.c.l.b16 %v558
        %v655 = vunpack.c.l.b16 %v559
        %v656 = vunpack.c.l.b16 %v560
        %v657 = vunpack.c.l.b16 %v561
        %v658 = vpack.c.b16 %v611, %v610
        %v659 = vpack.c.b16 %v613, %v612
        %v660 = vpack.c.b16 %v615, %v614
        %v661 = vpack.c.b16 %v617, %v616
        %v662 = vpack.c.b16 %v619, %v618
        %v663 = vpack.c.b16 %v621, %v620
        %v664 = vpack.c.b16 %v623, %v622
        %v665 = vpack.c.b16 %v625, %v624
        %v666 = vpack.c.b16 %v627, %v626
        %v667 = vpack.c.b16 %v629, %v628
        %v668 = vpack.c.b16 %v631, %v630
        %v669 = vpack.c.b16 %v633, %v632
        %v670 = vpack.c.b16 %v635, %v634
        %v671 = vpack.c.b16 %v637, %v636
        %v672 = vpack.c.b16 %v639, %v638
        %v673 = vpack.c.b16 %v641, %v640
        %v674 = vpack.c.b16 %v643, %v642
        %v675 = vpack.c.b16 %v645, %v644
        %v676 = vpack.c.b16 %v647, %v646
        %v677 = vpack.c.b16 %v649, %v648
        %v678 = vpack.c.b16 %v651, %v650
        %v679 = vpack.c.b16 %v653, %v652
        %v680 = vpack.c.b16 %v655, %v654
        %v681 = vpack.c.b16 %v657, %v656
        %706 = vmatpush.bf16.msra.mxu0 %v665
        %707 = vmatpush.bf16.msra.mxu0 %v664
        %708 = vmatpush.bf16.msra.mxu0 %v663
        %709 = vmatpush.bf16.msra.mxu0 %v662
        %710 = vmatpush.bf16.msra.mxu0 %v661
        %711 = vmatpush.bf16.msra.mxu0 %v660
        %712 = vmatpush.bf16.msra.mxu0 %v659
        %713 = vmatpush.bf16.msra.mxu0 %v658
        %714 = vmatmul.bf16.gmra.mxu0 %v398
        %v715 = vpop.f32.mrf.mxu0
        %v716 = vadd.f32 0.0, %v715
        %v717 = vpop.f32.mrf.mxu0
        %v718 = vadd.f32 0.0, %v717
        %719 = vmatmul.bf16.gmra.mxu0 %v399
        %v720 = vpop.f32.mrf.mxu0
        %v721 = vadd.f32 0.0, %v720
        %v722 = vpop.f32.mrf.mxu0
        %v723 = vadd.f32 0.0, %v722
        %724 = vmatmul.bf16.gmra.mxu0 %v400
        %v725 = vpop.f32.mrf.mxu0
        %v726 = vadd.f32 0.0, %v725
        %v727 = vpop.f32.mrf.mxu0
        %v728 = vadd.f32 0.0, %v727
        %729 = vmatmul.bf16.gmra.mxu0 %v401
        %v730 = vpop.f32.mrf.mxu0
        %v731 = vadd.f32 0.0, %v730
        %v732 = vpop.f32.mrf.mxu0
        %v733 = vadd.f32 0.0, %v732
        %734 = vmatmul.bf16.gmra.mxu0 %v402
        %v735 = vpop.f32.mrf.mxu0
        %v736 = vadd.f32 0.0, %v735
        %v737 = vpop.f32.mrf.mxu0
        %v738 = vadd.f32 0.0, %v737
        %739 = vmatmul.bf16.gmra.mxu0 %v403
        %v740 = vpop.f32.mrf.mxu0
        %v741 = vadd.f32 0.0, %v740
        %v742 = vpop.f32.mrf.mxu0
        %v743 = vadd.f32 0.0, %v742
        %744 = vmatmul.bf16.gmra.mxu0 %v404
        %v745 = vpop.f32.mrf.mxu0
        %v746 = vadd.f32 0.0, %v745
        %v747 = vpop.f32.mrf.mxu0
        %v748 = vadd.f32 0.0, %v747
        %749 = vmatmul.bf16.gmra.mxu0 %v405
        %v750 = vpop.f32.mrf.mxu0
        %v751 = vadd.f32 0.0, %v750
        %v752 = vpop.f32.mrf.mxu0
        %v753 = vadd.f32 0.0, %v752
        %754 = vdwg.mxu0
        %755 = vmatpush.bf16.msra.mxu0 %v673
        %756 = vmatpush.bf16.msra.mxu0 %v672
        %757 = vmatpush.bf16.msra.mxu0 %v671
        %758 = vmatpush.bf16.msra.mxu0 %v670
        %759 = vmatpush.bf16.msra.mxu0 %v669
        %760 = vmatpush.bf16.msra.mxu0 %v668
        %761 = vmatpush.bf16.msra.mxu0 %v667
        %762 = vmatpush.bf16.msra.mxu0 %v666
        %763 = vmatmul.bf16.gmra.mxu0 %v446
        %v764 = vpop.f32.mrf.mxu0
        %v765 = vadd.f32 %v716, %v764
        %v766 = vpop.f32.mrf.mxu0
        %v767 = vadd.f32 %v718, %v766
        %768 = vmatmul.bf16.gmra.mxu0 %v447
        %v769 = vpop.f32.mrf.mxu0
        %v770 = vadd.f32 %v721, %v769
        %v771 = vpop.f32.mrf.mxu0
        %v772 = vadd.f32 %v723, %v771
        %773 = vmatmul.bf16.gmra.mxu0 %v448
        %v774 = vpop.f32.mrf.mxu0
        %v775 = vadd.f32 %v726, %v774
        %v776 = vpop.f32.mrf.mxu0
        %v777 = vadd.f32 %v728, %v776
        %778 = vmatmul.bf16.gmra.mxu0 %v449
        %v779 = vpop.f32.mrf.mxu0
        %v780 = vadd.f32 %v731, %v779
        %v781 = vpop.f32.mrf.mxu0
        %v782 = vadd.f32 %v733, %v781
        %783 = vmatmul.bf16.gmra.mxu0 %v450
        %v784 = vpop.f32.mrf.mxu0
        %v785 = vadd.f32 %v736, %v784
        %v786 = vpop.f32.mrf.mxu0
        %v787 = vadd.f32 %v738, %v786
        %788 = vmatmul.bf16.gmra.mxu0 %v451
        %v789 = vpop.f32.mrf.mxu0
        %v790 = vadd.f32 %v741, %v789
        %v791 = vpop.f32.mrf.mxu0
        %v792 = vadd.f32 %v743, %v791
        %793 = vmatmul.bf16.gmra.mxu0 %v452
        %v794 = vpop.f32.mrf.mxu0
        %v795 = vadd.f32 %v746, %v794
        %v796 = vpop.f32.mrf.mxu0
        %v797 = vadd.f32 %v748, %v796
        %798 = vmatmul.bf16.gmra.mxu0 %v453
        %v799 = vpop.f32.mrf.mxu0
        %v800 = vadd.f32 %v751, %v799
        %v801 = vpop.f32.mrf.mxu0
        %v802 = vadd.f32 %v753, %v801
        %803 = vdwg.mxu0
        %804 = vmatpush.bf16.msra.mxu0 %v681
        %805 = vmatpush.bf16.msra.mxu0 %v680
        %806 = vmatpush.bf16.msra.mxu0 %v679
        %807 = vmatpush.bf16.msra.mxu0 %v678
        %808 = vmatpush.bf16.msra.mxu0 %v677
        %809 = vmatpush.bf16.msra.mxu0 %v676
        %810 = vmatpush.bf16.msra.mxu0 %v675
        %811 = vmatpush.bf16.msra.mxu0 %v674
        %812 = vmatmul.bf16.gmra.mxu0 %v494
        %v813 = vpop.f32.mrf.mxu0
        %v814 = vadd.f32 %v765, %v813
        %v815 = vpop.f32.mrf.mxu0
        %v816 = vadd.f32 %v767, %v815
        %817 = vmatmul.bf16.gmra.mxu0 %v495
        %v818 = vpop.f32.mrf.mxu0
        %v819 = vadd.f32 %v770, %v818
        %v820 = vpop.f32.mrf.mxu0
        %v821 = vadd.f32 %v772, %v820
        %822 = vmatmul.bf16.gmra.mxu0 %v496
        %v823 = vpop.f32.mrf.mxu0
        %v824 = vadd.f32 %v775, %v823
        %v825 = vpop.f32.mrf.mxu0
        %v826 = vadd.f32 %v777, %v825
        %827 = vmatmul.bf16.gmra.mxu0 %v497
        %v828 = vpop.f32.mrf.mxu0
        %v829 = vadd.f32 %v780, %v828
        %v830 = vpop.f32.mrf.mxu0
        %v831 = vadd.f32 %v782, %v830
        %832 = vmatmul.bf16.gmra.mxu0 %v498
        %v833 = vpop.f32.mrf.mxu0
        %v834 = vadd.f32 %v785, %v833
        %v835 = vpop.f32.mrf.mxu0
        %v836 = vadd.f32 %v787, %v835
        %837 = vmatmul.bf16.gmra.mxu0 %v499
        %v838 = vpop.f32.mrf.mxu0
        %v839 = vadd.f32 %v790, %v838
        %v840 = vpop.f32.mrf.mxu0
        %v841 = vadd.f32 %v792, %v840
        %842 = vmatmul.bf16.gmra.mxu0 %v500
        %v843 = vpop.f32.mrf.mxu0
        %v844 = vadd.f32 %v795, %v843
        %v845 = vpop.f32.mrf.mxu0
        %v846 = vadd.f32 %v797, %v845
        %847 = vmatmul.bf16.gmra.mxu0 %v501
        %v848 = vpop.f32.mrf.mxu0
        %v849 = vadd.f32 %v800, %v848
        %v850 = vpop.f32.mrf.mxu0
        %v851 = vadd.f32 %v802, %v850
        %852 = vdwg.mxu0
        %v853 = vrot.slane %v814, 7
        %v854 = vrot.slane %v816, 7
        %v855 = vrot.slane %v819, 7
        %v856 = vrot.slane %v821, 7
        %v857 = vrot.slane %v824, 7
        %v858 = vrot.slane %v826, 7
        %v859 = vrot.slane %v829, 7
        %v860 = vrot.slane %v831, 7
        %v861 = vrot.slane %v834, 7
        %v862 = vrot.slane %v836, 7
        %v863 = vrot.slane %v839, 7
        %v864 = vrot.slane %v841, 7
        %v865 = vrot.slane %v844, 7
        %v866 = vrot.slane %v846, 7
        %v867 = vrot.slane %v849, 7
        %v868 = vrot.slane %v851, 7
        %v869 = vlaneseq
        %v870 = vshrl.u32 %v869, 7
        %vm871 = vcmp.lt.s32.totalorder %v870, 1
        %v872 = vsel %vm871, %v867, %v868
        %v873 = vsel %vm871, %v866, %v867
        %v874 = vsel %vm871, %v865, %v866
        %v875 = vsel %vm871, %v864, %v865
        %v876 = vsel %vm871, %v863, %v864
        %v877 = vsel %vm871, %v862, %v863
        %v878 = vsel %vm871, %v861, %v862
        %v879 = vsel %vm871, %v860, %v861
        %v880 = vsel %vm871, %v859, %v860
        %v881 = vsel %vm871, %v858, %v859
        %v882 = vsel %vm871, %v857, %v858
        %v883 = vsel %vm871, %v856, %v857
        %v884 = vsel %vm871, %v855, %v856
        %v885 = vsel %vm871, %v854, %v855
        %v886 = vsel %vm871, %v853, %v854
        %v887 = vsel %vm871, %v868, %v853
        %s888 = sadd.s32 %s510, 1
        %s889 = smul.u32 %s888, 48
        %s890 = smul.addr %s889, 4
        %s891 = scalar_lea.vmem %s1, %s890
        %v892 = vld [vmem:[%s891] sm:$0xf]
        %v893 = vld [vmem:[%s891 + $0x4] sm:$0xf]
        %v894 = vld [vmem:[%s891 + $0x8] sm:$0xf]
        %v895 = vld [vmem:[%s891 + $0xc] sm:$0xf]
        %v896 = vld [vmem:[%s891 + $0x10] sm:$0xf]
        %v897 = vld [vmem:[%s891 + $0x14] sm:$0xf]
        %v898 = vld [vmem:[%s891 + $0x18] sm:$0xf]
        %v899 = vld [vmem:[%s891 + $0x1c] sm:$0xf]
        %v900 = vld [vmem:[%s891 + $0x20] sm:$0xf]
        %v901 = vld [vmem:[%s891 + $0x24] sm:$0xf]
        %v902 = vld [vmem:[%s891 + $0x28] sm:$0xf]
        %v903 = vld [vmem:[%s891 + $0x2c] sm:$0xf]
        %v904 = vld [vmem:[%s891 + $0x30] sm:$0xf]
        %v905 = vld [vmem:[%s891 + $0x34] sm:$0xf]
        %v906 = vld [vmem:[%s891 + $0x38] sm:$0xf]
        %v907 = vld [vmem:[%s891 + $0x3c] sm:$0xf]
        %v908 = vld [vmem:[%s891 + $0x40] sm:$0xf]
        %v909 = vld [vmem:[%s891 + $0x44] sm:$0xf]
        %v910 = vld [vmem:[%s891 + $0x48] sm:$0xf]
        %v911 = vld [vmem:[%s891 + $0x4c] sm:$0xf]
        %v912 = vld [vmem:[%s891 + $0x50] sm:$0xf]
        %v913 = vld [vmem:[%s891 + $0x54] sm:$0xf]
        %v914 = vld [vmem:[%s891 + $0x58] sm:$0xf]
        %v915 = vld [vmem:[%s891 + $0x5c] sm:$0xf]
        %v916 = vld [vmem:[%s891 + $0x60] sm:$0xf]
        %v917 = vld [vmem:[%s891 + $0x64] sm:$0xf]
        %v918 = vld [vmem:[%s891 + $0x68] sm:$0xf]
        %v919 = vld [vmem:[%s891 + $0x6c] sm:$0xf]
        %v920 = vld [vmem:[%s891 + $0x70] sm:$0xf]
        %v921 = vld [vmem:[%s891 + $0x74] sm:$0xf]
        %v922 = vld [vmem:[%s891 + $0x78] sm:$0xf]
        %v923 = vld [vmem:[%s891 + $0x7c] sm:$0xf]
        %v924 = vld [vmem:[%s891 + $0x80] sm:$0xf]
        %v925 = vld [vmem:[%s891 + $0x84] sm:$0xf]
        %v926 = vld [vmem:[%s891 + $0x88] sm:$0xf]
        %v927 = vld [vmem:[%s891 + $0x8c] sm:$0xf]
        %v928 = vld [vmem:[%s891 + $0x90] sm:$0xf]
        %v929 = vld [vmem:[%s891 + $0x94] sm:$0xf]
        %v930 = vld [vmem:[%s891 + $0x98] sm:$0xf]
        %v931 = vld [vmem:[%s891 + $0x9c] sm:$0xf]
        %v932 = vld [vmem:[%s891 + $0xa0] sm:$0xf]
        %v933 = vld [vmem:[%s891 + $0xa4] sm:$0xf]
        %v934 = vld [vmem:[%s891 + $0xa8] sm:$0xf]
        %v935 = vld [vmem:[%s891 + $0xac] sm:$0xf]
        %v936 = vld [vmem:[%s891 + $0xb0] sm:$0xf]
        %v937 = vld [vmem:[%s891 + $0xb4] sm:$0xf]
        %v938 = vld [vmem:[%s891 + $0xb8] sm:$0xf]
        %v939 = vld [vmem:[%s891 + $0xbc] sm:$0xf]
        %v988 = vunpack.c.l.b16 %v892
        %v989 = vunpack.c.l.b16 %v893
        %v990 = vunpack.c.l.b16 %v894
        %v991 = vunpack.c.l.b16 %v895
        %v992 = vunpack.c.l.b16 %v896
        %v993 = vunpack.c.l.b16 %v897
        %v994 = vunpack.c.l.b16 %v898
        %v995 = vunpack.c.l.b16 %v899
        %v996 = vunpack.c.l.b16 %v900
        %v997 = vunpack.c.l.b16 %v901
        %v998 = vunpack.c.l.b16 %v902
        %v999 = vunpack.c.l.b16 %v903
        %v1000 = vunpack.c.l.b16 %v904
        %v1001 = vunpack.c.l.b16 %v905
        %v1002 = vunpack.c.l.b16 %v906
        %v1003 = vunpack.c.l.b16 %v907
        %v1004 = vunpack.c.l.b16 %v908
        %v1005 = vunpack.c.l.b16 %v909
        %v1006 = vunpack.c.l.b16 %v910
        %v1007 = vunpack.c.l.b16 %v911
        %v1008 = vunpack.c.l.b16 %v912
        %v1009 = vunpack.c.l.b16 %v913
        %v1010 = vunpack.c.l.b16 %v914
        %v1011 = vunpack.c.l.b16 %v915
        %v1012 = vunpack.c.l.b16 %v916
        %v1013 = vunpack.c.l.b16 %v917
        %v1014 = vunpack.c.l.b16 %v918
        %v1015 = vunpack.c.l.b16 %v919
        %v1016 = vunpack.c.l.b16 %v920
        %v1017 = vunpack.c.l.b16 %v921
        %v1018 = vunpack.c.l.b16 %v922
        %v1019 = vunpack.c.l.b16 %v923
        %v1020 = vunpack.c.l.b16 %v924
        %v1021 = vunpack.c.l.b16 %v925
        %v1022 = vunpack.c.l.b16 %v926
        %v1023 = vunpack.c.l.b16 %v927
        %v1024 = vunpack.c.l.b16 %v928
        %v1025 = vunpack.c.l.b16 %v929
        %v1026 = vunpack.c.l.b16 %v930
        %v1027 = vunpack.c.l.b16 %v931
        %v1028 = vunpack.c.l.b16 %v932
        %v1029 = vunpack.c.l.b16 %v933
        %v1030 = vunpack.c.l.b16 %v934
        %v1031 = vunpack.c.l.b16 %v935
        %v1032 = vunpack.c.l.b16 %v936
        %v1033 = vunpack.c.l.b16 %v937
        %v1034 = vunpack.c.l.b16 %v938
        %v1035 = vunpack.c.l.b16 %v939
        %v1036 = vpack.c.b16 %v989, %v988
        %v1037 = vpack.c.b16 %v991, %v990
        %v1038 = vpack.c.b16 %v993, %v992
        %v1039 = vpack.c.b16 %v995, %v994
        %v1040 = vpack.c.b16 %v997, %v996
        %v1041 = vpack.c.b16 %v999, %v998
        %v1042 = vpack.c.b16 %v1001, %v1000
        %v1043 = vpack.c.b16 %v1003, %v1002
        %v1044 = vpack.c.b16 %v1005, %v1004
        %v1045 = vpack.c.b16 %v1007, %v1006
        %v1046 = vpack.c.b16 %v1009, %v1008
        %v1047 = vpack.c.b16 %v1011, %v1010
        %v1048 = vpack.c.b16 %v1013, %v1012
        %v1049 = vpack.c.b16 %v1015, %v1014
        %v1050 = vpack.c.b16 %v1017, %v1016
        %v1051 = vpack.c.b16 %v1019, %v1018
        %v1052 = vpack.c.b16 %v1021, %v1020
        %v1053 = vpack.c.b16 %v1023, %v1022
        %v1054 = vpack.c.b16 %v1025, %v1024
        %v1055 = vpack.c.b16 %v1027, %v1026
        %v1056 = vpack.c.b16 %v1029, %v1028
        %v1057 = vpack.c.b16 %v1031, %v1030
        %v1058 = vpack.c.b16 %v1033, %v1032
        %v1059 = vpack.c.b16 %v1035, %v1034
        %1084 = vmatpush.bf16.msra.mxu0 %v1043
        %1085 = vmatpush.bf16.msra.mxu0 %v1042
        %1086 = vmatpush.bf16.msra.mxu0 %v1041
        %1087 = vmatpush.bf16.msra.mxu0 %v1040
        %1088 = vmatpush.bf16.msra.mxu0 %v1039
        %1089 = vmatpush.bf16.msra.mxu0 %v1038
        %1090 = vmatpush.bf16.msra.mxu0 %v1037
        %1091 = vmatpush.bf16.msra.mxu0 %v1036
        %1092 = vmatmul.bf16.gmra.mxu0 %v398
        %v1093 = vpop.f32.mrf.mxu0
        %v1094 = vadd.f32 0.0, %v1093
        %v1095 = vpop.f32.mrf.mxu0
        %v1096 = vadd.f32 0.0, %v1095
        %1097 = vmatmul.bf16.gmra.mxu0 %v399
        %v1098 = vpop.f32.mrf.mxu0
        %v1099 = vadd.f32 0.0, %v1098
        %v1100 = vpop.f32.mrf.mxu0
        %v1101 = vadd.f32 0.0, %v1100
        %1102 = vmatmul.bf16.gmra.mxu0 %v400
        %v1103 = vpop.f32.mrf.mxu0
        %v1104 = vadd.f32 0.0, %v1103
        %v1105 = vpop.f32.mrf.mxu0
        %v1106 = vadd.f32 0.0, %v1105
        %1107 = vmatmul.bf16.gmra.mxu0 %v401
        %v1108 = vpop.f32.mrf.mxu0
        %v1109 = vadd.f32 0.0, %v1108
        %v1110 = vpop.f32.mrf.mxu0
        %v1111 = vadd.f32 0.0, %v1110
        %1112 = vmatmul.bf16.gmra.mxu0 %v402
        %v1113 = vpop.f32.mrf.mxu0
        %v1114 = vadd.f32 0.0, %v1113
        %v1115 = vpop.f32.mrf.mxu0
        %v1116 = vadd.f32 0.0, %v1115
        %1117 = vmatmul.bf16.gmra.mxu0 %v403
        %v1118 = vpop.f32.mrf.mxu0
        %v1119 = vadd.f32 0.0, %v1118
        %v1120 = vpop.f32.mrf.mxu0
        %v1121 = vadd.f32 0.0, %v1120
        %1122 = vmatmul.bf16.gmra.mxu0 %v404
        %v1123 = vpop.f32.mrf.mxu0
        %v1124 = vadd.f32 0.0, %v1123
        %v1125 = vpop.f32.mrf.mxu0
        %v1126 = vadd.f32 0.0, %v1125
        %1127 = vmatmul.bf16.gmra.mxu0 %v405
        %v1128 = vpop.f32.mrf.mxu0
        %v1129 = vadd.f32 0.0, %v1128
        %v1130 = vpop.f32.mrf.mxu0
        %v1131 = vadd.f32 0.0, %v1130
        %1132 = vdwg.mxu0
        %1133 = vmatpush.bf16.msra.mxu0 %v1051
        %1134 = vmatpush.bf16.msra.mxu0 %v1050
        %1135 = vmatpush.bf16.msra.mxu0 %v1049
        %1136 = vmatpush.bf16.msra.mxu0 %v1048
        %1137 = vmatpush.bf16.msra.mxu0 %v1047
        %1138 = vmatpush.bf16.msra.mxu0 %v1046
        %1139 = vmatpush.bf16.msra.mxu0 %v1045
        %1140 = vmatpush.bf16.msra.mxu0 %v1044
        %1141 = vmatmul.bf16.gmra.mxu0 %v446
        %v1142 = vpop.f32.mrf.mxu0
        %v1143 = vadd.f32 %v1094, %v1142
        %v1144 = vpop.f32.mrf.mxu0
        %v1145 = vadd.f32 %v1096, %v1144
        %1146 = vmatmul.bf16.gmra.mxu0 %v447
        %v1147 = vpop.f32.mrf.mxu0
        %v1148 = vadd.f32 %v1099, %v1147
        %v1149 = vpop.f32.mrf.mxu0
        %v1150 = vadd.f32 %v1101, %v1149
        %1151 = vmatmul.bf16.gmra.mxu0 %v448
        %v1152 = vpop.f32.mrf.mxu0
        %v1153 = vadd.f32 %v1104, %v1152
        %v1154 = vpop.f32.mrf.mxu0
        %v1155 = vadd.f32 %v1106, %v1154
        %1156 = vmatmul.bf16.gmra.mxu0 %v449
        %v1157 = vpop.f32.mrf.mxu0
        %v1158 = vadd.f32 %v1109, %v1157
        %v1159 = vpop.f32.mrf.mxu0
        %v1160 = vadd.f32 %v1111, %v1159
        %1161 = vmatmul.bf16.gmra.mxu0 %v450
        %v1162 = vpop.f32.mrf.mxu0
        %v1163 = vadd.f32 %v1114, %v1162
        %v1164 = vpop.f32.mrf.mxu0
        %v1165 = vadd.f32 %v1116, %v1164
        %1166 = vmatmul.bf16.gmra.mxu0 %v451
        %v1167 = vpop.f32.mrf.mxu0
        %v1168 = vadd.f32 %v1119, %v1167
        %v1169 = vpop.f32.mrf.mxu0
        %v1170 = vadd.f32 %v1121, %v1169
        %1171 = vmatmul.bf16.gmra.mxu0 %v452
        %v1172 = vpop.f32.mrf.mxu0
        %v1173 = vadd.f32 %v1124, %v1172
        %v1174 = vpop.f32.mrf.mxu0
        %v1175 = vadd.f32 %v1126, %v1174
        %1176 = vmatmul.bf16.gmra.mxu0 %v453
        %v1177 = vpop.f32.mrf.mxu0
        %v1178 = vadd.f32 %v1129, %v1177
        %v1179 = vpop.f32.mrf.mxu0
        %v1180 = vadd.f32 %v1131, %v1179
        %1181 = vdwg.mxu0
        %1182 = vmatpush.bf16.msra.mxu0 %v1059
        %1183 = vmatpush.bf16.msra.mxu0 %v1058
        %1184 = vmatpush.bf16.msra.mxu0 %v1057
        %1185 = vmatpush.bf16.msra.mxu0 %v1056
        %1186 = vmatpush.bf16.msra.mxu0 %v1055
        %1187 = vmatpush.bf16.msra.mxu0 %v1054
        %1188 = vmatpush.bf16.msra.mxu0 %v1053
        %1189 = vmatpush.bf16.msra.mxu0 %v1052
        %1190 = vmatmul.bf16.gmra.mxu0 %v494
        %v1191 = vpop.f32.mrf.mxu0
        %v1192 = vadd.f32 %v1143, %v1191
        %v1193 = vpop.f32.mrf.mxu0
        %v1194 = vadd.f32 %v1145, %v1193
        %1195 = vmatmul.bf16.gmra.mxu0 %v495
        %v1196 = vpop.f32.mrf.mxu0
        %v1197 = vadd.f32 %v1148, %v1196
        %v1198 = vpop.f32.mrf.mxu0
        %v1199 = vadd.f32 %v1150, %v1198
        %1200 = vmatmul.bf16.gmra.mxu0 %v496
        %v1201 = vpop.f32.mrf.mxu0
        %v1202 = vadd.f32 %v1153, %v1201
        %v1203 = vpop.f32.mrf.mxu0
        %v1204 = vadd.f32 %v1155, %v1203
        %1205 = vmatmul.bf16.gmra.mxu0 %v497
        %v1206 = vpop.f32.mrf.mxu0
        %v1207 = vadd.f32 %v1158, %v1206
        %v1208 = vpop.f32.mrf.mxu0
        %v1209 = vadd.f32 %v1160, %v1208
        %1210 = vmatmul.bf16.gmra.mxu0 %v498
        %v1211 = vpop.f32.mrf.mxu0
        %v1212 = vadd.f32 %v1163, %v1211
        %v1213 = vpop.f32.mrf.mxu0
        %v1214 = vadd.f32 %v1165, %v1213
        %1215 = vmatmul.bf16.gmra.mxu0 %v499
        %v1216 = vpop.f32.mrf.mxu0
        %v1217 = vadd.f32 %v1168, %v1216
        %v1218 = vpop.f32.mrf.mxu0
        %v1219 = vadd.f32 %v1170, %v1218
        %1220 = vmatmul.bf16.gmra.mxu0 %v500
        %v1221 = vpop.f32.mrf.mxu0
        %v1222 = vadd.f32 %v1173, %v1221
        %v1223 = vpop.f32.mrf.mxu0
        %v1224 = vadd.f32 %v1175, %v1223
        %1225 = vmatmul.bf16.gmra.mxu0 %v501
        %v1226 = vpop.f32.mrf.mxu0
        %v1227 = vadd.f32 %v1178, %v1226
        %v1228 = vpop.f32.mrf.mxu0
        %v1229 = vadd.f32 %v1180, %v1228
        %1230 = vdwg.mxu0
        %v1231 = vadd.f32 %v887, %v1192
        %v1232 = vadd.f32 %v886, %v1194
        %v1233 = vadd.f32 %v885, %v1197
        %v1234 = vadd.f32 %v884, %v1199
        %v1235 = vadd.f32 %v883, %v1202
        %v1236 = vadd.f32 %v882, %v1204
        %v1237 = vadd.f32 %v881, %v1207
        %v1238 = vadd.f32 %v880, %v1209
        %v1239 = vadd.f32 %v879, %v1212
        %v1240 = vadd.f32 %v878, %v1214
        %v1241 = vadd.f32 %v877, %v1217
        %v1242 = vadd.f32 %v876, %v1219
        %v1243 = vadd.f32 %v875, %v1222
        %v1244 = vadd.f32 %v874, %v1224
        %v1245 = vadd.f32 %v873, %v1227
        %v1246 = vadd.f32 %v872, %v1229
        %s1247 = sadd.s32 %s510, 2
        %s1248 = smul.u32 %s1247, 48
        %s1249 = smul.addr %s1248, 4
        %s1250 = scalar_lea.vmem %s1, %s1249
        %v1251 = vld [vmem:[%s1250] sm:$0xf]
        %v1252 = vld [vmem:[%s1250 + $0x4] sm:$0xf]
        %v1253 = vld [vmem:[%s1250 + $0x8] sm:$0xf]
        %v1254 = vld [vmem:[%s1250 + $0xc] sm:$0xf]
        %v1255 = vld [vmem:[%s1250 + $0x10] sm:$0xf]
        %v1256 = vld [vmem:[%s1250 + $0x14] sm:$0xf]
        %v1257 = vld [vmem:[%s1250 + $0x18] sm:$0xf]
        %v1258 = vld [vmem:[%s1250 + $0x1c] sm:$0xf]
        %v1259 = vld [vmem:[%s1250 + $0x20] sm:$0xf]
        %v1260 = vld [vmem:[%s1250 + $0x24] sm:$0xf]
        %v1261 = vld [vmem:[%s1250 + $0x28] sm:$0xf]
        %v1262 = vld [vmem:[%s1250 + $0x2c] sm:$0xf]
        %v1263 = vld [vmem:[%s1250 + $0x30] sm:$0xf]
        %v1264 = vld [vmem:[%s1250 + $0x34] sm:$0xf]
        %v1265 = vld [vmem:[%s1250 + $0x38] sm:$0xf]
        %v1266 = vld [vmem:[%s1250 + $0x3c] sm:$0xf]
        %v1267 = vld [vmem:[%s1250 + $0x40] sm:$0xf]
        %v1268 = vld [vmem:[%s1250 + $0x44] sm:$0xf]
        %v1269 = vld [vmem:[%s1250 + $0x48] sm:$0xf]
        %v1270 = vld [vmem:[%s1250 + $0x4c] sm:$0xf]
        %v1271 = vld [vmem:[%s1250 + $0x50] sm:$0xf]
        %v1272 = vld [vmem:[%s1250 + $0x54] sm:$0xf]
        %v1273 = vld [vmem:[%s1250 + $0x58] sm:$0xf]
        %v1274 = vld [vmem:[%s1250 + $0x5c] sm:$0xf]
        %v1275 = vld [vmem:[%s1250 + $0x60] sm:$0xf]
        %v1276 = vld [vmem:[%s1250 + $0x64] sm:$0xf]
        %v1277 = vld [vmem:[%s1250 + $0x68] sm:$0xf]
        %v1278 = vld [vmem:[%s1250 + $0x6c] sm:$0xf]
        %v1279 = vld [vmem:[%s1250 + $0x70] sm:$0xf]
        %v1280 = vld [vmem:[%s1250 + $0x74] sm:$0xf]
        %v1281 = vld [vmem:[%s1250 + $0x78] sm:$0xf]
        %v1282 = vld [vmem:[%s1250 + $0x7c] sm:$0xf]
        %v1283 = vld [vmem:[%s1250 + $0x80] sm:$0xf]
        %v1284 = vld [vmem:[%s1250 + $0x84] sm:$0xf]
        %v1285 = vld [vmem:[%s1250 + $0x88] sm:$0xf]
        %v1286 = vld [vmem:[%s1250 + $0x8c] sm:$0xf]
        %v1287 = vld [vmem:[%s1250 + $0x90] sm:$0xf]
        %v1288 = vld [vmem:[%s1250 + $0x94] sm:$0xf]
        %v1289 = vld [vmem:[%s1250 + $0x98] sm:$0xf]
        %v1290 = vld [vmem:[%s1250 + $0x9c] sm:$0xf]
        %v1291 = vld [vmem:[%s1250 + $0xa0] sm:$0xf]
        %v1292 = vld [vmem:[%s1250 + $0xa4] sm:$0xf]
        %v1293 = vld [vmem:[%s1250 + $0xa8] sm:$0xf]
        %v1294 = vld [vmem:[%s1250 + $0xac] sm:$0xf]
        %v1295 = vld [vmem:[%s1250 + $0xb0] sm:$0xf]
        %v1296 = vld [vmem:[%s1250 + $0xb4] sm:$0xf]
        %v1297 = vld [vmem:[%s1250 + $0xb8] sm:$0xf]
        %v1298 = vld [vmem:[%s1250 + $0xbc] sm:$0xf]
        %v1347 = vunpack.c.l.b16 %v1251
        %v1348 = vunpack.c.l.b16 %v1252
        %v1349 = vunpack.c.l.b16 %v1253
        %v1350 = vunpack.c.l.b16 %v1254
        %v1351 = vunpack.c.l.b16 %v1255
        %v1352 = vunpack.c.l.b16 %v1256
        %v1353 = vunpack.c.l.b16 %v1257
        %v1354 = vunpack.c.l.b16 %v1258
        %v1355 = vunpack.c.l.b16 %v1259
        %v1356 = vunpack.c.l.b16 %v1260
        %v1357 = vunpack.c.l.b16 %v1261
        %v1358 = vunpack.c.l.b16 %v1262
        %v1359 = vunpack.c.l.b16 %v1263
        %v1360 = vunpack.c.l.b16 %v1264
        %v1361 = vunpack.c.l.b16 %v1265
        %v1362 = vunpack.c.l.b16 %v1266
        %v1363 = vunpack.c.l.b16 %v1267
        %v1364 = vunpack.c.l.b16 %v1268
        %v1365 = vunpack.c.l.b16 %v1269
        %v1366 = vunpack.c.l.b16 %v1270
        %v1367 = vunpack.c.l.b16 %v1271
        %v1368 = vunpack.c.l.b16 %v1272
        %v1369 = vunpack.c.l.b16 %v1273
        %v1370 = vunpack.c.l.b16 %v1274
        %v1371 = vunpack.c.l.b16 %v1275
        %v1372 = vunpack.c.l.b16 %v1276
        %v1373 = vunpack.c.l.b16 %v1277
        %v1374 = vunpack.c.l.b16 %v1278
        %v1375 = vunpack.c.l.b16 %v1279
        %v1376 = vunpack.c.l.b16 %v1280
        %v1377 = vunpack.c.l.b16 %v1281
        %v1378 = vunpack.c.l.b16 %v1282
        %v1379 = vunpack.c.l.b16 %v1283
        %v1380 = vunpack.c.l.b16 %v1284
        %v1381 = vunpack.c.l.b16 %v1285
        %v1382 = vunpack.c.l.b16 %v1286
        %v1383 = vunpack.c.l.b16 %v1287
        %v1384 = vunpack.c.l.b16 %v1288
        %v1385 = vunpack.c.l.b16 %v1289
        %v1386 = vunpack.c.l.b16 %v1290
        %v1387 = vunpack.c.l.b16 %v1291
        %v1388 = vunpack.c.l.b16 %v1292
        %v1389 = vunpack.c.l.b16 %v1293
        %v1390 = vunpack.c.l.b16 %v1294
        %v1391 = vunpack.c.l.b16 %v1295
        %v1392 = vunpack.c.l.b16 %v1296
        %v1393 = vunpack.c.l.b16 %v1297
        %v1394 = vunpack.c.l.b16 %v1298
        %v1395 = vpack.c.b16 %v1348, %v1347
        %v1396 = vpack.c.b16 %v1350, %v1349
        %v1397 = vpack.c.b16 %v1352, %v1351
        %v1398 = vpack.c.b16 %v1354, %v1353
        %v1399 = vpack.c.b16 %v1356, %v1355
        %v1400 = vpack.c.b16 %v1358, %v1357
        %v1401 = vpack.c.b16 %v1360, %v1359
        %v1402 = vpack.c.b16 %v1362, %v1361
        %v1403 = vpack.c.b16 %v1364, %v1363
        %v1404 = vpack.c.b16 %v1366, %v1365
        %v1405 = vpack.c.b16 %v1368, %v1367
        %v1406 = vpack.c.b16 %v1370, %v1369
        %v1407 = vpack.c.b16 %v1372, %v1371
        %v1408 = vpack.c.b16 %v1374, %v1373
        %v1409 = vpack.c.b16 %v1376, %v1375
        %v1410 = vpack.c.b16 %v1378, %v1377
        %v1411 = vpack.c.b16 %v1380, %v1379
        %v1412 = vpack.c.b16 %v1382, %v1381
        %v1413 = vpack.c.b16 %v1384, %v1383
        %v1414 = vpack.c.b16 %v1386, %v1385
        %v1415 = vpack.c.b16 %v1388, %v1387
        %v1416 = vpack.c.b16 %v1390, %v1389
        %v1417 = vpack.c.b16 %v1392, %v1391
        %v1418 = vpack.c.b16 %v1394, %v1393
        %1443 = vmatpush.bf16.msra.mxu0 %v1402
        %1444 = vmatpush.bf16.msra.mxu0 %v1401
        %1445 = vmatpush.bf16.msra.mxu0 %v1400
        %1446 = vmatpush.bf16.msra.mxu0 %v1399
        %1447 = vmatpush.bf16.msra.mxu0 %v1398
        %1448 = vmatpush.bf16.msra.mxu0 %v1397
        %1449 = vmatpush.bf16.msra.mxu0 %v1396
        %1450 = vmatpush.bf16.msra.mxu0 %v1395
        %1451 = vmatmul.bf16.gmra.mxu0 %v398
        %v1452 = vpop.f32.mrf.mxu0
        %v1453 = vadd.f32 0.0, %v1452
        %v1454 = vpop.f32.mrf.mxu0
        %v1455 = vadd.f32 0.0, %v1454
        %1456 = vmatmul.bf16.gmra.mxu0 %v399
        %v1457 = vpop.f32.mrf.mxu0
        %v1458 = vadd.f32 0.0, %v1457
        %v1459 = vpop.f32.mrf.mxu0
        %v1460 = vadd.f32 0.0, %v1459
        %1461 = vmatmul.bf16.gmra.mxu0 %v400
        %v1462 = vpop.f32.mrf.mxu0
        %v1463 = vadd.f32 0.0, %v1462
        %v1464 = vpop.f32.mrf.mxu0
        %v1465 = vadd.f32 0.0, %v1464
        %1466 = vmatmul.bf16.gmra.mxu0 %v401
        %v1467 = vpop.f32.mrf.mxu0
        %v1468 = vadd.f32 0.0, %v1467
        %v1469 = vpop.f32.mrf.mxu0
        %v1470 = vadd.f32 0.0, %v1469
        %1471 = vmatmul.bf16.gmra.mxu0 %v402
        %v1472 = vpop.f32.mrf.mxu0
        %v1473 = vadd.f32 0.0, %v1472
        %v1474 = vpop.f32.mrf.mxu0
        %v1475 = vadd.f32 0.0, %v1474
        %1476 = vmatmul.bf16.gmra.mxu0 %v403
        %v1477 = vpop.f32.mrf.mxu0
        %v1478 = vadd.f32 0.0, %v1477
        %v1479 = vpop.f32.mrf.mxu0
        %v1480 = vadd.f32 0.0, %v1479
        %1481 = vmatmul.bf16.gmra.mxu0 %v404
        %v1482 = vpop.f32.mrf.mxu0
        %v1483 = vadd.f32 0.0, %v1482
        %v1484 = vpop.f32.mrf.mxu0
        %v1485 = vadd.f32 0.0, %v1484
        %1486 = vmatmul.bf16.gmra.mxu0 %v405
        %v1487 = vpop.f32.mrf.mxu0
        %v1488 = vadd.f32 0.0, %v1487
        %v1489 = vpop.f32.mrf.mxu0
        %v1490 = vadd.f32 0.0, %v1489
        %1491 = vdwg.mxu0
        %1492 = vmatpush.bf16.msra.mxu0 %v1410
        %1493 = vmatpush.bf16.msra.mxu0 %v1409
        %1494 = vmatpush.bf16.msra.mxu0 %v1408
        %1495 = vmatpush.bf16.msra.mxu0 %v1407
        %1496 = vmatpush.bf16.msra.mxu0 %v1406
        %1497 = vmatpush.bf16.msra.mxu0 %v1405
        %1498 = vmatpush.bf16.msra.mxu0 %v1404
        %1499 = vmatpush.bf16.msra.mxu0 %v1403
        %1500 = vmatmul.bf16.gmra.mxu0 %v446
        %v1501 = vpop.f32.mrf.mxu0
        %v1502 = vadd.f32 %v1453, %v1501
        %v1503 = vpop.f32.mrf.mxu0
        %v1504 = vadd.f32 %v1455, %v1503
        %1505 = vmatmul.bf16.gmra.mxu0 %v447
        %v1506 = vpop.f32.mrf.mxu0
        %v1507 = vadd.f32 %v1458, %v1506
        %v1508 = vpop.f32.mrf.mxu0
        %v1509 = vadd.f32 %v1460, %v1508
        %1510 = vmatmul.bf16.gmra.mxu0 %v448
        %v1511 = vpop.f32.mrf.mxu0
        %v1512 = vadd.f32 %v1463, %v1511
        %v1513 = vpop.f32.mrf.mxu0
        %v1514 = vadd.f32 %v1465, %v1513
        %1515 = vmatmul.bf16.gmra.mxu0 %v449
        %v1516 = vpop.f32.mrf.mxu0
        %v1517 = vadd.f32 %v1468, %v1516
        %v1518 = vpop.f32.mrf.mxu0
        %v1519 = vadd.f32 %v1470, %v1518
        %1520 = vmatmul.bf16.gmra.mxu0 %v450
        %v1521 = vpop.f32.mrf.mxu0
        %v1522 = vadd.f32 %v1473, %v1521
        %v1523 = vpop.f32.mrf.mxu0
        %v1524 = vadd.f32 %v1475, %v1523
        %1525 = vmatmul.bf16.gmra.mxu0 %v451
        %v1526 = vpop.f32.mrf.mxu0
        %v1527 = vadd.f32 %v1478, %v1526
        %v1528 = vpop.f32.mrf.mxu0
        %v1529 = vadd.f32 %v1480, %v1528
        %1530 = vmatmul.bf16.gmra.mxu0 %v452
        %v1531 = vpop.f32.mrf.mxu0
        %v1532 = vadd.f32 %v1483, %v1531
        %v1533 = vpop.f32.mrf.mxu0
        %v1534 = vadd.f32 %v1485, %v1533
        %1535 = vmatmul.bf16.gmra.mxu0 %v453
        %v1536 = vpop.f32.mrf.mxu0
        %v1537 = vadd.f32 %v1488, %v1536
        %v1538 = vpop.f32.mrf.mxu0
        %v1539 = vadd.f32 %v1490, %v1538
        %1540 = vdwg.mxu0
        %1541 = vmatpush.bf16.msra.mxu0 %v1418
        %1542 = vmatpush.bf16.msra.mxu0 %v1417
        %1543 = vmatpush.bf16.msra.mxu0 %v1416
        %1544 = vmatpush.bf16.msra.mxu0 %v1415
        %1545 = vmatpush.bf16.msra.mxu0 %v1414
        %1546 = vmatpush.bf16.msra.mxu0 %v1413
        %1547 = vmatpush.bf16.msra.mxu0 %v1412
        %1548 = vmatpush.bf16.msra.mxu0 %v1411
        %1549 = vmatmul.bf16.gmra.mxu0 %v494
        %v1550 = vpop.f32.mrf.mxu0
        %v1551 = vadd.f32 %v1502, %v1550
        %v1552 = vpop.f32.mrf.mxu0
        %v1553 = vadd.f32 %v1504, %v1552
        %1554 = vmatmul.bf16.gmra.mxu0 %v495
        %v1555 = vpop.f32.mrf.mxu0
        %v1556 = vadd.f32 %v1507, %v1555
        %v1557 = vpop.f32.mrf.mxu0
        %v1558 = vadd.f32 %v1509, %v1557
        %1559 = vmatmul.bf16.gmra.mxu0 %v496
        %v1560 = vpop.f32.mrf.mxu0
        %v1561 = vadd.f32 %v1512, %v1560
        %v1562 = vpop.f32.mrf.mxu0
        %v1563 = vadd.f32 %v1514, %v1562
        %1564 = vmatmul.bf16.gmra.mxu0 %v497
        %v1565 = vpop.f32.mrf.mxu0
        %v1566 = vadd.f32 %v1517, %v1565
        %v1567 = vpop.f32.mrf.mxu0
        %v1568 = vadd.f32 %v1519, %v1567
        %1569 = vmatmul.bf16.gmra.mxu0 %v498
        %v1570 = vpop.f32.mrf.mxu0
        %v1571 = vadd.f32 %v1522, %v1570
        %v1572 = vpop.f32.mrf.mxu0
        %v1573 = vadd.f32 %v1524, %v1572
        %1574 = vmatmul.bf16.gmra.mxu0 %v499
        %v1575 = vpop.f32.mrf.mxu0
        %v1576 = vadd.f32 %v1527, %v1575
        %v1577 = vpop.f32.mrf.mxu0
        %v1578 = vadd.f32 %v1529, %v1577
        %1579 = vmatmul.bf16.gmra.mxu0 %v500
        %v1580 = vpop.f32.mrf.mxu0
        %v1581 = vadd.f32 %v1532, %v1580
        %v1582 = vpop.f32.mrf.mxu0
        %v1583 = vadd.f32 %v1534, %v1582
        %1584 = vmatmul.bf16.gmra.mxu0 %v501
        %v1585 = vpop.f32.mrf.mxu0
        %v1586 = vadd.f32 %v1537, %v1585
        %v1587 = vpop.f32.mrf.mxu0
        %v1588 = vadd.f32 %v1539, %v1587
        %1589 = vdwg.mxu0
        %v1590 = vrot.slane %v1551, 1
        %v1591 = vrot.slane %v1553, 1
        %v1592 = vrot.slane %v1556, 1
        %v1593 = vrot.slane %v1558, 1
        %v1594 = vrot.slane %v1561, 1
        %v1595 = vrot.slane %v1563, 1
        %v1596 = vrot.slane %v1566, 1
        %v1597 = vrot.slane %v1568, 1
        %v1598 = vrot.slane %v1571, 1
        %v1599 = vrot.slane %v1573, 1
        %v1600 = vrot.slane %v1576, 1
        %v1601 = vrot.slane %v1578, 1
        %v1602 = vrot.slane %v1581, 1
        %v1603 = vrot.slane %v1583, 1
        %v1604 = vrot.slane %v1586, 1
        %v1605 = vrot.slane %v1588, 1
        %vm1606 = vcmp.lt.s32.totalorder %v870, 7
        %v1607 = vsel %vm1606, %v1604, %v1605
        %v1608 = vsel %vm1606, %v1603, %v1604
        %v1609 = vsel %vm1606, %v1602, %v1603
        %v1610 = vsel %vm1606, %v1601, %v1602
        %v1611 = vsel %vm1606, %v1600, %v1601
        %v1612 = vsel %vm1606, %v1599, %v1600
        %v1613 = vsel %vm1606, %v1598, %v1599
        %v1614 = vsel %vm1606, %v1597, %v1598
        %v1615 = vsel %vm1606, %v1596, %v1597
        %v1616 = vsel %vm1606, %v1595, %v1596
        %v1617 = vsel %vm1606, %v1594, %v1595
        %v1618 = vsel %vm1606, %v1593, %v1594
        %v1619 = vsel %vm1606, %v1592, %v1593
        %v1620 = vsel %vm1606, %v1591, %v1592
        %v1621 = vsel %vm1606, %v1590, %v1591
        %v1622 = vsel %vm1606, %v1605, %v1590
        %v1623 = vadd.f32 %v1231, %v1621
        %v1624 = vadd.f32 %v1232, %v1620
        %v1625 = vadd.f32 %v1233, %v1619
        %v1626 = vadd.f32 %v1234, %v1618
        %v1627 = vadd.f32 %v1235, %v1617
        %v1628 = vadd.f32 %v1236, %v1616
        %v1629 = vadd.f32 %v1237, %v1615
        %v1630 = vadd.f32 %v1238, %v1614
        %v1631 = vadd.f32 %v1239, %v1613
        %v1632 = vadd.f32 %v1240, %v1612
        %v1633 = vadd.f32 %v1241, %v1611
        %v1634 = vadd.f32 %v1242, %v1610
        %v1635 = vadd.f32 %v1243, %v1609
        %v1636 = vadd.f32 %v1244, %v1608
        %v1637 = vadd.f32 %v1245, %v1607
        %v1638 = vadd.f32 %v1246, %v1622
        %v1639 = vld [vmem:[#allocation3] sm:$0xff]
        %v1640 = vld [vmem:[#allocation3 + $0x8] sm:$0xff]
        %v1641 = vld [vmem:[#allocation3 + $0x10] sm:$0xff]
        %v1642 = vld [vmem:[#allocation3 + $0x18] sm:$0xff]
        %v1643 = vld [vmem:[#allocation3 + $0x20] sm:$0xff]
        %v1644 = vld [vmem:[#allocation3 + $0x28] sm:$0xff]
        %v1645 = vld [vmem:[#allocation3 + $0x30] sm:$0xff]
        %v1646 = vld [vmem:[#allocation3 + $0x38] sm:$0xff]
        %v1647 = vld [vmem:[#allocation3 + $0x40] sm:$0xff]
        %v1648 = vld [vmem:[#allocation3 + $0x48] sm:$0xff]
        %v1649 = vld [vmem:[#allocation3 + $0x50] sm:$0xff]
        %v1650 = vld [vmem:[#allocation3 + $0x58] sm:$0xff]
        %v1651 = vld [vmem:[#allocation3 + $0x60] sm:$0xff]
        %v1652 = vld [vmem:[#allocation3 + $0x68] sm:$0xff]
        %v1653 = vld [vmem:[#allocation3 + $0x70] sm:$0xff]
        %v1654 = vld [vmem:[#allocation3 + $0x78] sm:$0xff]
        %v1655 = vadd.f32 %v1639, %v1623
        %v1656 = vadd.f32 %v1640, %v1624
        %v1657 = vadd.f32 %v1641, %v1625
        %v1658 = vadd.f32 %v1642, %v1626
        %v1659 = vadd.f32 %v1643, %v1627
        %v1660 = vadd.f32 %v1644, %v1628
        %v1661 = vadd.f32 %v1645, %v1629
        %v1662 = vadd.f32 %v1646, %v1630
        %v1663 = vadd.f32 %v1647, %v1631
        %v1664 = vadd.f32 %v1648, %v1632
        %v1665 = vadd.f32 %v1649, %v1633
        %v1666 = vadd.f32 %v1650, %v1634
        %v1667 = vadd.f32 %v1651, %v1635
        %v1668 = vadd.f32 %v1652, %v1636
        %v1669 = vadd.f32 %v1653, %v1637
        %v1670 = vadd.f32 %v1654, %v1638
        %1671 = vst [vmem:[#allocation3] sm:$0xff] %v1655
        %1672 = vst [vmem:[#allocation3 + $0x8] sm:$0xff] %v1656
        %1673 = vst [vmem:[#allocation3 + $0x10] sm:$0xff] %v1657
        %1674 = vst [vmem:[#allocation3 + $0x18] sm:$0xff] %v1658
        %1675 = vst [vmem:[#allocation3 + $0x20] sm:$0xff] %v1659
        %1676 = vst [vmem:[#allocation3 + $0x28] sm:$0xff] %v1660
        %1677 = vst [vmem:[#allocation3 + $0x30] sm:$0xff] %v1661
        %1678 = vst [vmem:[#allocation3 + $0x38] sm:$0xff] %v1662
        %1679 = vst [vmem:[#allocation3 + $0x40] sm:$0xff] %v1663
        %1680 = vst [vmem:[#allocation3 + $0x48] sm:$0xff] %v1664
        %1681 = vst [vmem:[#allocation3 + $0x50] sm:$0xff] %v1665
        %1682 = vst [vmem:[#allocation3 + $0x58] sm:$0xff] %v1666
        %1683 = vst [vmem:[#allocation3 + $0x60] sm:$0xff] %v1667
        %1684 = vst [vmem:[#allocation3 + $0x68] sm:$0xff] %v1668
        %1685 = vst [vmem:[#allocation3 + $0x70] sm:$0xff] %v1669
        %1686 = vst [vmem:[#allocation3 + $0x78] sm:$0xff] %v1670
      $region40: #{bottleneck_forward.4} parent=31 // pred_fallthru
        _
      %p1687 = scmp.eq.s32.totalorder %s21, 2
      // Predicated region
      $region41: #{bottleneck_forward.4} parent=31 // pred_check
        %p1688 = pneg %p1687
      $region42: #{bottleneck_forward.4} parent=31 // pred_check_branch
        %1690 = sbr.rel (%p1688) target = $region44
      $region43: #{bottleneck_forward.4} parent=31 // pred_region
        %v1691 = vld [vmem:[#allocation3] sm:$0xff]
        %v1692 = vld [vmem:[#allocation3 + $0x10] sm:$0xff]
        %v1693 = vld [vmem:[#allocation3 + $0x20] sm:$0xff]
        %v1694 = vld [vmem:[#allocation3 + $0x30] sm:$0xff]
        %v1695 = vld [vmem:[#allocation3 + $0x40] sm:$0xff]
        %v1696 = vld [vmem:[#allocation3 + $0x50] sm:$0xff]
        %v1697 = vld [vmem:[#allocation3 + $0x60] sm:$0xff]
        %v1698 = vld [vmem:[#allocation3 + $0x70] sm:$0xff]
        %v1699 = vld [vmem:[%s2] sm:$0x1]
        %v1701 = vperm.slane %v1699, 0
        %v1703 = vadd.f32 %v1691, %v1701
        %v1704 = vadd.f32 %v1692, %v1701
        %v1705 = vadd.f32 %v1693, %v1701
        %v1706 = vadd.f32 %v1694, %v1701
        %v1707 = vadd.f32 %v1695, %v1701
        %v1708 = vadd.f32 %v1696, %v1701
        %v1709 = vadd.f32 %v1697, %v1701
        %v1710 = vadd.f32 %v1698, %v1701
        %v1711 = vmax.f32 %v1703, 0.0
        %v1712 = vmax.f32 %v1704, 0.0
        %v1713 = vmax.f32 %v1705, 0.0
        %v1714 = vmax.f32 %v1706, 0.0
        %v1715 = vmax.f32 %v1707, 0.0
        %v1716 = vmax.f32 %v1708, 0.0
        %v1717 = vmax.f32 %v1709, 0.0
        %v1718 = vmax.f32 %v1710, 0.0
        %v1719 = vpack.c.bf16 %v1711, %v1711
        %v1720 = vpack.c.bf16 %v1712, %v1712
        %v1721 = vpack.c.bf16 %v1713, %v1713
        %v1722 = vpack.c.bf16 %v1714, %v1714
        %v1723 = vpack.c.bf16 %v1715, %v1715
        %v1724 = vpack.c.bf16 %v1716, %v1716
        %v1725 = vpack.c.bf16 %v1717, %v1717
        %v1726 = vpack.c.bf16 %v1718, %v1718
        %1727 = vst [vmem:[%s255] sm:$0xf] %v1719
        %1728 = vst [vmem:[%s255 + $0x4] sm:$0xf] %v1720
        %1729 = vst [vmem:[%s255 + $0x8] sm:$0xf] %v1721
        %1730 = vst [vmem:[%s255 + $0xc] sm:$0xf] %v1722
        %1731 = vst [vmem:[%s255 + $0x10] sm:$0xf] %v1723
        %1732 = vst [vmem:[%s255 + $0x14] sm:$0xf] %v1724
        %1733 = vst [vmem:[%s255 + $0x18] sm:$0xf] %v1725
        %1734 = vst [vmem:[%s255 + $0x1c] sm:$0xf] %v1726
      $region44: #{bottleneck_forward.4} parent=31 // pred_fallthru
        _
      %p1735 = scmp.lt.s32.totalorder %s19, 1
      %s1736 = scalar_select %p1735, %s19, 1
      %p1737 = scmp.lt.s32.totalorder %s20, 7
      %s1738 = scalar_select %p1737, %s20, 7
      %s1739 = smul.addr %s1738, 8
      %s1740 = smul.addr %s1736, 64
      %s1741 = sadd.s32 %s1739, %s1740
      %s1742 = smul.addr %s1741, 4
      %s1743 = scalar_lea.vmem %s3, %s1742
      // Predicated region
      $region45: #{bottleneck_forward.4} parent=31 // pred_check
        %p1744 = pneg %p135
      $region46: #{bottleneck_forward.4} parent=31 // pred_check_branch
        %1746 = sbr.rel (%p1744) target = $region48
      $region47: #{bottleneck_forward.4} parent=31 // pred_region
        _
      $region48: #{bottleneck_forward.4} parent=31 // pred_fallthru
        _
    $region32: #{bottleneck_forward.4} parent=5 // pred_fallthru
      _
    %p1747 = scmp.le.s32.totalorder 2, %s9
    // Predicated region
    $region49: #{bottleneck_forward.4} parent=5 // pred_check
      %p1748 = pneg %p1747
    $region50: #{bottleneck_forward.4} parent=5 // pred_check_branch
      %1750 = sbr.rel (%p1748) target = $region52
    $region51: #{bottleneck_forward.4} parent=5 // pred_region
      %s1751 = ssub.s32 %s9, 2
      // Predicated region
      $region53: #{bottleneck_forward.4} parent=51 // pred_check
        %p1752 = pneg %p141
      $region54: #{bottleneck_forward.4} parent=51 // pred_check_branch
        %1754 = sbr.rel (%p1752) target = $region56
      $region55: #{bottleneck_forward.4} parent=51 // pred_region
        %p1755 = scmp.lt.s32.totalorder %s22, 1
        %s1756 = scalar_select %p1755, %s22, 1
        %p1757 = scmp.lt.s32.totalorder %s23, 7
        %s1758 = scalar_select %p1757, %s23, 7
        %s1759 = smul.addr %s1758, 8
        %s1760 = smul.addr %s1756, 64
        %s1761 = sadd.s32 %s1759, %s1760
        %s1762 = smul.addr %s1761, 4
        %s1763 = scalar_lea.vmem %s3, %s1762
      $region56: #{bottleneck_forward.4} parent=51 // pred_fallthru
        _
    $region52: #{bottleneck_forward.4} parent=5 // pred_fallthru
      _
  $region6: #{bottleneck_forward.4} parent=0 // loop_footer
    %s13 = sadd.s32 1, %s9
  $region7: #{bottleneck_forward.4} parent=0 // loop_footer_branch
    %8 = sbr.rel target = $region3
  $region8: #{bottleneck_forward.4} parent=0 // loop_exit
    _

// kernel: bottleneck_forward.5
$region0: #{bottleneck_forward.5}
  #allocation0 [shape = 'u32[]', space=smem, size = 0x4, offset = 0x4, fixed_abs, tag = 'smem constant byte address 0x4 - core index']
  #allocation1 [shape = 'u32[72,128]{1,0:T(1,128)}', space=vmem, size = 0x9000, scoped, tag = 'internal scratch']
  %s0 = inlined_call_operand.vmem [shape: bf16[1024,128], index: 0, kind: input, shape index: {}]
  %s1 = inlined_call_operand.vmem [shape: bf16[128,128], index: 1, kind: input, shape index: {}]
  %s2 = inlined_call_operand.vmem [shape: f32[1,128], index: 2, kind: input, shape index: {}]
  %s3 = inlined_call_operand.vmem [shape: bf16[1024,128], index: 3, kind: input, shape index: {}, may-alias: {3,4}]
  %s4 = inlined_call_operand.vmem [shape: bf16[1024,128], index: 4, kind: output, shape index: {}, may-alias: {3,4}]
  %s5 = sld [smem:[#allocation0]]
  $region49: #{bottleneck_forward.5} parent=0
    _
  %s7 = ssub.s32 1, %s5
  %s8 = scalar_select 0, %s7, %s5
  loop: start=0, step=1, limit=4
  $region2: #{bottleneck_forward.5} parent=0 // loop_pre_header
    _
  $region3: #{bottleneck_forward.5} parent=0 // loop_header
    %s10 = sphi 0, %s14
    %p11 = scmp.ge.s32.totalorder %s10, 4
    %s20 = sphi 0, %s22
    %s23 = sphi 0, %s20
    %s24 = sphi 0, %s23
    %s40 = sphi 0, %s24
    %s44 = sphi 0, %s44
    %s46 = sphi 0, %s44
    %s47 = sphi 0, %s46
    %s61 = sphi 0, %s47
    %s65 = sphi 0, %s65
    %s67 = sphi 0, %s65
    %s68 = sphi 0, %s67
    %s82 = sphi 0, %s68
    %s88 = sphi 0, %s90
    %s91 = sphi 0, %s88
    %s92 = sphi 0, %s91
    %s108 = sphi 0, %s92
    %s114 = sphi 0, %s116
    %s117 = sphi 0, %s114
    %s118 = sphi 0, %s117
    %s134 = sphi 0, %s118
  $region4: #{bottleneck_forward.5} parent=0 // loop_header_branch
    %13 = sbr.rel (%p11) target = $region8
  $region5: #{bottleneck_forward.5} parent=0 // loop_body
    %s15 = ssub.s32 %s10, 1
    %s16 = ssub.s32 %s10, 2
    %s17 = sadd.s32 %s10, 1
    %s18 = ssub.s32 %s10, %s17
    %p19 = scmp.eq.s32.totalorder %s18, 0
    %s21 = sadd.s32 %s20, 1
    %s22 = scalar_select %p19, %s20, %s21
    %p25 = pneg %p19
    %p26 = scmp.eq.s32.totalorder %s10, 1
    %p27 = por %p25, %p26
    %p28 = scmp.ne.s32.totalorder %s20, %s23
    %p29 = scmp.eq.s32.totalorder %s10, 0
    %p30 = por %p28, %p29
    %p31 = scmp.ne.s32.totalorder %s20, %s23
    %p32 = scmp.eq.s32.totalorder %s15, 1
    %p33 = por %p31, %p32
    %p34 = scmp.ne.s32.totalorder %s23, %s24
    %p35 = scmp.eq.s32.totalorder %s15, 0
    %p36 = por %p34, %p35
    %p37 = scmp.ne.s32.totalorder %s23, %s24
    %p38 = scmp.eq.s32.totalorder %s16, 1
    %p39 = por %p37, %p38
    %p41 = scmp.ne.s32.totalorder %s24, %s40
    %p42 = scmp.eq.s32.totalorder %s16, 0
    %p43 = por %p41, %p42
    %s45 = sadd.s32 %s44, 1
    %p48 = scmp.eq.s32.totalorder %s10, 1
    %p49 = scmp.ne.s32.totalorder %s44, %s46
    %p50 = scmp.eq.s32.totalorder %s10, 0
    %p51 = por %p49, %p50
    %p52 = scmp.ne.s32.totalorder %s44, %s46
    %p53 = scmp.eq.s32.totalorder %s15, 1
    %p54 = por %p52, %p53
    %p55 = scmp.ne.s32.totalorder %s46, %s47
    %p56 = scmp.eq.s32.totalorder %s15, 0
    %p57 = por %p55, %p56
    %p58 = scmp.ne.s32.totalorder %s46, %s47
    %p59 = scmp.eq.s32.totalorder %s16, 1
    %p60 = por %p58, %p59
    %p62 = scmp.ne.s32.totalorder %s47, %s61
    %p63 = scmp.eq.s32.totalorder %s16, 0
    %p64 = por %p62, %p63
    %s66 = sadd.s32 %s65, 1
    %p69 = scmp.eq.s32.totalorder %s10, 1
    %p70 = scmp.ne.s32.totalorder %s65, %s67
    %p71 = scmp.eq.s32.totalorder %s10, 0
    %p72 = por %p70, %p71
    %p73 = scmp.ne.s32.totalorder %s65, %s67
    %p74 = scmp.eq.s32.totalorder %s15, 1
    %p75 = por %p73, %p74
    %p76 = scmp.ne.s32.totalorder %s67, %s68
    %p77 = scmp.eq.s32.totalorder %s15, 0
    %p78 = por %p76, %p77
    %p79 = scmp.ne.s32.totalorder %s67, %s68
    %p80 = scmp.eq.s32.totalorder %s16, 1
    %p81 = por %p79, %p80
    %p83 = scmp.ne.s32.totalorder %s68, %s82
    %p84 = scmp.eq.s32.totalorder %s16, 0
    %p85 = por %p83, %p84
    %s86 = ssub.s32 %s10, %s17
    %p87 = scmp.eq.s32.totalorder %s86, 0
    %s89 = sadd.s32 %s88, 1
    %s90 = scalar_select %p87, %s88, %s89
    %p93 = pneg %p87
    %p94 = scmp.eq.s32.totalorder %s10, 1
    %p95 = por %p93, %p94
    %p96 = scmp.ne.s32.totalorder %s88, %s91
    %p97 = scmp.eq.s32.totalorder %s10, 0
    %p98 = por %p96, %p97
    %p99 = scmp.ne.s32.totalorder %s88, %s91
    %p100 = scmp.eq.s32.totalorder %s15, 1
    %p101 = por %p99, %p100
    %p102 = scmp.ne.s32.totalorder %s91, %s92
    %p103 = scmp.eq.s32.totalorder %s15, 0
    %p104 = por %p102, %p103
    %p105 = scmp.ne.s32.totalorder %s91, %s92
    %p106 = scmp.eq.s32.totalorder %s16, 1
    %p107 = por %p105, %p106
    %p109 = scmp.ne.s32.totalorder %s92, %s108
    %p110 = scmp.eq.s32.totalorder %s16, 0
    %p111 = por %p109, %p110
    %s112 = ssub.s32 %s10, %s17
    %p113 = scmp.eq.s32.totalorder %s112, 0
    %s115 = sadd.s32 %s114, 1
    %s116 = scalar_select %p113, %s114, %s115
    %p119 = pneg %p113
    %p120 = scmp.eq.s32.totalorder %s10, 1
    %p121 = por %p119, %p120
    %p122 = scmp.ne.s32.totalorder %s114, %s117
    %p123 = scmp.eq.s32.totalorder %s10, 0
    %p124 = por %p122, %p123
    %p125 = scmp.ne.s32.totalorder %s114, %s117
    %p126 = scmp.eq.s32.totalorder %s15, 1
    %p127 = por %p125, %p126
    %p128 = scmp.ne.s32.totalorder %s117, %s118
    %p129 = scmp.eq.s32.totalorder %s15, 0
    %p130 = por %p128, %p129
    %p131 = scmp.ne.s32.totalorder %s117, %s118
    %p132 = scmp.eq.s32.totalorder %s16, 1
    %p133 = por %p131, %p132
    %p135 = scmp.ne.s32.totalorder %s118, %s134
    %p136 = scmp.eq.s32.totalorder %s16, 0
    %p137 = por %p135, %p136
    %p138 = scmp.le.s32.totalorder 1, %s10
    %p139 = scmp.lt.s32.totalorder %s10, 3
    %p140 = pnand %p138, %p139
    %p141 = pneg %p140
    // Predicated region
    $region9: #{bottleneck_forward.5} parent=5 // pred_check
      _
    $region10: #{bottleneck_forward.5} parent=5 // pred_check_branch
      %143 = sbr.rel (%p140) target = $region12
    $region11: #{bottleneck_forward.5} parent=5 // pred_region
      %s144 = ssub.s32 %s10, 1
      // Predicated region
      $region13: #{bottleneck_forward.5} parent=11 // pred_check
        %p145 = pneg %p57
      $region14: #{bottleneck_forward.5} parent=11 // pred_check_branch
        %147 = sbr.rel (%p145) target = $region16
      $region15: #{bottleneck_forward.5} parent=11 // pred_region
        _
      $region16: #{bottleneck_forward.5} parent=11 // pred_fallthru
        _
      // Predicated region
      $region17: #{bottleneck_forward.5} parent=11 // pred_check
        %p148 = pneg %p78
      $region18: #{bottleneck_forward.5} parent=11 // pred_check_branch
        %150 = sbr.rel (%p148) target = $region20
      $region19: #{bottleneck_forward.5} parent=11 // pred_region
        _
      $region20: #{bottleneck_forward.5} parent=11 // pred_fallthru
        _
    $region12: #{bottleneck_forward.5} parent=5 // pred_fallthru
      _
    %p151 = scmp.lt.s32.totalorder %s10, 2
    // Predicated region
    $region21: #{bottleneck_forward.5} parent=5 // pred_check
      %p152 = pneg %p151
    $region22: #{bottleneck_forward.5} parent=5 // pred_check_branch
      %154 = sbr.rel (%p152) target = $region24
    $region23: #{bottleneck_forward.5} parent=5 // pred_region
      // Predicated region
      $region25: #{bottleneck_forward.5} parent=23 // pred_check
        %p155 = pneg %p30
      $region26: #{bottleneck_forward.5} parent=23 // pred_check_branch
        %157 = sbr.rel (%p155) target = $region28
      $region27: #{bottleneck_forward.5} parent=23 // pred_region
        %s158 = smul.u32 64, %s10
        %p159 = scmp.lt.s32.totalorder %s158, 127
        %s160 = scalar_select %p159, %s158, 127
        %s161 = smul.addr %s160, 4
        %s162 = scalar_lea.vmem %s0, %s161
        %s163 = smul.u32 64, %s10
      $region28: #{bottleneck_forward.5} parent=23 // pred_fallthru
        _
      // Predicated region
      $region29: #{bottleneck_forward.5} parent=23 // pred_check
        %p164 = pneg %p98
      $region30: #{bottleneck_forward.5} parent=23 // pred_check_branch
        %166 = sbr.rel (%p164) target = $region32
      $region31: #{bottleneck_forward.5} parent=23 // pred_region
        %s167 = smul.u32 64, %s10
        %p168 = scmp.lt.s32.totalorder %s167, 127
        %s169 = scalar_select %p168, %s167, 127
        %s170 = smul.addr %s169, 4
        %s171 = scalar_lea.vmem %s3, %s170
        %s172 = smul.u32 64, %s10
      $region32: #{bottleneck_forward.5} parent=23 // pred_fallthru
        _
    $region24: #{bottleneck_forward.5} parent=5 // pred_fallthru
      _
    %p173 = scmp.le.s32.totalorder 1, %s10
    %p174 = scmp.lt.s32.totalorder %s10, 3
    %p175 = pnand %p173, %p174
    %p176 = pneg %p175
    // Predicated region
    $region33: #{bottleneck_forward.5} parent=5 // pred_check
      _
    $region34: #{bottleneck_forward.5} parent=5 // pred_check_branch
      %178 = sbr.rel (%p175) target = $region36
    $region35: #{bottleneck_forward.5} parent=5 // pred_region
      %s179 = ssub.s32 %s10, 1
      %s180 = smul.u32 64, %s15
      %p181 = scmp.lt.s32.totalorder %s180, 127
      %s182 = scalar_select %p181, %s180, 127
      %s183 = smul.addr %s182, 4
      %s184 = scalar_lea.vmem %s0, %s183
      %p185 = pneg %p36
      %p186 = pneg %p33
      %p187 = pneg %p57
      %p188 = pneg %p54
      %p189 = pneg %p78
      %p190 = pneg %p75
      %s191 = smul.u32 64, %s15
      %p192 = scmp.lt.s32.totalorder %s191, 127
      %s193 = scalar_select %p192, %s191, 127
      %s194 = smul.addr %s193, 4
      %s195 = scalar_lea.vmem %s3, %s194
      %p196 = pneg %p104
      %p197 = pneg %p101
      %p198 = pneg %p130
      %p199 = pneg %p127
      %s200 = smul.u32 64, %s15
      %p201 = scmp.lt.s32.totalorder %s200, 127
      %s202 = scalar_select %p201, %s200, 127
      %s203 = smul.addr %s202, 4
      %s204 = scalar_lea.vmem %s4, %s203
      %s205 = smul.u32 64, %s15
      %p206 = scmp.lt.s32.totalorder %s205, 127
      %s207 = scalar_select %p206, %s205, 127
      %s208 = smul.addr %s207, 4
      %s209 = scalar_lea.vmem %s0, %s208
      %s210 = smul.u32 64, %s15
      %s211 = smul.u32 64, %s15
      %p212 = scmp.lt.s32.totalorder %s211, 127
      %s213 = scalar_select %p212, %s211, 127
      %s214 = smul.addr %s213, 4
      %s215 = scalar_lea.vmem %s3, %s214
      %s216 = smul.u32 64, %s15
      %s217 = smul.u32 64, %s15
      %p218 = scmp.lt.s32.totalorder %s217, 127
      %s219 = scalar_select %p218, %s217, 127
      %s220 = smul.addr %s219, 4
      %s221 = scalar_lea.vmem %s4, %s220
      %s222 = smul.u32 64, %s15
      %v223 = vld [vmem:[%s209] sm:$0xf]
      %v224 = vld [vmem:[%s209 + $0x4] sm:$0xf]
      %v225 = vld [vmem:[%s209 + $0x8] sm:$0xf]
      %v226 = vld [vmem:[%s209 + $0xc] sm:$0xf]
      %v227 = vld [vmem:[%s209 + $0x10] sm:$0xf]
      %v228 = vld [vmem:[%s209 + $0x14] sm:$0xf]
      %v229 = vld [vmem:[%s209 + $0x18] sm:$0xf]
      %v230 = vld [vmem:[%s209 + $0x1c] sm:$0xf]
      %v231 = vld [vmem:[%s209 + $0x20] sm:$0xf]
      %v232 = vld [vmem:[%s209 + $0x24] sm:$0xf]
      %v233 = vld [vmem:[%s209 + $0x28] sm:$0xf]
      %v234 = vld [vmem:[%s209 + $0x2c] sm:$0xf]
      %v235 = vld [vmem:[%s209 + $0x30] sm:$0xf]
      %v236 = vld [vmem:[%s209 + $0x34] sm:$0xf]
      %v237 = vld [vmem:[%s209 + $0x38] sm:$0xf]
      %v238 = vld [vmem:[%s209 + $0x3c] sm:$0xf]
      %v239 = vld [vmem:[%s209 + $0x40] sm:$0xf]
      %v240 = vld [vmem:[%s209 + $0x44] sm:$0xf]
      %v241 = vld [vmem:[%s209 + $0x48] sm:$0xf]
      %v242 = vld [vmem:[%s209 + $0x4c] sm:$0xf]
      %v243 = vld [vmem:[%s209 + $0x50] sm:$0xf]
      %v244 = vld [vmem:[%s209 + $0x54] sm:$0xf]
      %v245 = vld [vmem:[%s209 + $0x58] sm:$0xf]
      %v246 = vld [vmem:[%s209 + $0x5c] sm:$0xf]
      %v247 = vld [vmem:[%s209 + $0x60] sm:$0xf]
      %v248 = vld [vmem:[%s209 + $0x64] sm:$0xf]
      %v249 = vld [vmem:[%s209 + $0x68] sm:$0xf]
      %v250 = vld [vmem:[%s209 + $0x6c] sm:$0xf]
      %v251 = vld [vmem:[%s209 + $0x70] sm:$0xf]
      %v252 = vld [vmem:[%s209 + $0x74] sm:$0xf]
      %v253 = vld [vmem:[%s209 + $0x78] sm:$0xf]
      %v254 = vld [vmem:[%s209 + $0x7c] sm:$0xf]
      %v255 = vld [vmem:[%s209 + $0x80] sm:$0xf]
      %v256 = vld [vmem:[%s209 + $0x84] sm:$0xf]
      %v257 = vld [vmem:[%s209 + $0x88] sm:$0xf]
      %v258 = vld [vmem:[%s209 + $0x8c] sm:$0xf]
      %v259 = vld [vmem:[%s209 + $0x90] sm:$0xf]
      %v260 = vld [vmem:[%s209 + $0x94] sm:$0xf]
      %v261 = vld [vmem:[%s209 + $0x98] sm:$0xf]
      %v262 = vld [vmem:[%s209 + $0x9c] sm:$0xf]
      %v263 = vld [vmem:[%s209 + $0xa0] sm:$0xf]
      %v264 = vld [vmem:[%s209 + $0xa4] sm:$0xf]
      %v265 = vld [vmem:[%s209 + $0xa8] sm:$0xf]
      %v266 = vld [vmem:[%s209 + $0xac] sm:$0xf]
      %v267 = vld [vmem:[%s209 + $0xb0] sm:$0xf]
      %v268 = vld [vmem:[%s209 + $0xb4] sm:$0xf]
      %v269 = vld [vmem:[%s209 + $0xb8] sm:$0xf]
      %v270 = vld [vmem:[%s209 + $0xbc] sm:$0xf]
      %v271 = vld [vmem:[%s209 + $0xc0] sm:$0xf]
      %v272 = vld [vmem:[%s209 + $0xc4] sm:$0xf]
      %v273 = vld [vmem:[%s209 + $0xc8] sm:$0xf]
      %v274 = vld [vmem:[%s209 + $0xcc] sm:$0xf]
      %v275 = vld [vmem:[%s209 + $0xd0] sm:$0xf]
      %v276 = vld [vmem:[%s209 + $0xd4] sm:$0xf]
      %v277 = vld [vmem:[%s209 + $0xd8] sm:$0xf]
      %v278 = vld [vmem:[%s209 + $0xdc] sm:$0xf]
      %v279 = vld [vmem:[%s209 + $0xe0] sm:$0xf]
      %v280 = vld [vmem:[%s209 + $0xe4] sm:$0xf]
      %v281 = vld [vmem:[%s209 + $0xe8] sm:$0xf]
      %v282 = vld [vmem:[%s209 + $0xec] sm:$0xf]
      %v283 = vld [vmem:[%s209 + $0xf0] sm:$0xf]
      %v284 = vld [vmem:[%s209 + $0xf4] sm:$0xf]
      %v285 = vld [vmem:[%s209 + $0xf8] sm:$0xf]
      %v286 = vld [vmem:[%s209 + $0xfc] sm:$0xf]
      %v287 = vld [vmem:[%s1] sm:$0xf]
      %v288 = vld [vmem:[%s1 + $0x4] sm:$0xf]
      %v289 = vld [vmem:[%s1 + $0x8] sm:$0xf]
      %v290 = vld [vmem:[%s1 + $0xc] sm:$0xf]
      %v291 = vld [vmem:[%s1 + $0x10] sm:$0xf]
      %v292 = vld [vmem:[%s1 + $0x14] sm:$0xf]
      %v293 = vld [vmem:[%s1 + $0x18] sm:$0xf]
      %v294 = vld [vmem:[%s1 + $0x1c] sm:$0xf]
      %v295 = vld [vmem:[%s1 + $0x20] sm:$0xf]
      %v296 = vld [vmem:[%s1 + $0x24] sm:$0xf]
      %v297 = vld [vmem:[%s1 + $0x28] sm:$0xf]
      %v298 = vld [vmem:[%s1 + $0x2c] sm:$0xf]
      %v299 = vld [vmem:[%s1 + $0x30] sm:$0xf]
      %v300 = vld [vmem:[%s1 + $0x34] sm:$0xf]
      %v301 = vld [vmem:[%s1 + $0x38] sm:$0xf]
      %v302 = vld [vmem:[%s1 + $0x3c] sm:$0xf]
      %v303 = vld [vmem:[%s2] sm:$0x1]
      %v305 = vperm.slane %v303, 0
      %v371 = vunpack.c.l.b16 %v223
      %v372 = vunpack.c.l.b16 %v224
      %v373 = vunpack.c.l.b16 %v225
      %v374 = vunpack.c.l.b16 %v226
      %v375 = vunpack.c.l.b16 %v227
      %v376 = vunpack.c.l.b16 %v228
      %v377 = vunpack.c.l.b16 %v229
      %v378 = vunpack.c.l.b16 %v230
      %v379 = vunpack.c.l.b16 %v231
      %v380 = vunpack.c.l.b16 %v232
      %v381 = vunpack.c.l.b16 %v233
      %v382 = vunpack.c.l.b16 %v234
      %v383 = vunpack.c.l.b16 %v235
      %v384 = vunpack.c.l.b16 %v236
      %v385 = vunpack.c.l.b16 %v237
      %v386 = vunpack.c.l.b16 %v238
      %v387 = vunpack.c.l.b16 %v239
      %v388 = vunpack.c.l.b16 %v240
      %v389 = vunpack.c.l.b16 %v241
      %v390 = vunpack.c.l.b16 %v242
      %v391 = vunpack.c.l.b16 %v243
      %v392 = vunpack.c.l.b16 %v244
      %v393 = vunpack.c.l.b16 %v245
      %v394 = vunpack.c.l.b16 %v246
      %v395 = vunpack.c.l.b16 %v247
      %v396 = vunpack.c.l.b16 %v248
      %v397 = vunpack.c.l.b16 %v249
      %v398 = vunpack.c.l.b16 %v250
      %v399 = vunpack.c.l.b16 %v251
      %v400 = vunpack.c.l.b16 %v252
      %v401 = vunpack.c.l.b16 %v253
      %v402 = vunpack.c.l.b16 %v254
      %v403 = vunpack.c.l.b16 %v255
      %v404 = vunpack.c.l.b16 %v256
      %v405 = vunpack.c.l.b16 %v257
      %v406 = vunpack.c.l.b16 %v258
      %v407 = vunpack.c.l.b16 %v259
      %v408 = vunpack.c.l.b16 %v260
      %v409 = vunpack.c.l.b16 %v261
      %v410 = vunpack.c.l.b16 %v262
      %v411 = vunpack.c.l.b16 %v263
      %v412 = vunpack.c.l.b16 %v264
      %v413 = vunpack.c.l.b16 %v265
      %v414 = vunpack.c.l.b16 %v266
      %v415 = vunpack.c.l.b16 %v267
      %v416 = vunpack.c.l.b16 %v268
      %v417 = vunpack.c.l.b16 %v269
      %v418 = vunpack.c.l.b16 %v270
      %v419 = vunpack.c.l.b16 %v271
      %v420 = vunpack.c.l.b16 %v272
      %v421 = vunpack.c.l.b16 %v273
      %v422 = vunpack.c.l.b16 %v274
      %v423 = vunpack.c.l.b16 %v275
      %v424 = vunpack.c.l.b16 %v276
      %v425 = vunpack.c.l.b16 %v277
      %v426 = vunpack.c.l.b16 %v278
      %v427 = vunpack.c.l.b16 %v279
      %v428 = vunpack.c.l.b16 %v280
      %v429 = vunpack.c.l.b16 %v281
      %v430 = vunpack.c.l.b16 %v282
      %v431 = vunpack.c.l.b16 %v283
      %v432 = vunpack.c.l.b16 %v284
      %v433 = vunpack.c.l.b16 %v285
      %v434 = vunpack.c.l.b16 %v286
      %v435 = vpack.c.b16 %v372, %v371
      %v436 = vpack.c.b16 %v374, %v373
      %v437 = vpack.c.b16 %v376, %v375
      %v438 = vpack.c.b16 %v378, %v377
      %v439 = vpack.c.b16 %v380, %v379
      %v440 = vpack.c.b16 %v382, %v381
      %v441 = vpack.c.b16 %v384, %v383
      %v442 = vpack.c.b16 %v386, %v385
      %v443 = vpack.c.b16 %v388, %v387
      %v444 = vpack.c.b16 %v390, %v389
      %v445 = vpack.c.b16 %v392, %v391
      %v446 = vpack.c.b16 %v394, %v393
      %v447 = vpack.c.b16 %v396, %v395
      %v448 = vpack.c.b16 %v398, %v397
      %v449 = vpack.c.b16 %v400, %v399
      %v450 = vpack.c.b16 %v402, %v401
      %v451 = vpack.c.b16 %v404, %v403
      %v452 = vpack.c.b16 %v406, %v405
      %v453 = vpack.c.b16 %v408, %v407
      %v454 = vpack.c.b16 %v410, %v409
      %v455 = vpack.c.b16 %v412, %v411
      %v456 = vpack.c.b16 %v414, %v413
      %v457 = vpack.c.b16 %v416, %v415
      %v458 = vpack.c.b16 %v418, %v417
      %v459 = vpack.c.b16 %v420, %v419
      %v460 = vpack.c.b16 %v422, %v421
      %v461 = vpack.c.b16 %v424, %v423
      %v462 = vpack.c.b16 %v426, %v425
      %v463 = vpack.c.b16 %v428, %v427
      %v464 = vpack.c.b16 %v430, %v429
      %v465 = vpack.c.b16 %v432, %v431
      %v466 = vpack.c.b16 %v434, %v433
      %v515 = vunpack.c.l.b16 %v287
      %v516 = vunpack.c.l.b16 %v288
      %v517 = vunpack.c.l.b16 %v289
      %v518 = vunpack.c.l.b16 %v290
      %v519 = vunpack.c.l.b16 %v291
      %v520 = vunpack.c.l.b16 %v292
      %v521 = vunpack.c.l.b16 %v293
      %v522 = vunpack.c.l.b16 %v294
      %v523 = vunpack.c.l.b16 %v295
      %v524 = vunpack.c.l.b16 %v296
      %v525 = vunpack.c.l.b16 %v297
      %v526 = vunpack.c.l.b16 %v298
      %v527 = vunpack.c.l.b16 %v299
      %v528 = vunpack.c.l.b16 %v300
      %v529 = vunpack.c.l.b16 %v301
      %v530 = vunpack.c.l.b16 %v302
      %v531 = vpack.c.b16 %v516, %v515
      %v532 = vpack.c.b16 %v518, %v517
      %v533 = vpack.c.b16 %v520, %v519
      %v534 = vpack.c.b16 %v522, %v521
      %v535 = vpack.c.b16 %v524, %v523
      %v536 = vpack.c.b16 %v526, %v525
      %v537 = vpack.c.b16 %v528, %v527
      %v538 = vpack.c.b16 %v530, %v529
      %547 = vmatpush.bf16.msra.mxu0 %v538
      %548 = vmatpush.bf16.msra.mxu0 %v537
      %549 = vmatpush.bf16.msra.mxu0 %v536
      %550 = vmatpush.bf16.msra.mxu0 %v535
      %551 = vmatpush.bf16.msra.mxu0 %v534
      %552 = vmatpush.bf16.msra.mxu0 %v533
      %553 = vmatpush.bf16.msra.mxu0 %v532
      %554 = vmatpush.bf16.msra.mxu0 %v531
      %555 = vmatmul.bf16.gmra.mxu0 %v435
      %v556 = vpop.f32.mrf.mxu0
      %v557 = vadd.f32 %v305, %v556
      %v558 = vpop.f32.mrf.mxu0
      %v559 = vadd.f32 %v305, %v558
      %560 = vmatmul.bf16.gmra.mxu0 %v436
      %v561 = vpop.f32.mrf.mxu0
      %v562 = vadd.f32 %v305, %v561
      %v563 = vpop.f32.mrf.mxu0
      %v564 = vadd.f32 %v305, %v563
      %565 = vmatmul.bf16.gmra.mxu0 %v437
      %v566 = vpop.f32.mrf.mxu0
      %v567 = vadd.f32 %v305, %v566
      %v568 = vpop.f32.mrf.mxu0
      %v569 = vadd.f32 %v305, %v568
      %570 = vmatmul.bf16.gmra.mxu0 %v438
      %v571 = vpop.f32.mrf.mxu0
      %v572 = vadd.f32 %v305, %v571
      %v573 = vpop.f32.mrf.mxu0
      %v574 = vadd.f32 %v305, %v573
      %575 = vmatmul.bf16.gmra.mxu0 %v439
      %v576 = vpop.f32.mrf.mxu0
      %v577 = vadd.f32 %v305, %v576
      %v578 = vpop.f32.mrf.mxu0
      %v579 = vadd.f32 %v305, %v578
      %580 = vmatmul.bf16.gmra.mxu0 %v440
      %v581 = vpop.f32.mrf.mxu0
      %v582 = vadd.f32 %v305, %v581
      %v583 = vpop.f32.mrf.mxu0
      %v584 = vadd.f32 %v305, %v583
      %585 = vmatmul.bf16.gmra.mxu0 %v441
      %v586 = vpop.f32.mrf.mxu0
      %v587 = vadd.f32 %v305, %v586
      %v588 = vpop.f32.mrf.mxu0
      %v589 = vadd.f32 %v305, %v588
      %590 = vmatmul.bf16.gmra.mxu0 %v442
      %v591 = vpop.f32.mrf.mxu0
      %v592 = vadd.f32 %v305, %v591
      %v593 = vpop.f32.mrf.mxu0
      %v594 = vadd.f32 %v305, %v593
      %595 = vmatmul.bf16.gmra.mxu0 %v443
      %v596 = vpop.f32.mrf.mxu0
      %v597 = vadd.f32 %v305, %v596
      %v598 = vpop.f32.mrf.mxu0
      %v599 = vadd.f32 %v305, %v598
      %600 = vmatmul.bf16.gmra.mxu0 %v444
      %v601 = vpop.f32.mrf.mxu0
      %v602 = vadd.f32 %v305, %v601
      %v603 = vpop.f32.mrf.mxu0
      %v604 = vadd.f32 %v305, %v603
      %605 = vmatmul.bf16.gmra.mxu0 %v445
      %v606 = vpop.f32.mrf.mxu0
      %v607 = vadd.f32 %v305, %v606
      %v608 = vpop.f32.mrf.mxu0
      %v609 = vadd.f32 %v305, %v608
      %610 = vmatmul.bf16.gmra.mxu0 %v446
      %v611 = vpop.f32.mrf.mxu0
      %v612 = vadd.f32 %v305, %v611
      %v613 = vpop.f32.mrf.mxu0
      %v614 = vadd.f32 %v305, %v613
      %615 = vmatmul.bf16.gmra.mxu0 %v447
      %v616 = vpop.f32.mrf.mxu0
      %v617 = vadd.f32 %v305, %v616
      %v618 = vpop.f32.mrf.mxu0
      %v619 = vadd.f32 %v305, %v618
      %620 = vmatmul.bf16.gmra.mxu0 %v448
      %v621 = vpop.f32.mrf.mxu0
      %v622 = vadd.f32 %v305, %v621
      %v623 = vpop.f32.mrf.mxu0
      %v624 = vadd.f32 %v305, %v623
      %625 = vmatmul.bf16.gmra.mxu0 %v449
      %v626 = vpop.f32.mrf.mxu0
      %v627 = vadd.f32 %v305, %v626
      %v628 = vpop.f32.mrf.mxu0
      %v629 = vadd.f32 %v305, %v628
      %630 = vmatmul.bf16.gmra.mxu0 %v450
      %v631 = vpop.f32.mrf.mxu0
      %v632 = vadd.f32 %v305, %v631
      %v633 = vpop.f32.mrf.mxu0
      %v634 = vadd.f32 %v305, %v633
      %635 = vmatmul.bf16.gmra.mxu0 %v451
      %v636 = vpop.f32.mrf.mxu0
      %v637 = vadd.f32 %v305, %v636
      %v638 = vpop.f32.mrf.mxu0
      %v639 = vadd.f32 %v305, %v638
      %640 = vmatmul.bf16.gmra.mxu0 %v452
      %v641 = vpop.f32.mrf.mxu0
      %v642 = vadd.f32 %v305, %v641
      %v643 = vpop.f32.mrf.mxu0
      %v644 = vadd.f32 %v305, %v643
      %645 = vmatmul.bf16.gmra.mxu0 %v453
      %v646 = vpop.f32.mrf.mxu0
      %v647 = vadd.f32 %v305, %v646
      %v648 = vpop.f32.mrf.mxu0
      %v649 = vadd.f32 %v305, %v648
      %650 = vmatmul.bf16.gmra.mxu0 %v454
      %v651 = vpop.f32.mrf.mxu0
      %v652 = vadd.f32 %v305, %v651
      %v653 = vpop.f32.mrf.mxu0
      %v654 = vadd.f32 %v305, %v653
      %655 = vmatmul.bf16.gmra.mxu0 %v455
      %v656 = vpop.f32.mrf.mxu0
      %v657 = vadd.f32 %v305, %v656
      %v658 = vpop.f32.mrf.mxu0
      %v659 = vadd.f32 %v305, %v658
      %660 = vmatmul.bf16.gmra.mxu0 %v456
      %v661 = vpop.f32.mrf.mxu0
      %v662 = vadd.f32 %v305, %v661
      %v663 = vpop.f32.mrf.mxu0
      %v664 = vadd.f32 %v305, %v663
      %665 = vmatmul.bf16.gmra.mxu0 %v457
      %v666 = vpop.f32.mrf.mxu0
      %v667 = vadd.f32 %v305, %v666
      %v668 = vpop.f32.mrf.mxu0
      %v669 = vadd.f32 %v305, %v668
      %670 = vmatmul.bf16.gmra.mxu0 %v458
      %v671 = vpop.f32.mrf.mxu0
      %v672 = vadd.f32 %v305, %v671
      %v673 = vpop.f32.mrf.mxu0
      %v674 = vadd.f32 %v305, %v673
      %675 = vmatmul.bf16.gmra.mxu0 %v459
      %v676 = vpop.f32.mrf.mxu0
      %v677 = vadd.f32 %v305, %v676
      %v678 = vpop.f32.mrf.mxu0
      %v679 = vadd.f32 %v305, %v678
      %680 = vmatmul.bf16.gmra.mxu0 %v460
      %v681 = vpop.f32.mrf.mxu0
      %v682 = vadd.f32 %v305, %v681
      %v683 = vpop.f32.mrf.mxu0
      %v684 = vadd.f32 %v305, %v683
      %685 = vmatmul.bf16.gmra.mxu0 %v461
      %v686 = vpop.f32.mrf.mxu0
      %v687 = vadd.f32 %v305, %v686
      %v688 = vpop.f32.mrf.mxu0
      %v689 = vadd.f32 %v305, %v688
      %690 = vmatmul.bf16.gmra.mxu0 %v462
      %v691 = vpop.f32.mrf.mxu0
      %v692 = vadd.f32 %v305, %v691
      %v693 = vpop.f32.mrf.mxu0
      %v694 = vadd.f32 %v305, %v693
      %695 = vmatmul.bf16.gmra.mxu0 %v463
      %v696 = vpop.f32.mrf.mxu0
      %v697 = vadd.f32 %v305, %v696
      %v698 = vpop.f32.mrf.mxu0
      %v699 = vadd.f32 %v305, %v698
      %700 = vmatmul.bf16.gmra.mxu0 %v464
      %v701 = vpop.f32.mrf.mxu0
      %v702 = vadd.f32 %v305, %v701
      %v703 = vpop.f32.mrf.mxu0
      %v704 = vadd.f32 %v305, %v703
      %705 = vmatmul.bf16.gmra.mxu0 %v465
      %v706 = vpop.f32.mrf.mxu0
      %v707 = vadd.f32 %v305, %v706
      %v708 = vpop.f32.mrf.mxu0
      %v709 = vadd.f32 %v305, %v708
      %710 = vmatmul.bf16.gmra.mxu0 %v466
      %v711 = vpop.f32.mrf.mxu0
      %v712 = vadd.f32 %v305, %v711
      %v713 = vpop.f32.mrf.mxu0
      %v714 = vadd.f32 %v305, %v713
      %715 = vdwg.mxu0
      %v716 = vld [vmem:[%s215] sm:$0xf]
      %v717 = vld [vmem:[%s215 + $0x4] sm:$0xf]
      %v718 = vld [vmem:[%s215 + $0x8] sm:$0xf]
      %v719 = vld [vmem:[%s215 + $0xc] sm:$0xf]
      %v720 = vld [vmem:[%s215 + $0x10] sm:$0xf]
      %v721 = vld [vmem:[%s215 + $0x14] sm:$0xf]
      %v722 = vld [vmem:[%s215 + $0x18] sm:$0xf]
      %v723 = vld [vmem:[%s215 + $0x1c] sm:$0xf]
      %v724 = vld [vmem:[%s215 + $0x20] sm:$0xf]
      %v725 = vld [vmem:[%s215 + $0x24] sm:$0xf]
      %v726 = vld [vmem:[%s215 + $0x28] sm:$0xf]
      %v727 = vld [vmem:[%s215 + $0x2c] sm:$0xf]
      %v728 = vld [vmem:[%s215 + $0x30] sm:$0xf]
      %v729 = vld [vmem:[%s215 + $0x34] sm:$0xf]
      %v730 = vld [vmem:[%s215 + $0x38] sm:$0xf]
      %v731 = vld [vmem:[%s215 + $0x3c] sm:$0xf]
      %v732 = vld [vmem:[%s215 + $0x40] sm:$0xf]
      %v733 = vld [vmem:[%s215 + $0x44] sm:$0xf]
      %v734 = vld [vmem:[%s215 + $0x48] sm:$0xf]
      %v735 = vld [vmem:[%s215 + $0x4c] sm:$0xf]
      %v736 = vld [vmem:[%s215 + $0x50] sm:$0xf]
      %v737 = vld [vmem:[%s215 + $0x54] sm:$0xf]
      %v738 = vld [vmem:[%s215 + $0x58] sm:$0xf]
      %v739 = vld [vmem:[%s215 + $0x5c] sm:$0xf]
      %v740 = vld [vmem:[%s215 + $0x60] sm:$0xf]
      %v741 = vld [vmem:[%s215 + $0x64] sm:$0xf]
      %v742 = vld [vmem:[%s215 + $0x68] sm:$0xf]
      %v743 = vld [vmem:[%s215 + $0x6c] sm:$0xf]
      %v744 = vld [vmem:[%s215 + $0x70] sm:$0xf]
      %v745 = vld [vmem:[%s215 + $0x74] sm:$0xf]
      %v746 = vld [vmem:[%s215 + $0x78] sm:$0xf]
      %v747 = vld [vmem:[%s215 + $0x7c] sm:$0xf]
      %v748 = vld [vmem:[%s215 + $0x80] sm:$0xf]
      %v749 = vld [vmem:[%s215 + $0x84] sm:$0xf]
      %v750 = vld [vmem:[%s215 + $0x88] sm:$0xf]
      %v751 = vld [vmem:[%s215 + $0x8c] sm:$0xf]
      %v752 = vld [vmem:[%s215 + $0x90] sm:$0xf]
      %v753 = vld [vmem:[%s215 + $0x94] sm:$0xf]
      %v754 = vld [vmem:[%s215 + $0x98] sm:$0xf]
      %v755 = vld [vmem:[%s215 + $0x9c] sm:$0xf]
      %v756 = vld [vmem:[%s215 + $0xa0] sm:$0xf]
      %v757 = vld [vmem:[%s215 + $0xa4] sm:$0xf]
      %v758 = vld [vmem:[%s215 + $0xa8] sm:$0xf]
      %v759 = vld [vmem:[%s215 + $0xac] sm:$0xf]
      %v760 = vld [vmem:[%s215 + $0xb0] sm:$0xf]
      %v761 = vld [vmem:[%s215 + $0xb4] sm:$0xf]
      %v762 = vld [vmem:[%s215 + $0xb8] sm:$0xf]
      %v763 = vld [vmem:[%s215 + $0xbc] sm:$0xf]
      %v764 = vld [vmem:[%s215 + $0xc0] sm:$0xf]
      %v765 = vld [vmem:[%s215 + $0xc4] sm:$0xf]
      %v766 = vld [vmem:[%s215 + $0xc8] sm:$0xf]
      %v767 = vld [vmem:[%s215 + $0xcc] sm:$0xf]
      %v768 = vld [vmem:[%s215 + $0xd0] sm:$0xf]
      %v769 = vld [vmem:[%s215 + $0xd4] sm:$0xf]
      %v770 = vld [vmem:[%s215 + $0xd8] sm:$0xf]
      %v771 = vld [vmem:[%s215 + $0xdc] sm:$0xf]
      %v772 = vld [vmem:[%s215 + $0xe0] sm:$0xf]
      %v773 = vld [vmem:[%s215 + $0xe4] sm:$0xf]
      %v774 = vld [vmem:[%s215 + $0xe8] sm:$0xf]
      %v775 = vld [vmem:[%s215 + $0xec] sm:$0xf]
      %v776 = vld [vmem:[%s215 + $0xf0] sm:$0xf]
      %v777 = vld [vmem:[%s215 + $0xf4] sm:$0xf]
      %v778 = vld [vmem:[%s215 + $0xf8] sm:$0xf]
      %v779 = vld [vmem:[%s215 + $0xfc] sm:$0xf]
      %v780 = vunpack.c.l.bf16 %v716
      %v781 = vunpack.c.l.bf16 %v717
      %v782 = vunpack.c.l.bf16 %v718
      %v783 = vunpack.c.l.bf16 %v719
      %v784 = vunpack.c.l.bf16 %v720
      %v785 = vunpack.c.l.bf16 %v721
      %v786 = vunpack.c.l.bf16 %v722
      %v787 = vunpack.c.l.bf16 %v723
      %v788 = vunpack.c.l.bf16 %v724
      %v789 = vunpack.c.l.bf16 %v725
      %v790 = vunpack.c.l.bf16 %v726
      %v791 = vunpack.c.l.bf16 %v727
      %v792 = vunpack.c.l.bf16 %v728
      %v793 = vunpack.c.l.bf16 %v729
      %v794 = vunpack.c.l.bf16 %v730
      %v795 = vunpack.c.l.bf16 %v731
      %v796 = vunpack.c.l.bf16 %v732
      %v797 = vunpack.c.l.bf16 %v733
      %v798 = vunpack.c.l.bf16 %v734
      %v799 = vunpack.c.l.bf16 %v735
      %v800 = vunpack.c.l.bf16 %v736
      %v801 = vunpack.c.l.bf16 %v737
      %v802 = vunpack.c.l.bf16 %v738
      %v803 = vunpack.c.l.bf16 %v739
      %v804 = vunpack.c.l.bf16 %v740
      %v805 = vunpack.c.l.bf16 %v741
      %v806 = vunpack.c.l.bf16 %v742
      %v807 = vunpack.c.l.bf16 %v743
      %v808 = vunpack.c.l.bf16 %v744
      %v809 = vunpack.c.l.bf16 %v745
      %v810 = vunpack.c.l.bf16 %v746
      %v811 = vunpack.c.l.bf16 %v747
      %v812 = vunpack.c.l.bf16 %v748
      %v813 = vunpack.c.l.bf16 %v749
      %v814 = vunpack.c.l.bf16 %v750
      %v815 = vunpack.c.l.bf16 %v751
      %v816 = vunpack.c.l.bf16 %v752
      %v817 = vunpack.c.l.bf16 %v753
      %v818 = vunpack.c.l.bf16 %v754
      %v819 = vunpack.c.l.bf16 %v755
      %v820 = vunpack.c.l.bf16 %v756
      %v821 = vunpack.c.l.bf16 %v757
      %v822 = vunpack.c.l.bf16 %v758
      %v823 = vunpack.c.l.bf16 %v759
      %v824 = vunpack.c.l.bf16 %v760
      %v825 = vunpack.c.l.bf16 %v761
      %v826 = vunpack.c.l.bf16 %v762
      %v827 = vunpack.c.l.bf16 %v763
      %v828 = vunpack.c.l.bf16 %v764
      %v829 = vunpack.c.l.bf16 %v765
      %v830 = vunpack.c.l.bf16 %v766
      %v831 = vunpack.c.l.bf16 %v767
      %v832 = vunpack.c.l.bf16 %v768
      %v833 = vunpack.c.l.bf16 %v769
      %v834 = vunpack.c.l.bf16 %v770
      %v835 = vunpack.c.l.bf16 %v771
      %v836 = vunpack.c.l.bf16 %v772
      %v837 = vunpack.c.l.bf16 %v773
      %v838 = vunpack.c.l.bf16 %v774
      %v839 = vunpack.c.l.bf16 %v775
      %v840 = vunpack.c.l.bf16 %v776
      %v841 = vunpack.c.l.bf16 %v777
      %v842 = vunpack.c.l.bf16 %v778
      %v843 = vunpack.c.l.bf16 %v779
      %v844 = vadd.f32 %v557, %v780
      %v845 = vadd.f32 %v559, %v781
      %v846 = vadd.f32 %v562, %v782
      %v847 = vadd.f32 %v564, %v783
      %v848 = vadd.f32 %v567, %v784
      %v849 = vadd.f32 %v569, %v785
      %v850 = vadd.f32 %v572, %v786
      %v851 = vadd.f32 %v574, %v787
      %v852 = vadd.f32 %v577, %v788
      %v853 = vadd.f32 %v579, %v789
      %v854 = vadd.f32 %v582, %v790
      %v855 = vadd.f32 %v584, %v791
      %v856 = vadd.f32 %v587, %v792
      %v857 = vadd.f32 %v589, %v793
      %v858 = vadd.f32 %v592, %v794
      %v859 = vadd.f32 %v594, %v795
      %v860 = vadd.f32 %v597, %v796
      %v861 = vadd.f32 %v599, %v797
      %v862 = vadd.f32 %v602, %v798
      %v863 = vadd.f32 %v604, %v799
      %v864 = vadd.f32 %v607, %v800
      %v865 = vadd.f32 %v609, %v801
      %v866 = vadd.f32 %v612, %v802
      %v867 = vadd.f32 %v614, %v803
      %v868 = vadd.f32 %v617, %v804
      %v869 = vadd.f32 %v619, %v805
      %v870 = vadd.f32 %v622, %v806
      %v871 = vadd.f32 %v624, %v807
      %v872 = vadd.f32 %v627, %v808
      %v873 = vadd.f32 %v629, %v809
      %v874 = vadd.f32 %v632, %v810
      %v875 = vadd.f32 %v634, %v811
      %v876 = vadd.f32 %v637, %v812
      %v877 = vadd.f32 %v639, %v813
      %v878 = vadd.f32 %v642, %v814
      %v879 = vadd.f32 %v644, %v815
      %v880 = vadd.f32 %v647, %v816
      %v881 = vadd.f32 %v649, %v817
      %v882 = vadd.f32 %v652, %v818
      %v883 = vadd.f32 %v654, %v819
      %v884 = vadd.f32 %v657, %v820
      %v885 = vadd.f32 %v659, %v821
      %v886 = vadd.f32 %v662, %v822
      %v887 = vadd.f32 %v664, %v823
      %v888 = vadd.f32 %v667, %v824
      %v889 = vadd.f32 %v669, %v825
      %v890 = vadd.f32 %v672, %v826
      %v891 = vadd.f32 %v674, %v827
      %v892 = vadd.f32 %v677, %v828
      %v893 = vadd.f32 %v679, %v829
      %v894 = vadd.f32 %v682, %v830
      %v895 = vadd.f32 %v684, %v831
      %v896 = vadd.f32 %v687, %v832
      %v897 = vadd.f32 %v689, %v833
      %v898 = vadd.f32 %v692, %v834
      %v899 = vadd.f32 %v694, %v835
      %v900 = vadd.f32 %v697, %v836
      %v901 = vadd.f32 %v699, %v837
      %v902 = vadd.f32 %v702, %v838
      %v903 = vadd.f32 %v704, %v839
      %v904 = vadd.f32 %v707, %v840
      %v905 = vadd.f32 %v709, %v841
      %v906 = vadd.f32 %v712, %v842
      %v907 = vadd.f32 %v714, %v843
      %v908 = vmax.f32 %v844, 0.0
      %v909 = vmax.f32 %v845, 0.0
      %v910 = vmax.f32 %v846, 0.0
      %v911 = vmax.f32 %v847, 0.0
      %v912 = vmax.f32 %v848, 0.0
      %v913 = vmax.f32 %v849, 0.0
      %v914 = vmax.f32 %v850, 0.0
      %v915 = vmax.f32 %v851, 0.0
      %v916 = vmax.f32 %v852, 0.0
      %v917 = vmax.f32 %v853, 0.0
      %v918 = vmax.f32 %v854, 0.0
      %v919 = vmax.f32 %v855, 0.0
      %v920 = vmax.f32 %v856, 0.0
      %v921 = vmax.f32 %v857, 0.0
      %v922 = vmax.f32 %v858, 0.0
      %v923 = vmax.f32 %v859, 0.0
      %v924 = vmax.f32 %v860, 0.0
      %v925 = vmax.f32 %v861, 0.0
      %v926 = vmax.f32 %v862, 0.0
      %v927 = vmax.f32 %v863, 0.0
      %v928 = vmax.f32 %v864, 0.0
      %v929 = vmax.f32 %v865, 0.0
      %v930 = vmax.f32 %v866, 0.0
      %v931 = vmax.f32 %v867, 0.0
      %v932 = vmax.f32 %v868, 0.0
      %v933 = vmax.f32 %v869, 0.0
      %v934 = vmax.f32 %v870, 0.0
      %v935 = vmax.f32 %v871, 0.0
      %v936 = vmax.f32 %v872, 0.0
      %v937 = vmax.f32 %v873, 0.0
      %v938 = vmax.f32 %v874, 0.0
      %v939 = vmax.f32 %v875, 0.0
      %v940 = vmax.f32 %v876, 0.0
      %v941 = vmax.f32 %v877, 0.0
      %v942 = vmax.f32 %v878, 0.0
      %v943 = vmax.f32 %v879, 0.0
      %v944 = vmax.f32 %v880, 0.0
      %v945 = vmax.f32 %v881, 0.0
      %v946 = vmax.f32 %v882, 0.0
      %v947 = vmax.f32 %v883, 0.0
      %v948 = vmax.f32 %v884, 0.0
      %v949 = vmax.f32 %v885, 0.0
      %v950 = vmax.f32 %v886, 0.0
      %v951 = vmax.f32 %v887, 0.0
      %v952 = vmax.f32 %v888, 0.0
      %v953 = vmax.f32 %v889, 0.0
      %v954 = vmax.f32 %v890, 0.0
      %v955 = vmax.f32 %v891, 0.0
      %v956 = vmax.f32 %v892, 0.0
      %v957 = vmax.f32 %v893, 0.0
      %v958 = vmax.f32 %v894, 0.0
      %v959 = vmax.f32 %v895, 0.0
      %v960 = vmax.f32 %v896, 0.0
      %v961 = vmax.f32 %v897, 0.0
      %v962 = vmax.f32 %v898, 0.0
      %v963 = vmax.f32 %v899, 0.0
      %v964 = vmax.f32 %v900, 0.0
      %v965 = vmax.f32 %v901, 0.0
      %v966 = vmax.f32 %v902, 0.0
      %v967 = vmax.f32 %v903, 0.0
      %v968 = vmax.f32 %v904, 0.0
      %v969 = vmax.f32 %v905, 0.0
      %v970 = vmax.f32 %v906, 0.0
      %v971 = vmax.f32 %v907, 0.0
      %v972 = vpack.c.bf16 %v908, %v908
      %v973 = vpack.c.bf16 %v909, %v909
      %v974 = vpack.c.bf16 %v910, %v910
      %v975 = vpack.c.bf16 %v911, %v911
      %v976 = vpack.c.bf16 %v912, %v912
      %v977 = vpack.c.bf16 %v913, %v913
      %v978 = vpack.c.bf16 %v914, %v914
      %v979 = vpack.c.bf16 %v915, %v915
      %v980 = vpack.c.bf16 %v916, %v916
      %v981 = vpack.c.bf16 %v917, %v917
      %v982 = vpack.c.bf16 %v918, %v918
      %v983 = vpack.c.bf16 %v919, %v919
      %v984 = vpack.c.bf16 %v920, %v920
      %v985 = vpack.c.bf16 %v921, %v921
      %v986 = vpack.c.bf16 %v922, %v922
      %v987 = vpack.c.bf16 %v923, %v923
      %v988 = vpack.c.bf16 %v924, %v924
      %v989 = vpack.c.bf16 %v925, %v925
      %v990 = vpack.c.bf16 %v926, %v926
      %v991 = vpack.c.bf16 %v927, %v927
      %v992 = vpack.c.bf16 %v928, %v928
      %v993 = vpack.c.bf16 %v929, %v929
      %v994 = vpack.c.bf16 %v930, %v930
      %v995 = vpack.c.bf16 %v931, %v931
      %v996 = vpack.c.bf16 %v932, %v932
      %v997 = vpack.c.bf16 %v933, %v933
      %v998 = vpack.c.bf16 %v934, %v934
      %v999 = vpack.c.bf16 %v935, %v935
      %v1000 = vpack.c.bf16 %v936, %v936
      %v1001 = vpack.c.bf16 %v937, %v937
      %v1002 = vpack.c.bf16 %v938, %v938
      %v1003 = vpack.c.bf16 %v939, %v939
      %v1004 = vpack.c.bf16 %v940, %v940
      %v1005 = vpack.c.bf16 %v941, %v941
      %v1006 = vpack.c.bf16 %v942, %v942
      %v1007 = vpack.c.bf16 %v943, %v943
      %v1008 = vpack.c.bf16 %v944, %v944
      %v1009 = vpack.c.bf16 %v945, %v945
      %v1010 = vpack.c.bf16 %v946, %v946
      %v1011 = vpack.c.bf16 %v947, %v947
      %v1012 = vpack.c.bf16 %v948, %v948
      %v1013 = vpack.c.bf16 %v949, %v949
      %v1014 = vpack.c.bf16 %v950, %v950
      %v1015 = vpack.c.bf16 %v951, %v951
      %v1016 = vpack.c.bf16 %v952, %v952
      %v1017 = vpack.c.bf16 %v953, %v953
      %v1018 = vpack.c.bf16 %v954, %v954
      %v1019 = vpack.c.bf16 %v955, %v955
      %v1020 = vpack.c.bf16 %v956, %v956
      %v1021 = vpack.c.bf16 %v957, %v957
      %v1022 = vpack.c.bf16 %v958, %v958
      %v1023 = vpack.c.bf16 %v959, %v959
      %v1024 = vpack.c.bf16 %v960, %v960
      %v1025 = vpack.c.bf16 %v961, %v961
      %v1026 = vpack.c.bf16 %v962, %v962
      %v1027 = vpack.c.bf16 %v963, %v963
      %v1028 = vpack.c.bf16 %v964, %v964
      %v1029 = vpack.c.bf16 %v965, %v965
      %v1030 = vpack.c.bf16 %v966, %v966
      %v1031 = vpack.c.bf16 %v967, %v967
      %v1032 = vpack.c.bf16 %v968, %v968
      %v1033 = vpack.c.bf16 %v969, %v969
      %v1034 = vpack.c.bf16 %v970, %v970
      %v1035 = vpack.c.bf16 %v971, %v971
      %1036 = vst [vmem:[%s221] sm:$0xf] %v972
      %1037 = vst [vmem:[%s221 + $0x4] sm:$0xf] %v973
      %1038 = vst [vmem:[%s221 + $0x8] sm:$0xf] %v974
      %1039 = vst [vmem:[%s221 + $0xc] sm:$0xf] %v975
      %1040 = vst [vmem:[%s221 + $0x10] sm:$0xf] %v976
      %1041 = vst [vmem:[%s221 + $0x14] sm:$0xf] %v977
      %1042 = vst [vmem:[%s221 + $0x18] sm:$0xf] %v978
      %1043 = vst [vmem:[%s221 + $0x1c] sm:$0xf] %v979
      %1044 = vst [vmem:[%s221 + $0x20] sm:$0xf] %v980
      %1045 = vst [vmem:[%s221 + $0x24] sm:$0xf] %v981
      %1046 = vst [vmem:[%s221 + $0x28] sm:$0xf] %v982
      %1047 = vst [vmem:[%s221 + $0x2c] sm:$0xf] %v983
      %1048 = vst [vmem:[%s221 + $0x30] sm:$0xf] %v984
      %1049 = vst [vmem:[%s221 + $0x34] sm:$0xf] %v985
      %1050 = vst [vmem:[%s221 + $0x38] sm:$0xf] %v986
      %1051 = vst [vmem:[%s221 + $0x3c] sm:$0xf] %v987
      %1052 = vst [vmem:[%s221 + $0x40] sm:$0xf] %v988
      %1053 = vst [vmem:[%s221 + $0x44] sm:$0xf] %v989
      %1054 = vst [vmem:[%s221 + $0x48] sm:$0xf] %v990
      %1055 = vst [vmem:[%s221 + $0x4c] sm:$0xf] %v991
      %1056 = vst [vmem:[%s221 + $0x50] sm:$0xf] %v992
      %1057 = vst [vmem:[%s221 + $0x54] sm:$0xf] %v993
      %1058 = vst [vmem:[%s221 + $0x58] sm:$0xf] %v994
      %1059 = vst [vmem:[%s221 + $0x5c] sm:$0xf] %v995
      %1060 = vst [vmem:[%s221 + $0x60] sm:$0xf] %v996
      %1061 = vst [vmem:[%s221 + $0x64] sm:$0xf] %v997
      %1062 = vst [vmem:[%s221 + $0x68] sm:$0xf] %v998
      %1063 = vst [vmem:[%s221 + $0x6c] sm:$0xf] %v999
      %1064 = vst [vmem:[%s221 + $0x70] sm:$0xf] %v1000
      %1065 = vst [vmem:[%s221 + $0x74] sm:$0xf] %v1001
      %1066 = vst [vmem:[%s221 + $0x78] sm:$0xf] %v1002
      %1067 = vst [vmem:[%s221 + $0x7c] sm:$0xf] %v1003
      %1068 = vst [vmem:[%s221 + $0x80] sm:$0xf] %v1004
      %1069 = vst [vmem:[%s221 + $0x84] sm:$0xf] %v1005
      %1070 = vst [vmem:[%s221 + $0x88] sm:$0xf] %v1006
      %1071 = vst [vmem:[%s221 + $0x8c] sm:$0xf] %v1007
      %1072 = vst [vmem:[%s221 + $0x90] sm:$0xf] %v1008
      %1073 = vst [vmem:[%s221 + $0x94] sm:$0xf] %v1009
      %1074 = vst [vmem:[%s221 + $0x98] sm:$0xf] %v1010
      %1075 = vst [vmem:[%s221 + $0x9c] sm:$0xf] %v1011
      %1076 = vst [vmem:[%s221 + $0xa0] sm:$0xf] %v1012
      %1077 = vst [vmem:[%s221 + $0xa4] sm:$0xf] %v1013
      %1078 = vst [vmem:[%s221 + $0xa8] sm:$0xf] %v1014
      %1079 = vst [vmem:[%s221 + $0xac] sm:$0xf] %v1015
      %1080 = vst [vmem:[%s221 + $0xb0] sm:$0xf] %v1016
      %1081 = vst [vmem:[%s221 + $0xb4] sm:$0xf] %v1017
      %1082 = vst [vmem:[%s221 + $0xb8] sm:$0xf] %v1018
      %1083 = vst [vmem:[%s221 + $0xbc] sm:$0xf] %v1019
      %1084 = vst [vmem:[%s221 + $0xc0] sm:$0xf] %v1020
      %1085 = vst [vmem:[%s221 + $0xc4] sm:$0xf] %v1021
      %1086 = vst [vmem:[%s221 + $0xc8] sm:$0xf] %v1022
      %1087 = vst [vmem:[%s221 + $0xcc] sm:$0xf] %v1023
      %1088 = vst [vmem:[%s221 + $0xd0] sm:$0xf] %v1024
      %1089 = vst [vmem:[%s221 + $0xd4] sm:$0xf] %v1025
      %1090 = vst [vmem:[%s221 + $0xd8] sm:$0xf] %v1026
      %1091 = vst [vmem:[%s221 + $0xdc] sm:$0xf] %v1027
      %1092 = vst [vmem:[%s221 + $0xe0] sm:$0xf] %v1028
      %1093 = vst [vmem:[%s221 + $0xe4] sm:$0xf] %v1029
      %1094 = vst [vmem:[%s221 + $0xe8] sm:$0xf] %v1030
      %1095 = vst [vmem:[%s221 + $0xec] sm:$0xf] %v1031
      %1096 = vst [vmem:[%s221 + $0xf0] sm:$0xf] %v1032
      %1097 = vst [vmem:[%s221 + $0xf4] sm:$0xf] %v1033
      %1098 = vst [vmem:[%s221 + $0xf8] sm:$0xf] %v1034
      %1099 = vst [vmem:[%s221 + $0xfc] sm:$0xf] %v1035
      %s1100 = smul.u32 64, %s15
      %p1101 = scmp.lt.s32.totalorder %s1100, 127
      %s1102 = scalar_select %p1101, %s1100, 127
      %s1103 = smul.addr %s1102, 4
      %s1104 = scalar_lea.vmem %s4, %s1103
      // Predicated region
      $region37: #{bottleneck_forward.5} parent=35 // pred_check
        %p1105 = pneg %p127
      $region38: #{bottleneck_forward.5} parent=35 // pred_check_branch
        %1107 = sbr.rel (%p1105) target = $region40
      $region39: #{bottleneck_forward.5} parent=35 // pred_region
        %s1108 = smul.u32 64, %s15
      $region40: #{bottleneck_forward.5} parent=35 // pred_fallthru
        _
    $region36: #{bottleneck_forward.5} parent=5 // pred_fallthru
      _
    %p1109 = scmp.le.s32.totalorder 2, %s10
    // Predicated region
    $region41: #{bottleneck_forward.5} parent=5 // pred_check
      %p1110 = pneg %p1109
    $region42: #{bottleneck_forward.5} parent=5 // pred_check_branch
      %1112 = sbr.rel (%p1110) target = $region44
    $region43: #{bottleneck_forward.5} parent=5 // pred_region
      %s1113 = ssub.s32 %s10, 2
      // Predicated region
      $region45: #{bottleneck_forward.5} parent=43 // pred_check
        %p1114 = pneg %p133
      $region46: #{bottleneck_forward.5} parent=43 // pred_check_branch
        %1116 = sbr.rel (%p1114) target = $region48
      $region47: #{bottleneck_forward.5} parent=43 // pred_region
        %s1117 = smul.u32 64, %s16
        %p1118 = scmp.lt.s32.totalorder %s1117, 127
        %s1119 = scalar_select %p1118, %s1117, 127
        %s1120 = smul.addr %s1119, 4
        %s1121 = scalar_lea.vmem %s4, %s1120
      $region48: #{bottleneck_forward.5} parent=43 // pred_fallthru
        _
    $region44: #{bottleneck_forward.5} parent=5 // pred_fallthru
      _
  $region6: #{bottleneck_forward.5} parent=0 // loop_footer
    %s14 = sadd.s32 1, %s10
  $region7: #{bottleneck_forward.5} parent=0 // loop_footer_branch
    %9 = sbr.rel target = $region3
  $region8: #{bottleneck_forward.5} parent=0 // loop_exit
    _

</llo_original>
